<compile_context>
chip_gen: v7x
topology: tpu7x:2x2x1
jax: 0.10.0
libtpu: 0.0.40
codegen_flags: <defaults>
</compile_context>

<pallas_src>
import math
from functools import partial

import jax
import jax.numpy as jnp
import numpy as np
from jax.experimental import pallas as pl
from jax.experimental.pallas import tpu as pltpu


def _ghost_kernel(x_ref, w1_ref, s1_ref, b1_ref, w2_ref, s2_ref, b2_ref,
                  out_ref, xp_ref, col_ref, *, H, W, K, pad, relu):
    """One grid step processes Nb full images.

    x_ref  : (Nb, H, W, Cin)           unpadded NHWC input tile (VMEM)
    w1_ref : (K*K*Cin, Cmid)           primary conv weights, im2col layout
    s1/b1  : (1, Cmid)                 folded BN scale / offset (primary)
    w2_ref : (Cmid, c2)                cheap 1x1 conv weights, surviving cols only
    s2/b2  : (1, c2)                   folded BN scale / offset (cheap, sliced)
    out_ref: (Nb, H, W, Cmid + c2)     fused concat([x1, x2])[..., :oup]
    xp_ref : (Nb, H+2p, W+2p, Cin)     VMEM halo scratch (zero-padded here)
    col_ref: (Nb*H*W, K*K*Cin)         VMEM im2col scratch
    """
    Nb, _, _, Cin = x_ref.shape
    Cmid = w1_ref.shape[-1]
    c2 = w2_ref.shape[-1]
    M = Nb * H * W

    # --- fold the zero padding into the kernel (no jnp.pad pass outside) ---
    # Re-zero every step (scratch persists across grid steps; do not rely on
    # program_id == 0, which is not seen by every core under megacore split).
    xp_ref[...] = jnp.zeros_like(xp_ref)
    xp_ref[:, pad:pad + H, pad:pad + W, :] = x_ref[...]

    # --- im2col: pack the K*K taps into VMEM scratch, one tap at a time -----
    # (each iteration only keeps one (M, Cin) patch live -> tiny vreg footprint)
    for kh in range(K):
        for kw in range(K):
            t = kh * K + kw
            col_ref[:, t * Cin:(t + 1) * Cin] = (
                xp_ref[:, kh:kh + H, kw:kw + W, :].reshape(M, Cin))

    # --- primary KxK conv: single MXU matmul (reduction depth K*K*Cin) ------
    x1 = jnp.dot(col_ref[...], w1_ref[...], preferred_element_type=jnp.float32)
    x1 = x1 * s1_ref[0] + b1_ref[0]          # folded BatchNorm (f32)
    if relu:
        x1 = jnp.maximum(x1, 0.0)

    # --- cheap 1x1 conv on only the channels that survive the [:oup] slice --
    x2 = jnp.dot(x1, w2_ref[...], preferred_element_type=jnp.float32)
    x2 = x2 * s2_ref[0] + b2_ref[0]
    if relu:
        x2 = jnp.maximum(x2, 0.0)

    # --- fused torch.cat([x1, x2], dim=channel)[:, :oup] --------------------
    out_ref[:, :, :, 0:Cmid] = x1.reshape(Nb, H, W, Cmid)
    out_ref[:, :, :, Cmid:Cmid + c2] = x2.reshape(Nb, H, W, c2)


def _pick_batch_block(N, max_nb=8):
    """Largest divisor of N that is <= max_nb (images per grid step)."""
    nb = min(N, max_nb)
    while N % nb:
        nb -= 1
    return nb


def ghost_conv2d_nhwc(x_nhwc, w1, bn1, w2, bn2, *, oup, relu=True, eps=1e-5,
                      batch_block=None):
    """GhostConv2d forward on NHWC input. Returns (N, H, W, oup).

    w1  : (K, K, Cin, Cmid) primary conv weights (HWIO)
    w2  : (Cmid, Cnew)      cheap 1x1 conv weights
    bn* : (gamma, beta, running_mean, running_var)
    """
    N, H, W, Cin = x_nhwc.shape
    K = w1.shape[0]
    Cmid = w1.shape[-1]
    Cnew = w2.shape[-1]
    assert K % 2 == 1, "even kernel sizes need asymmetric padding (unsupported)"
    assert Cmid + Cnew >= oup
    c2 = oup - Cmid                       # cheap-branch columns actually kept
    # TODO(synk): oup <= init_channels (ratio == 1 edge case) not supported.
    assert c2 >= 1, "oup must exceed init_channels (ratio >= 2)"
    pad = K // 2
    Hp, Wp = H + 2 * pad, W + 2 * pad

    Nb = batch_block if batch_block is not None else _pick_batch_block(N)
    assert N % Nb == 0

    # Fold inference BatchNorm into scale/offset (tiny; constant under jit).
    g1, be1, m1, v1 = bn1
    g2, be2, m2, v2 = bn2
    s1 = (g1 / jnp.sqrt(v1 + eps)).astype(jnp.float32)
    o1 = (be1 - m1 * s1).astype(jnp.float32)
    s2f = (g2 / jnp.sqrt(v2 + eps)).astype(jnp.float32)
    o2f = (be2 - m2 * s2f).astype(jnp.float32)
    s2 = s2f[:c2]
    o2 = o2f[:c2]

    # im2col weight layout: (kh, kw, cin) flattened into one reduction axis.
    w1r = w1.astype(jnp.float32).reshape(K * K * Cin, Cmid)
    w2n = w2.astype(jnp.float32)[:, :c2]      # only surviving output columns

    x = x_nhwc.astype(jnp.float32)
    kernel = partial(_ghost_kernel, H=H, W=W, K=K, pad=pad, relu=relu)

    out = pl.pallas_call(
        kernel,
        out_shape=jax.ShapeDtypeStruct((N, H, W, oup), jnp.float32),
        grid_spec=pltpu.PrefetchScalarGridSpec(
            num_scalar_prefetch=0,
            grid=(N // Nb,),
            in_specs=[
                pl.BlockSpec((Nb, H, W, Cin), lambda n: (n, 0, 0, 0)),
                pl.BlockSpec((K * K * Cin, Cmid), lambda n: (0, 0)),
                pl.BlockSpec((1, Cmid), lambda n: (0, 0)),
                pl.BlockSpec((1, Cmid), lambda n: (0, 0)),
                pl.BlockSpec((Cmid, c2), lambda n: (0, 0)),
                pl.BlockSpec((1, c2), lambda n: (0, 0)),
                pl.BlockSpec((1, c2), lambda n: (0, 0)),
            ],
            out_specs=pl.BlockSpec((Nb, H, W, oup), lambda n: (n, 0, 0, 0)),
            scratch_shapes=[
                pltpu.VMEM((Nb, Hp, Wp, Cin), jnp.float32),       # halo scratch
                pltpu.VMEM((Nb * H * W, K * K * Cin), jnp.float32),  # im2col
            ]),
        compiler_params=pltpu.CompilerParams(
            dimension_semantics=("parallel",)),
    )(x, w1r,
      s1.reshape(1, -1), o1.reshape(1, -1),
      w2n, s2.reshape(1, -1), o2.reshape(1, -1))
    return out


def ghost_conv2d(x_nchw, w1, bn1, w2, bn2, *, oup, relu=True, eps=1e-5):
    """PyTorch-layout (NCHW) wrapper; prefer ghost_conv2d_nhwc in NHWC models."""
    x = jnp.transpose(x_nchw, (0, 2, 3, 1))
    out = ghost_conv2d_nhwc(x, w1, bn1, w2, bn2, oup=oup, relu=relu, eps=eps)
    return jnp.transpose(out, (0, 3, 1, 2))


def _reference(x_nchw, w1, bn1, w2, bn2, *, oup, relu=True, eps=1e-5):
    """Pure-JAX reference matching the PyTorch module (inference BN)."""
    g1, be1, m1, v1 = bn1
    g2, be2, m2, v2 = bn2

    def bn(y, g, b, m, v):
        sh = (1, -1, 1, 1)
        return (y - m.reshape(sh)) / jnp.sqrt(v.reshape(sh) + eps) * \
            g.reshape(sh) + b.reshape(sh)

    w1_oihw = jnp.transpose(w1, (3, 2, 0, 1))
    y1 = jax.lax.conv_general_dilated(
        x_nchw, w1_oihw, (1, 1), "SAME",
        dimension_numbers=("NCHW", "OIHW", "NCHW"),
        precision=jax.lax.Precision.HIGHEST)
    y1 = bn(y1, g1, be1, m1, v1)
    if relu:
        y1 = jnp.maximum(y1, 0.0)

    w2_oihw = jnp.transpose(w2, (1, 0))[:, :, None, None]
    y2 = jax.lax.conv_general_dilated(
        y1, w2_oihw, (1, 1), "SAME",
        dimension_numbers=("NCHW", "OIHW", "NCHW"),
        precision=jax.lax.Precision.HIGHEST)
    y2 = bn(y2, g2, be2, m2, v2)
    if relu:
        y2 = jnp.maximum(y2, 0.0)
    return jnp.concatenate([y1, y2], axis=1)[:, :oup]


if __name__ == "__main__":
    # Module hyper-parameters (defaults: kernel_size=3, ratio=4,
    # cheap_op_kernel=1, stride=1, relu=True).
    inp, oup, ratio, K = 4, 8, 4, 3
    init_ch = math.ceil(oup / ratio)       # 2
    new_ch = init_ch * (ratio - 1)         # 6
    N, H, W = 2, 16, 16

    key = jax.random.PRNGKey(0)
    ks = jax.random.split(key, 12)

    x = jax.random.normal(ks[0], (N, inp, H, W), dtype=jnp.float32)

    # Deterministic synthetic parameters (shapes from the module's __init__).
    w1 = 0.1 * jax.random.normal(ks[1], (K, K, inp, init_ch), jnp.float32)
    w2 = 0.1 * jax.random.normal(ks[2], (init_ch, new_ch), jnp.float32)
    bn1 = (jax.random.uniform(ks[3], (init_ch,), minval=0.5, maxval=1.5),
           0.1 * jax.random.normal(ks[4], (init_ch,)),
           0.1 * jax.random.normal(ks[5], (init_ch,)),
           jax.random.uniform(ks[6], (init_ch,), minval=0.5, maxval=1.5))
    bn2 = (jax.random.uniform(ks[7], (new_ch,), minval=0.5, maxval=1.5),
           0.1 * jax.random.normal(ks[8], (new_ch,)),
           0.1 * jax.random.normal(ks[9], (new_ch,)),
           jax.random.uniform(ks[10], (new_ch,), minval=0.5, maxval=1.5))

    out = ghost_conv2d(x, w1, bn1, w2, bn2, oup=oup, relu=True)
    out = jax.block_until_ready(out)

    ref = jax.block_until_ready(
        _reference(x, w1, bn1, w2, bn2, oup=oup, relu=True))

    assert out.shape == (N, oup, H, W), out.shape
    np.testing.assert_allclose(np.asarray(out), np.asarray(ref),
                               atol=2e-2, rtol=2e-2)
    print("KERNEL_OK")
</pallas_src>

<mosaic_0001>
module attributes {stable_mosaic.version = 11 : i64} {
  func.func @_ghost_kernel(%arg0: i32, %arg1: memref<2x16x16x4xf32, #tpu.memory_space<vmem>>, %arg2: memref<36x2xf32, #tpu.memory_space<vmem>>, %arg3: memref<1x2xf32, #tpu.memory_space<vmem>>, %arg4: memref<1x2xf32, #tpu.memory_space<vmem>>, %arg5: memref<2x6xf32, #tpu.memory_space<vmem>>, %arg6: memref<1x6xf32, #tpu.memory_space<vmem>>, %arg7: memref<1x6xf32, #tpu.memory_space<vmem>>, %arg8: memref<2x16x16x8xf32, #tpu.memory_space<vmem>>, %arg9: memref<2x18x18x4xf32, #tpu.memory_space<vmem>>, %arg10: memref<512x36xf32, #tpu.memory_space<vmem>>) attributes {dimension_semantics = [#tpu.dimension_semantics<parallel>], iteration_bounds = array<i64: 1>, scalar_prefetch = 0 : i64, scratch_operands = 2 : i64, tpu.core_type = #tpu.core_type<tc>, window_params = [{transform_indices = @transform_0, window_bounds = array<i64: 2, 16, 16, 4>}, {pipeline_mode = #tpu.pipeline_mode<synchronous>, transform_indices = @transform_1, window_bounds = array<i64: 36, 2>}, {pipeline_mode = #tpu.pipeline_mode<synchronous>, transform_indices = @transform_2, window_bounds = array<i64: 1, 2>}, {pipeline_mode = #tpu.pipeline_mode<synchronous>, transform_indices = @transform_3, window_bounds = array<i64: 1, 2>}, {pipeline_mode = #tpu.pipeline_mode<synchronous>, transform_indices = @transform_4, window_bounds = array<i64: 2, 6>}, {pipeline_mode = #tpu.pipeline_mode<synchronous>, transform_indices = @transform_5, window_bounds = array<i64: 1, 6>}, {pipeline_mode = #tpu.pipeline_mode<synchronous>, transform_indices = @transform_6, window_bounds = array<i64: 1, 6>}, {transform_indices = @transform_7, window_bounds = array<i64: 2, 16, 16, 8>}]} {
    %cst = arith.constant 0.000000e+00 : f32
    %0 = vector.broadcast %cst : f32 to vector<2x18x18x4xf32>
    %c0 = arith.constant 0 : index
    %c0_0 = arith.constant 0 : index
    %c0_1 = arith.constant 0 : index
    %c0_2 = arith.constant 0 : index
    %1 = vector.load %arg9[%c0, %c0_0, %c0_1, %c0_2] : memref<2x18x18x4xf32, #tpu.memory_space<vmem>>, vector<2x18x18x4xf32>
    tpu.vector_store %arg9[%c0, %c0_0, %c0_1, %c0_2], %0 {strides = array<i32>} : memref<2x18x18x4xf32, #tpu.memory_space<vmem>>, vector<2x18x18x4xf32>,
    %c0_3 = arith.constant 0 : index
    %c0_4 = arith.constant 0 : index
    %c0_5 = arith.constant 0 : index
    %c0_6 = arith.constant 0 : index
    %2 = vector.load %arg1[%c0_3, %c0_4, %c0_5, %c0_6] : memref<2x16x16x4xf32, #tpu.memory_space<vmem>>, vector<2x16x16x4xf32>
    %c0_7 = arith.constant 0 : index
    %c1 = arith.constant 1 : index
    %c1_8 = arith.constant 1 : index
    %c0_9 = arith.constant 0 : index
    %3 = vector.load %arg9[%c0_7, %c1, %c1_8, %c0_9] : memref<2x18x18x4xf32, #tpu.memory_space<vmem>>, vector<2x16x16x4xf32>
    tpu.vector_store %arg9[%c0_7, %c1, %c1_8, %c0_9], %2 {strides = array<i32>} : memref<2x18x18x4xf32, #tpu.memory_space<vmem>>, vector<2x16x16x4xf32>,
    %c0_10 = arith.constant 0 : index
    %c0_11 = arith.constant 0 : index
    %c0_12 = arith.constant 0 : index
    %c0_13 = arith.constant 0 : index
    %4 = vector.load %arg9[%c0_10, %c0_11, %c0_12, %c0_13] : memref<2x18x18x4xf32, #tpu.memory_space<vmem>>, vector<2x16x16x4xf32>
    %5 = vector.shape_cast %4 : vector<2x16x16x4xf32> to vector<512x4xf32>
    %c0_14 = arith.constant 0 : index
    %c0_15 = arith.constant 0 : index
    %6 = vector.load %arg10[%c0_14, %c0_15] : memref<512x36xf32, #tpu.memory_space<vmem>>, vector<512x4xf32>
    tpu.vector_store %arg10[%c0_14, %c0_15], %5 {strides = array<i32>} : memref<512x36xf32, #tpu.memory_space<vmem>>, vector<512x4xf32>,
    %c0_16 = arith.constant 0 : index
    %c0_17 = arith.constant 0 : index
    %c1_18 = arith.constant 1 : index
    %c0_19 = arith.constant 0 : index
    %7 = vector.load %arg9[%c0_16, %c0_17, %c1_18, %c0_19] : memref<2x18x18x4xf32, #tpu.memory_space<vmem>>, vector<2x16x16x4xf32>
    %8 = vector.shape_cast %7 : vector<2x16x16x4xf32> to vector<512x4xf32>
    %c0_20 = arith.constant 0 : index
    %c4 = arith.constant 4 : index
    %9 = vector.load %arg10[%c0_20, %c4] : memref<512x36xf32, #tpu.memory_space<vmem>>, vector<512x4xf32>
    tpu.vector_store %arg10[%c0_20, %c4], %8 {strides = array<i32>} : memref<512x36xf32, #tpu.memory_space<vmem>>, vector<512x4xf32>,
    %c0_21 = arith.constant 0 : index
    %c0_22 = arith.constant 0 : index
    %c2 = arith.constant 2 : index
    %c0_23 = arith.constant 0 : index
    %10 = vector.load %arg9[%c0_21, %c0_22, %c2, %c0_23] : memref<2x18x18x4xf32, #tpu.memory_space<vmem>>, vector<2x16x16x4xf32>
    %11 = vector.shape_cast %10 : vector<2x16x16x4xf32> to vector<512x4xf32>
    %c0_24 = arith.constant 0 : index
    %c8 = arith.constant 8 : index
    %12 = vector.load %arg10[%c0_24, %c8] : memref<512x36xf32, #tpu.memory_space<vmem>>, vector<512x4xf32>
    tpu.vector_store %arg10[%c0_24, %c8], %11 {strides = array<i32>} : memref<512x36xf32, #tpu.memory_space<vmem>>, vector<512x4xf32>,
    %c0_25 = arith.constant 0 : index
    %c1_26 = arith.constant 1 : index
    %c0_27 = arith.constant 0 : index
    %c0_28 = arith.constant 0 : index
    %13 = vector.load %arg9[%c0_25, %c1_26, %c0_27, %c0_28] : memref<2x18x18x4xf32, #tpu.memory_space<vmem>>, vector<2x16x16x4xf32>
    %14 = vector.shape_cast %13 : vector<2x16x16x4xf32> to vector<512x4xf32>
    %c0_29 = arith.constant 0 : index
    %c12 = arith.constant 12 : index
    %15 = vector.load %arg10[%c0_29, %c12] : memref<512x36xf32, #tpu.memory_space<vmem>>, vector<512x4xf32>
    tpu.vector_store %arg10[%c0_29, %c12], %14 {strides = array<i32>} : memref<512x36xf32, #tpu.memory_space<vmem>>, vector<512x4xf32>,
    %c0_30 = arith.constant 0 : index
    %c1_31 = arith.constant 1 : index
    %c1_32 = arith.constant 1 : index
    %c0_33 = arith.constant 0 : index
    %16 = vector.load %arg9[%c0_30, %c1_31, %c1_32, %c0_33] : memref<2x18x18x4xf32, #tpu.memory_space<vmem>>, vector<2x16x16x4xf32>
    %17 = vector.shape_cast %16 : vector<2x16x16x4xf32> to vector<512x4xf32>
    %c0_34 = arith.constant 0 : index
    %c16 = arith.constant 16 : index
    %18 = vector.load %arg10[%c0_34, %c16] : memref<512x36xf32, #tpu.memory_space<vmem>>, vector<512x4xf32>
    tpu.vector_store %arg10[%c0_34, %c16], %17 {strides = array<i32>} : memref<512x36xf32, #tpu.memory_space<vmem>>, vector<512x4xf32>,
    %c0_35 = arith.constant 0 : index
    %c1_36 = arith.constant 1 : index
    %c2_37 = arith.constant 2 : index
    %c0_38 = arith.constant 0 : index
    %19 = vector.load %arg9[%c0_35, %c1_36, %c2_37, %c0_38] : memref<2x18x18x4xf32, #tpu.memory_space<vmem>>, vector<2x16x16x4xf32>
    %20 = vector.shape_cast %19 : vector<2x16x16x4xf32> to vector<512x4xf32>
    %c0_39 = arith.constant 0 : index
    %c20 = arith.constant 20 : index
    %21 = vector.load %arg10[%c0_39, %c20] : memref<512x36xf32, #tpu.memory_space<vmem>>, vector<512x4xf32>
    tpu.vector_store %arg10[%c0_39, %c20], %20 {strides = array<i32>} : memref<512x36xf32, #tpu.memory_space<vmem>>, vector<512x4xf32>,
    %c0_40 = arith.constant 0 : index
    %c2_41 = arith.constant 2 : index
    %c0_42 = arith.constant 0 : index
    %c0_43 = arith.constant 0 : index
    %22 = vector.load %arg9[%c0_40, %c2_41, %c0_42, %c0_43] : memref<2x18x18x4xf32, #tpu.memory_space<vmem>>, vector<2x16x16x4xf32>
    %23 = vector.shape_cast %22 : vector<2x16x16x4xf32> to vector<512x4xf32>
    %c0_44 = arith.constant 0 : index
    %c24 = arith.constant 24 : index
    %24 = vector.load %arg10[%c0_44, %c24] : memref<512x36xf32, #tpu.memory_space<vmem>>, vector<512x4xf32>
    tpu.vector_store %arg10[%c0_44, %c24], %23 {strides = array<i32>} : memref<512x36xf32, #tpu.memory_space<vmem>>, vector<512x4xf32>,
    %c0_45 = arith.constant 0 : index
    %c2_46 = arith.constant 2 : index
    %c1_47 = arith.constant 1 : index
    %c0_48 = arith.constant 0 : index
    %25 = vector.load %arg9[%c0_45, %c2_46, %c1_47, %c0_48] : memref<2x18x18x4xf32, #tpu.memory_space<vmem>>, vector<2x16x16x4xf32>
    %26 = vector.shape_cast %25 : vector<2x16x16x4xf32> to vector<512x4xf32>
    %c0_49 = arith.constant 0 : index
    %c28 = arith.constant 28 : index
    %27 = vector.load %arg10[%c0_49, %c28] : memref<512x36xf32, #tpu.memory_space<vmem>>, vector<512x4xf32>
    tpu.vector_store %arg10[%c0_49, %c28], %26 {strides = array<i32>} : memref<512x36xf32, #tpu.memory_space<vmem>>, vector<512x4xf32>,
    %c0_50 = arith.constant 0 : index
    %c2_51 = arith.constant 2 : index
    %c2_52 = arith.constant 2 : index
    %c0_53 = arith.constant 0 : index
    %28 = vector.load %arg9[%c0_50, %c2_51, %c2_52, %c0_53] : memref<2x18x18x4xf32, #tpu.memory_space<vmem>>, vector<2x16x16x4xf32>
    %29 = vector.shape_cast %28 : vector<2x16x16x4xf32> to vector<512x4xf32>
    %c0_54 = arith.constant 0 : index
    %c32 = arith.constant 32 : index
    %30 = vector.load %arg10[%c0_54, %c32] : memref<512x36xf32, #tpu.memory_space<vmem>>, vector<512x4xf32>
    tpu.vector_store %arg10[%c0_54, %c32], %29 {strides = array<i32>} : memref<512x36xf32, #tpu.memory_space<vmem>>, vector<512x4xf32>,
    %c0_55 = arith.constant 0 : index
    %c0_56 = arith.constant 0 : index
    %31 = vector.load %arg10[%c0_55, %c0_56] : memref<512x36xf32, #tpu.memory_space<vmem>>, vector<512x36xf32>
    %c0_57 = arith.constant 0 : index
    %c0_58 = arith.constant 0 : index
    %32 = vector.load %arg2[%c0_57, %c0_58] : memref<36x2xf32, #tpu.memory_space<vmem>>, vector<36x2xf32>
    %cst_59 = arith.constant dense<0.000000e+00> : vector<512x2xf32>
    %33 = tpu.matmul %31, %32, %cst_59 {dimension_numbers = #tpu.dot_dimension_numbers<[1], [0], [0], [1], [0, 0, 1, 1], [], []>} : vector<512x36xf32>, vector<36x2xf32>, vector<512x2xf32> -> vector<512x2xf32>
    %c0_60 = arith.constant 0 : index
    %c0_61 = arith.constant 0 : index
    %34 = vector.load %arg3[%c0_60, %c0_61] : memref<1x2xf32, #tpu.memory_space<vmem>>, vector<1x2xf32>
    %35 = vector.shape_cast %34 : vector<1x2xf32> to vector<2xf32>
    %36 = vector.shape_cast %35 : vector<2xf32> to vector<1x2xf32>
    %37 = vector.broadcast %36 : vector<1x2xf32> to vector<512x2xf32>
    %38 = arith.mulf %33, %37 : vector<512x2xf32>
    %c0_62 = arith.constant 0 : index
    %c0_63 = arith.constant 0 : index
    %39 = vector.load %arg4[%c0_62, %c0_63] : memref<1x2xf32, #tpu.memory_space<vmem>>, vector<1x2xf32>
    %40 = vector.shape_cast %39 : vector<1x2xf32> to vector<2xf32>
    %41 = vector.shape_cast %40 : vector<2xf32> to vector<1x2xf32>
    %42 = vector.broadcast %41 : vector<1x2xf32> to vector<512x2xf32>
    %43 = arith.addf %38, %42 : vector<512x2xf32>
    %cst_64 = arith.constant 0.000000e+00 : f32
    %44 = vector.broadcast %cst_64 : f32 to vector<512x2xf32>
    %45 = arith.maximumf %43, %44 : vector<512x2xf32>
    %c0_65 = arith.constant 0 : index
    %c0_66 = arith.constant 0 : index
    %46 = vector.load %arg5[%c0_65, %c0_66] : memref<2x6xf32, #tpu.memory_space<vmem>>, vector<2x6xf32>
    %cst_67 = arith.constant dense<0.000000e+00> : vector<512x6xf32>
    %47 = tpu.matmul %45, %46, %cst_67 {dimension_numbers = #tpu.dot_dimension_numbers<[1], [0], [0], [1], [0, 0, 1, 1], [], []>} : vector<512x2xf32>, vector<2x6xf32>, vector<512x6xf32> -> vector<512x6xf32>
    %c0_68 = arith.constant 0 : index
    %c0_69 = arith.constant 0 : index
    %48 = vector.load %arg6[%c0_68, %c0_69] : memref<1x6xf32, #tpu.memory_space<vmem>>, vector<1x6xf32>
    %49 = vector.shape_cast %48 : vector<1x6xf32> to vector<6xf32>
    %50 = vector.shape_cast %49 : vector<6xf32> to vector<1x6xf32>
    %51 = vector.broadcast %50 : vector<1x6xf32> to vector<512x6xf32>
    %52 = arith.mulf %47, %51 : vector<512x6xf32>
    %c0_70 = arith.constant 0 : index
    %c0_71 = arith.constant 0 : index
    %53 = vector.load %arg7[%c0_70, %c0_71] : memref<1x6xf32, #tpu.memory_space<vmem>>, vector<1x6xf32>
    %54 = vector.shape_cast %53 : vector<1x6xf32> to vector<6xf32>
    %55 = vector.shape_cast %54 : vector<6xf32> to vector<1x6xf32>
    %56 = vector.broadcast %55 : vector<1x6xf32> to vector<512x6xf32>
    %57 = arith.addf %52, %56 : vector<512x6xf32>
    %cst_72 = arith.constant 0.000000e+00 : f32
    %58 = vector.broadcast %cst_72 : f32 to vector<512x6xf32>
    %59 = arith.maximumf %57, %58 : vector<512x6xf32>
    %60 = vector.shape_cast %45 : vector<512x2xf32> to vector<2x16x16x2xf32>
    %c0_73 = arith.constant 0 : index
    %c0_74 = arith.constant 0 : index
    %c0_75 = arith.constant 0 : index
    %c0_76 = arith.constant 0 : index
    %61 = vector.load %arg8[%c0_73, %c0_74, %c0_75, %c0_76] : memref<2x16x16x8xf32, #tpu.memory_space<vmem>>, vector<2x16x16x2xf32>
    tpu.vector_store %arg8[%c0_73, %c0_74, %c0_75, %c0_76], %60 {strides = array<i32>} : memref<2x16x16x8xf32, #tpu.memory_space<vmem>>, vector<2x16x16x2xf32>,
    %62 = vector.shape_cast %59 : vector<512x6xf32> to vector<2x16x16x6xf32>
    %c0_77 = arith.constant 0 : index
    %c0_78 = arith.constant 0 : index
    %c0_79 = arith.constant 0 : index
    %c2_80 = arith.constant 2 : index
    %63 = vector.load %arg8[%c0_77, %c0_78, %c0_79, %c2_80] : memref<2x16x16x8xf32, #tpu.memory_space<vmem>>, vector<2x16x16x6xf32>
    tpu.vector_store %arg8[%c0_77, %c0_78, %c0_79, %c2_80], %62 {strides = array<i32>} : memref<2x16x16x8xf32, #tpu.memory_space<vmem>>, vector<2x16x16x6xf32>,
    return
  }
  func.func @transform_0(%arg0: i32) -> (i32, i32, i32, i32) {
    %c0_i32 = arith.constant 0 : i32
    %c0_i32_0 = arith.constant 0 : i32
    %c0_i32_1 = arith.constant 0 : i32
    %c0_i32_2 = arith.constant 0 : i32
    return %arg0, %c0_i32, %c0_i32_0, %c0_i32_1 : i32, i32, i32, i32
  }
  func.func @transform_1(%arg0: i32) -> (i32, i32) {
    %c0_i32 = arith.constant 0 : i32
    %c0_i32_0 = arith.constant 0 : i32
    %c0_i32_1 = arith.constant 0 : i32
    return %c0_i32, %c0_i32_0 : i32, i32
  }
  func.func @transform_2(%arg0: i32) -> (i32, i32) {
    %c0_i32 = arith.constant 0 : i32
    %c0_i32_0 = arith.constant 0 : i32
    %c0_i32_1 = arith.constant 0 : i32
    return %c0_i32, %c0_i32_0 : i32, i32
  }
  func.func @transform_3(%arg0: i32) -> (i32, i32) {
    %c0_i32 = arith.constant 0 : i32
    %c0_i32_0 = arith.constant 0 : i32
    %c0_i32_1 = arith.constant 0 : i32
    return %c0_i32, %c0_i32_0 : i32, i32
  }
  func.func @transform_4(%arg0: i32) -> (i32, i32) {
    %c0_i32 = arith.constant 0 : i32
    %c0_i32_0 = arith.constant 0 : i32
    %c0_i32_1 = arith.constant 0 : i32
    return %c0_i32, %c0_i32_0 : i32, i32
  }
  func.func @transform_5(%arg0: i32) -> (i32, i32) {
    %c0_i32 = arith.constant 0 : i32
    %c0_i32_0 = arith.constant 0 : i32
    %c0_i32_1 = arith.constant 0 : i32
    return %c0_i32, %c0_i32_0 : i32, i32
  }
  func.func @transform_6(%arg0: i32) -> (i32, i32) {
    %c0_i32 = arith.constant 0 : i32
    %c0_i32_0 = arith.constant 0 : i32
    %c0_i32_1 = arith.constant 0 : i32
    return %c0_i32, %c0_i32_0 : i32, i32
  }
  func.func @transform_7(%arg0: i32) -> (i32, i32, i32, i32) {
    %c0_i32 = arith.constant 0 : i32
    %c0_i32_0 = arith.constant 0 : i32
    %c0_i32_1 = arith.constant 0 : i32
    %c0_i32_2 = arith.constant 0 : i32
    return %arg0, %c0_i32, %c0_i32_0, %c0_i32_1 : i32, i32, i32, i32
  }
}

</mosaic_0001>

<llo_original>
// kernel: tpu_custom_call.1
$region0: #{tpu_custom_call.1}
  #allocation0 [shape = 'u32[]', space=smem, size = 0x4, offset = 0x4, fixed_abs, tag = 'smem constant byte address 0x4 - core index']
  #allocation1 [shape = 'u32[144,128]{1,0:T(1,128)}', space=vmem, size = 0x12000, scoped, tag = 'internal scratch']
  #allocation2 [shape = 'f32[2,18,18,4]{3,2,1,0:T(8,128)}', space=vmem, size = 0x6c000, scoped, tag = 'scratch operand']
  #allocation3 [shape = 'f32[512,36]{1,0:T(8,128)}', space=vmem, size = 0x40000, scoped, tag = 'scratch operand']
  %s0 = inlined_call_operand.vmem [shape: f32[2,16,16,4], index: 0, kind: input, shape index: {}]
  %s1 = inlined_call_operand.vmem [shape: f32[36,2], index: 1, kind: input, shape index: {}]
  %s2 = inlined_call_operand.vmem [shape: f32[1,2], index: 2, kind: input, shape index: {}]
  %s3 = inlined_call_operand.vmem [shape: f32[1,2], index: 3, kind: input, shape index: {}]
  %s4 = inlined_call_operand.vmem [shape: f32[2,6], index: 4, kind: input, shape index: {}]
  %s5 = inlined_call_operand.vmem [shape: f32[1,6], index: 5, kind: input, shape index: {}]
  %s6 = inlined_call_operand.vmem [shape: f32[1,6], index: 6, kind: input, shape index: {}]
  %s7 = inlined_call_operand.vmem [shape: f32[2,16,16,8], index: 7, kind: output, shape index: {}]
  %s8 = sld [smem:[#allocation0]]
  $region38: #{tpu_custom_call.1} parent=0
    _
  %s10 = ssub.s32 1, %s8
  %s11 = scalar_select 0, %s10, %s8
  // Predicated region
  $region2: #{tpu_custom_call.1} parent=0 // pred_check
    _
  $region3: #{tpu_custom_call.1} parent=0 // pred_check_branch
    %13 = sbr.rel (0) target = $region5
  $region4: #{tpu_custom_call.1} parent=0 // pred_region
    _
  $region5: #{tpu_custom_call.1} parent=0 // pred_fallthru
    _
  // Predicated region
  $region6: #{tpu_custom_call.1} parent=0 // pred_check
    _
  $region7: #{tpu_custom_call.1} parent=0 // pred_check_branch
    %15 = sbr.rel (0) target = $region9
  $region8: #{tpu_custom_call.1} parent=0 // pred_region
    _
  $region9: #{tpu_custom_call.1} parent=0 // pred_fallthru
    _
  // Predicated region
  $region10: #{tpu_custom_call.1} parent=0 // pred_check
    _
  $region11: #{tpu_custom_call.1} parent=0 // pred_check_branch
    %17 = sbr.rel (0) target = $region13
  $region12: #{tpu_custom_call.1} parent=0 // pred_region
    _
  $region13: #{tpu_custom_call.1} parent=0 // pred_fallthru
    _
  // Predicated region
  $region14: #{tpu_custom_call.1} parent=0 // pred_check
    _
  $region15: #{tpu_custom_call.1} parent=0 // pred_check_branch
    %19 = sbr.rel (0) target = $region17
  $region16: #{tpu_custom_call.1} parent=0 // pred_region
    _
  $region17: #{tpu_custom_call.1} parent=0 // pred_fallthru
    _
  // Predicated region
  $region18: #{tpu_custom_call.1} parent=0 // pred_check
    _
  $region19: #{tpu_custom_call.1} parent=0 // pred_check_branch
    %21 = sbr.rel (0) target = $region21
  $region20: #{tpu_custom_call.1} parent=0 // pred_region
    _
  $region21: #{tpu_custom_call.1} parent=0 // pred_fallthru
    _
  // Predicated region
  $region22: #{tpu_custom_call.1} parent=0 // pred_check
    _
  $region23: #{tpu_custom_call.1} parent=0 // pred_check_branch
    %23 = sbr.rel (0) target = $region25
  $region24: #{tpu_custom_call.1} parent=0 // pred_region
    _
  $region25: #{tpu_custom_call.1} parent=0 // pred_fallthru
    _
  // Predicated region
  $region26: #{tpu_custom_call.1} parent=0 // pred_check
    _
  $region27: #{tpu_custom_call.1} parent=0 // pred_check_branch
    %25 = sbr.rel (0) target = $region29
  $region28: #{tpu_custom_call.1} parent=0 // pred_region
    _
  $region29: #{tpu_custom_call.1} parent=0 // pred_fallthru
    _
  %vm26 = vcmask 31744
  %27 = vst.msk [vmem:[#allocation2] sm:$0xff] %vm26, 0.0
  %28 = vst.msk [vmem:[#allocation2 + $0x8] sm:$0xff] %vm26, 0.0
  %vm29 = vcmask 25600
  %30 = vst.msk [vmem:[#allocation2 + $0x10] sm:$0x3] %vm29, 0.0
  %31 = vst.msk [vmem:[#allocation2 + $0x18] sm:$0xff] %vm26, 0.0
  %32 = vst.msk [vmem:[#allocation2 + $0x20] sm:$0xff] %vm26, 0.0
  %33 = vst.msk [vmem:[#allocation2 + $0x28] sm:$0x3] %vm29, 0.0
  %34 = vst.msk [vmem:[#allocation2 + $0x30] sm:$0xff] %vm26, 0.0
  %35 = vst.msk [vmem:[#allocation2 + $0x38] sm:$0xff] %vm26, 0.0
  %36 = vst.msk [vmem:[#allocation2 + $0x40] sm:$0x3] %vm29, 0.0
  %37 = vst.msk [vmem:[#allocation2 + $0x48] sm:$0xff] %vm26, 0.0
  %38 = vst.msk [vmem:[#allocation2 + $0x50] sm:$0xff] %vm26, 0.0
  %39 = vst.msk [vmem:[#allocation2 + $0x58] sm:$0x3] %vm29, 0.0
  %40 = vst.msk [vmem:[#allocation2 + $0x60] sm:$0xff] %vm26, 0.0
  %41 = vst.msk [vmem:[#allocation2 + $0x68] sm:$0xff] %vm26, 0.0
  %42 = vst.msk [vmem:[#allocation2 + $0x70] sm:$0x3] %vm29, 0.0
  %43 = vst.msk [vmem:[#allocation2 + $0x78] sm:$0xff] %vm26, 0.0
  %44 = vst.msk [vmem:[#allocation2 + $0x80] sm:$0xff] %vm26, 0.0
  %45 = vst.msk [vmem:[#allocation2 + $0x88] sm:$0x3] %vm29, 0.0
  %46 = vst.msk [vmem:[#allocation2 + $0x90] sm:$0xff] %vm26, 0.0
  %47 = vst.msk [vmem:[#allocation2 + $0x98] sm:$0xff] %vm26, 0.0
  %48 = vst.msk [vmem:[#allocation2 + $0xa0] sm:$0x3] %vm29, 0.0
  %49 = vst.msk [vmem:[#allocation2 + $0xa8] sm:$0xff] %vm26, 0.0
  %50 = vst.msk [vmem:[#allocation2 + $0xb0] sm:$0xff] %vm26, 0.0
  %51 = vst.msk [vmem:[#allocation2 + $0xb8] sm:$0x3] %vm29, 0.0
  %52 = vst.msk [vmem:[#allocation2 + $0xc0] sm:$0xff] %vm26, 0.0
  %53 = vst.msk [vmem:[#allocation2 + $0xc8] sm:$0xff] %vm26, 0.0
  %54 = vst.msk [vmem:[#allocation2 + $0xd0] sm:$0x3] %vm29, 0.0
  %55 = vst.msk [vmem:[#allocation2 + $0xd8] sm:$0xff] %vm26, 0.0
  %56 = vst.msk [vmem:[#allocation2 + $0xe0] sm:$0xff] %vm26, 0.0
  %57 = vst.msk [vmem:[#allocation2 + $0xe8] sm:$0x3] %vm29, 0.0
  %58 = vst.msk [vmem:[#allocation2 + $0xf0] sm:$0xff] %vm26, 0.0
  %59 = vst.msk [vmem:[#allocation2 + $0xf8] sm:$0xff] %vm26, 0.0
  %60 = vst.msk [vmem:[#allocation2 + $0x100] sm:$0x3] %vm29, 0.0
  %61 = vst.msk [vmem:[#allocation2 + $0x108] sm:$0xff] %vm26, 0.0
  %62 = vst.msk [vmem:[#allocation2 + $0x110] sm:$0xff] %vm26, 0.0
  %63 = vst.msk [vmem:[#allocation2 + $0x118] sm:$0x3] %vm29, 0.0
  %64 = vst.msk [vmem:[#allocation2 + $0x120] sm:$0xff] %vm26, 0.0
  %65 = vst.msk [vmem:[#allocation2 + $0x128] sm:$0xff] %vm26, 0.0
  %66 = vst.msk [vmem:[#allocation2 + $0x130] sm:$0x3] %vm29, 0.0
  %67 = vst.msk [vmem:[#allocation2 + $0x138] sm:$0xff] %vm26, 0.0
  %68 = vst.msk [vmem:[#allocation2 + $0x140] sm:$0xff] %vm26, 0.0
  %69 = vst.msk [vmem:[#allocation2 + $0x148] sm:$0x3] %vm29, 0.0
  %70 = vst.msk [vmem:[#allocation2 + $0x150] sm:$0xff] %vm26, 0.0
  %71 = vst.msk [vmem:[#allocation2 + $0x158] sm:$0xff] %vm26, 0.0
  %72 = vst.msk [vmem:[#allocation2 + $0x160] sm:$0x3] %vm29, 0.0
  %73 = vst.msk [vmem:[#allocation2 + $0x168] sm:$0xff] %vm26, 0.0
  %74 = vst.msk [vmem:[#allocation2 + $0x170] sm:$0xff] %vm26, 0.0
  %75 = vst.msk [vmem:[#allocation2 + $0x178] sm:$0x3] %vm29, 0.0
  %76 = vst.msk [vmem:[#allocation2 + $0x180] sm:$0xff] %vm26, 0.0
  %77 = vst.msk [vmem:[#allocation2 + $0x188] sm:$0xff] %vm26, 0.0
  %78 = vst.msk [vmem:[#allocation2 + $0x190] sm:$0x3] %vm29, 0.0
  %79 = vst.msk [vmem:[#allocation2 + $0x198] sm:$0xff] %vm26, 0.0
  %80 = vst.msk [vmem:[#allocation2 + $0x1a0] sm:$0xff] %vm26, 0.0
  %81 = vst.msk [vmem:[#allocation2 + $0x1a8] sm:$0x3] %vm29, 0.0
  %82 = vst.msk [vmem:[#allocation2 + $0x1b0] sm:$0xff] %vm26, 0.0
  %83 = vst.msk [vmem:[#allocation2 + $0x1b8] sm:$0xff] %vm26, 0.0
  %84 = vst.msk [vmem:[#allocation2 + $0x1c0] sm:$0x3] %vm29, 0.0
  %85 = vst.msk [vmem:[#allocation2 + $0x1c8] sm:$0xff] %vm26, 0.0
  %86 = vst.msk [vmem:[#allocation2 + $0x1d0] sm:$0xff] %vm26, 0.0
  %87 = vst.msk [vmem:[#allocation2 + $0x1d8] sm:$0x3] %vm29, 0.0
  %88 = vst.msk [vmem:[#allocation2 + $0x1e0] sm:$0xff] %vm26, 0.0
  %89 = vst.msk [vmem:[#allocation2 + $0x1e8] sm:$0xff] %vm26, 0.0
  %90 = vst.msk [vmem:[#allocation2 + $0x1f0] sm:$0x3] %vm29, 0.0
  %91 = vst.msk [vmem:[#allocation2 + $0x1f8] sm:$0xff] %vm26, 0.0
  %92 = vst.msk [vmem:[#allocation2 + $0x200] sm:$0xff] %vm26, 0.0
  %93 = vst.msk [vmem:[#allocation2 + $0x208] sm:$0x3] %vm29, 0.0
  %94 = vst.msk [vmem:[#allocation2 + $0x210] sm:$0xff] %vm26, 0.0
  %95 = vst.msk [vmem:[#allocation2 + $0x218] sm:$0xff] %vm26, 0.0
  %96 = vst.msk [vmem:[#allocation2 + $0x220] sm:$0x3] %vm29, 0.0
  %97 = vst.msk [vmem:[#allocation2 + $0x228] sm:$0xff] %vm26, 0.0
  %98 = vst.msk [vmem:[#allocation2 + $0x230] sm:$0xff] %vm26, 0.0
  %99 = vst.msk [vmem:[#allocation2 + $0x238] sm:$0x3] %vm29, 0.0
  %100 = vst.msk [vmem:[#allocation2 + $0x240] sm:$0xff] %vm26, 0.0
  %101 = vst.msk [vmem:[#allocation2 + $0x248] sm:$0xff] %vm26, 0.0
  %102 = vst.msk [vmem:[#allocation2 + $0x250] sm:$0x3] %vm29, 0.0
  %103 = vst.msk [vmem:[#allocation2 + $0x258] sm:$0xff] %vm26, 0.0
  %104 = vst.msk [vmem:[#allocation2 + $0x260] sm:$0xff] %vm26, 0.0
  %105 = vst.msk [vmem:[#allocation2 + $0x268] sm:$0x3] %vm29, 0.0
  %106 = vst.msk [vmem:[#allocation2 + $0x270] sm:$0xff] %vm26, 0.0
  %107 = vst.msk [vmem:[#allocation2 + $0x278] sm:$0xff] %vm26, 0.0
  %108 = vst.msk [vmem:[#allocation2 + $0x280] sm:$0x3] %vm29, 0.0
  %109 = vst.msk [vmem:[#allocation2 + $0x288] sm:$0xff] %vm26, 0.0
  %110 = vst.msk [vmem:[#allocation2 + $0x290] sm:$0xff] %vm26, 0.0
  %111 = vst.msk [vmem:[#allocation2 + $0x298] sm:$0x3] %vm29, 0.0
  %112 = vst.msk [vmem:[#allocation2 + $0x2a0] sm:$0xff] %vm26, 0.0
  %113 = vst.msk [vmem:[#allocation2 + $0x2a8] sm:$0xff] %vm26, 0.0
  %114 = vst.msk [vmem:[#allocation2 + $0x2b0] sm:$0x3] %vm29, 0.0
  %115 = vst.msk [vmem:[#allocation2 + $0x2b8] sm:$0xff] %vm26, 0.0
  %116 = vst.msk [vmem:[#allocation2 + $0x2c0] sm:$0xff] %vm26, 0.0
  %117 = vst.msk [vmem:[#allocation2 + $0x2c8] sm:$0x3] %vm29, 0.0
  %118 = vst.msk [vmem:[#allocation2 + $0x2d0] sm:$0xff] %vm26, 0.0
  %119 = vst.msk [vmem:[#allocation2 + $0x2d8] sm:$0xff] %vm26, 0.0
  %120 = vst.msk [vmem:[#allocation2 + $0x2e0] sm:$0x3] %vm29, 0.0
  %121 = vst.msk [vmem:[#allocation2 + $0x2e8] sm:$0xff] %vm26, 0.0
  %122 = vst.msk [vmem:[#allocation2 + $0x2f0] sm:$0xff] %vm26, 0.0
  %123 = vst.msk [vmem:[#allocation2 + $0x2f8] sm:$0x3] %vm29, 0.0
  %124 = vst.msk [vmem:[#allocation2 + $0x300] sm:$0xff] %vm26, 0.0
  %125 = vst.msk [vmem:[#allocation2 + $0x308] sm:$0xff] %vm26, 0.0
  %126 = vst.msk [vmem:[#allocation2 + $0x310] sm:$0x3] %vm29, 0.0
  %127 = vst.msk [vmem:[#allocation2 + $0x318] sm:$0xff] %vm26, 0.0
  %128 = vst.msk [vmem:[#allocation2 + $0x320] sm:$0xff] %vm26, 0.0
  %129 = vst.msk [vmem:[#allocation2 + $0x328] sm:$0x3] %vm29, 0.0
  %130 = vst.msk [vmem:[#allocation2 + $0x330] sm:$0xff] %vm26, 0.0
  %131 = vst.msk [vmem:[#allocation2 + $0x338] sm:$0xff] %vm26, 0.0
  %132 = vst.msk [vmem:[#allocation2 + $0x340] sm:$0x3] %vm29, 0.0
  %133 = vst.msk [vmem:[#allocation2 + $0x348] sm:$0xff] %vm26, 0.0
  %134 = vst.msk [vmem:[#allocation2 + $0x350] sm:$0xff] %vm26, 0.0
  %135 = vst.msk [vmem:[#allocation2 + $0x358] sm:$0x3] %vm29, 0.0
  %v136 = vld [vmem:[%s0] sm:$0xff]
  %v137 = vld [vmem:[%s0 + $0x8] sm:$0xff]
  %v138 = vld [vmem:[%s0 + $0x10] sm:$0xff]
  %v139 = vld [vmem:[%s0 + $0x18] sm:$0xff]
  %v140 = vld [vmem:[%s0 + $0x20] sm:$0xff]
  %v141 = vld [vmem:[%s0 + $0x28] sm:$0xff]
  %v142 = vld [vmem:[%s0 + $0x30] sm:$0xff]
  %v143 = vld [vmem:[%s0 + $0x38] sm:$0xff]
  %v144 = vld [vmem:[%s0 + $0x40] sm:$0xff]
  %v145 = vld [vmem:[%s0 + $0x48] sm:$0xff]
  %v146 = vld [vmem:[%s0 + $0x50] sm:$0xff]
  %v147 = vld [vmem:[%s0 + $0x58] sm:$0xff]
  %v148 = vld [vmem:[%s0 + $0x60] sm:$0xff]
  %v149 = vld [vmem:[%s0 + $0x68] sm:$0xff]
  %v150 = vld [vmem:[%s0 + $0x70] sm:$0xff]
  %v151 = vld [vmem:[%s0 + $0x78] sm:$0xff]
  %v152 = vld [vmem:[%s0 + $0x80] sm:$0xff]
  %v153 = vld [vmem:[%s0 + $0x88] sm:$0xff]
  %v154 = vld [vmem:[%s0 + $0x90] sm:$0xff]
  %v155 = vld [vmem:[%s0 + $0x98] sm:$0xff]
  %v156 = vld [vmem:[%s0 + $0xa0] sm:$0xff]
  %v157 = vld [vmem:[%s0 + $0xa8] sm:$0xff]
  %v158 = vld [vmem:[%s0 + $0xb0] sm:$0xff]
  %v159 = vld [vmem:[%s0 + $0xb8] sm:$0xff]
  %v160 = vld [vmem:[%s0 + $0xc0] sm:$0xff]
  %v161 = vld [vmem:[%s0 + $0xc8] sm:$0xff]
  %v162 = vld [vmem:[%s0 + $0xd0] sm:$0xff]
  %v163 = vld [vmem:[%s0 + $0xd8] sm:$0xff]
  %v164 = vld [vmem:[%s0 + $0xe0] sm:$0xff]
  %v165 = vld [vmem:[%s0 + $0xe8] sm:$0xff]
  %v166 = vld [vmem:[%s0 + $0xf0] sm:$0xff]
  %v167 = vld [vmem:[%s0 + $0xf8] sm:$0xff]
  %v168 = vld [vmem:[%s0 + $0x100] sm:$0xff]
  %v169 = vld [vmem:[%s0 + $0x108] sm:$0xff]
  %v170 = vld [vmem:[%s0 + $0x110] sm:$0xff]
  %v171 = vld [vmem:[%s0 + $0x118] sm:$0xff]
  %v172 = vld [vmem:[%s0 + $0x120] sm:$0xff]
  %v173 = vld [vmem:[%s0 + $0x128] sm:$0xff]
  %v174 = vld [vmem:[%s0 + $0x130] sm:$0xff]
  %v175 = vld [vmem:[%s0 + $0x138] sm:$0xff]
  %v176 = vld [vmem:[%s0 + $0x140] sm:$0xff]
  %v177 = vld [vmem:[%s0 + $0x148] sm:$0xff]
  %v178 = vld [vmem:[%s0 + $0x150] sm:$0xff]
  %v179 = vld [vmem:[%s0 + $0x158] sm:$0xff]
  %v180 = vld [vmem:[%s0 + $0x160] sm:$0xff]
  %v181 = vld [vmem:[%s0 + $0x168] sm:$0xff]
  %v182 = vld [vmem:[%s0 + $0x170] sm:$0xff]
  %v183 = vld [vmem:[%s0 + $0x178] sm:$0xff]
  %v184 = vld [vmem:[%s0 + $0x180] sm:$0xff]
  %v185 = vld [vmem:[%s0 + $0x188] sm:$0xff]
  %v186 = vld [vmem:[%s0 + $0x190] sm:$0xff]
  %v187 = vld [vmem:[%s0 + $0x198] sm:$0xff]
  %v188 = vld [vmem:[%s0 + $0x1a0] sm:$0xff]
  %v189 = vld [vmem:[%s0 + $0x1a8] sm:$0xff]
  %v190 = vld [vmem:[%s0 + $0x1b0] sm:$0xff]
  %v191 = vld [vmem:[%s0 + $0x1b8] sm:$0xff]
  %v192 = vld [vmem:[%s0 + $0x1c0] sm:$0xff]
  %v193 = vld [vmem:[%s0 + $0x1c8] sm:$0xff]
  %v194 = vld [vmem:[%s0 + $0x1d0] sm:$0xff]
  %v195 = vld [vmem:[%s0 + $0x1d8] sm:$0xff]
  %v196 = vld [vmem:[%s0 + $0x1e0] sm:$0xff]
  %v197 = vld [vmem:[%s0 + $0x1e8] sm:$0xff]
  %v198 = vld [vmem:[%s0 + $0x1f0] sm:$0xff]
  %v199 = vld [vmem:[%s0 + $0x1f8] sm:$0xff]
  %s200 = scalar_lea.vmem [#allocation2], 24
  %201 = vst.msk [vmem:[%s200 + $0x1] sm:$0xff] %vm26, %v136
  %202 = vst.msk [vmem:[%s200 + $0x9] sm:$0xff] %vm26, %v137
  %203 = vst.msk [vmem:[%s200 + $0x19] sm:$0xff] %vm26, %v138
  %204 = vst.msk [vmem:[%s200 + $0x21] sm:$0xff] %vm26, %v139
  %205 = vst.msk [vmem:[%s200 + $0x31] sm:$0xff] %vm26, %v140
  %206 = vst.msk [vmem:[%s200 + $0x39] sm:$0xff] %vm26, %v141
  %207 = vst.msk [vmem:[%s200 + $0x49] sm:$0xff] %vm26, %v142
  %208 = vst.msk [vmem:[%s200 + $0x51] sm:$0xff] %vm26, %v143
  %209 = vst.msk [vmem:[%s200 + $0x61] sm:$0xff] %vm26, %v144
  %210 = vst.msk [vmem:[%s200 + $0x69] sm:$0xff] %vm26, %v145
  %211 = vst.msk [vmem:[%s200 + $0x79] sm:$0xff] %vm26, %v146
  %212 = vst.msk [vmem:[%s200 + $0x81] sm:$0xff] %vm26, %v147
  %213 = vst.msk [vmem:[%s200 + $0x91] sm:$0xff] %vm26, %v148
  %214 = vst.msk [vmem:[%s200 + $0x99] sm:$0xff] %vm26, %v149
  %215 = vst.msk [vmem:[%s200 + $0xa9] sm:$0xff] %vm26, %v150
  %216 = vst.msk [vmem:[%s200 + $0xb1] sm:$0xff] %vm26, %v151
  %217 = vst.msk [vmem:[%s200 + $0xc1] sm:$0xff] %vm26, %v152
  %218 = vst.msk [vmem:[%s200 + $0xc9] sm:$0xff] %vm26, %v153
  %219 = vst.msk [vmem:[%s200 + $0xd9] sm:$0xff] %vm26, %v154
  %220 = vst.msk [vmem:[%s200 + $0xe1] sm:$0xff] %vm26, %v155
  %221 = vst.msk [vmem:[%s200 + $0xf1] sm:$0xff] %vm26, %v156
  %222 = vst.msk [vmem:[%s200 + $0xf9] sm:$0xff] %vm26, %v157
  %223 = vst.msk [vmem:[%s200 + $0x109] sm:$0xff] %vm26, %v158
  %224 = vst.msk [vmem:[%s200 + $0x111] sm:$0xff] %vm26, %v159
  %225 = vst.msk [vmem:[%s200 + $0x121] sm:$0xff] %vm26, %v160
  %226 = vst.msk [vmem:[%s200 + $0x129] sm:$0xff] %vm26, %v161
  %227 = vst.msk [vmem:[%s200 + $0x139] sm:$0xff] %vm26, %v162
  %228 = vst.msk [vmem:[%s200 + $0x141] sm:$0xff] %vm26, %v163
  %229 = vst.msk [vmem:[%s200 + $0x151] sm:$0xff] %vm26, %v164
  %230 = vst.msk [vmem:[%s200 + $0x159] sm:$0xff] %vm26, %v165
  %231 = vst.msk [vmem:[%s200 + $0x169] sm:$0xff] %vm26, %v166
  %232 = vst.msk [vmem:[%s200 + $0x171] sm:$0xff] %vm26, %v167
  %233 = vst.msk [vmem:[%s200 + $0x1b1] sm:$0xff] %vm26, %v168
  %234 = vst.msk [vmem:[%s200 + $0x1b9] sm:$0xff] %vm26, %v169
  %235 = vst.msk [vmem:[%s200 + $0x1c9] sm:$0xff] %vm26, %v170
  %236 = vst.msk [vmem:[%s200 + $0x1d1] sm:$0xff] %vm26, %v171
  %237 = vst.msk [vmem:[%s200 + $0x1e1] sm:$0xff] %vm26, %v172
  %238 = vst.msk [vmem:[%s200 + $0x1e9] sm:$0xff] %vm26, %v173
  %239 = vst.msk [vmem:[%s200 + $0x1f9] sm:$0xff] %vm26, %v174
  %240 = vst.msk [vmem:[%s200 + $0x201] sm:$0xff] %vm26, %v175
  %241 = vst.msk [vmem:[%s200 + $0x211] sm:$0xff] %vm26, %v176
  %242 = vst.msk [vmem:[%s200 + $0x219] sm:$0xff] %vm26, %v177
  %243 = vst.msk [vmem:[%s200 + $0x229] sm:$0xff] %vm26, %v178
  %244 = vst.msk [vmem:[%s200 + $0x231] sm:$0xff] %vm26, %v179
  %245 = vst.msk [vmem:[%s200 + $0x241] sm:$0xff] %vm26, %v180
  %246 = vst.msk [vmem:[%s200 + $0x249] sm:$0xff] %vm26, %v181
  %247 = vst.msk [vmem:[%s200 + $0x259] sm:$0xff] %vm26, %v182
  %248 = vst.msk [vmem:[%s200 + $0x261] sm:$0xff] %vm26, %v183
  %249 = vst.msk [vmem:[%s200 + $0x271] sm:$0xff] %vm26, %v184
  %250 = vst.msk [vmem:[%s200 + $0x279] sm:$0xff] %vm26, %v185
  %251 = vst.msk [vmem:[%s200 + $0x289] sm:$0xff] %vm26, %v186
  %252 = vst.msk [vmem:[%s200 + $0x291] sm:$0xff] %vm26, %v187
  %253 = vst.msk [vmem:[%s200 + $0x2a1] sm:$0xff] %vm26, %v188
  %254 = vst.msk [vmem:[%s200 + $0x2a9] sm:$0xff] %vm26, %v189
  %255 = vst.msk [vmem:[%s200 + $0x2b9] sm:$0xff] %vm26, %v190
  %256 = vst.msk [vmem:[%s200 + $0x2c1] sm:$0xff] %vm26, %v191
  %257 = vst.msk [vmem:[%s200 + $0x2d1] sm:$0xff] %vm26, %v192
  %258 = vst.msk [vmem:[%s200 + $0x2d9] sm:$0xff] %vm26, %v193
  %259 = vst.msk [vmem:[%s200 + $0x2e9] sm:$0xff] %vm26, %v194
  %260 = vst.msk [vmem:[%s200 + $0x2f1] sm:$0xff] %vm26, %v195
  %261 = vst.msk [vmem:[%s200 + $0x301] sm:$0xff] %vm26, %v196
  %262 = vst.msk [vmem:[%s200 + $0x309] sm:$0xff] %vm26, %v197
  %263 = vst.msk [vmem:[%s200 + $0x319] sm:$0xff] %vm26, %v198
  %264 = vst.msk [vmem:[%s200 + $0x321] sm:$0xff] %vm26, %v199
  %v265 = vld [vmem:[#allocation2] sm:$0xff]
  %v266 = vld [vmem:[#allocation2 + $0x8] sm:$0xff]
  %v267 = vld [vmem:[#allocation2 + $0x18] sm:$0xff]
  %v268 = vld [vmem:[#allocation2 + $0x20] sm:$0xff]
  %v269 = vld [vmem:[#allocation2 + $0x30] sm:$0xff]
  %v270 = vld [vmem:[#allocation2 + $0x38] sm:$0xff]
  %v271 = vld [vmem:[#allocation2 + $0x48] sm:$0xff]
  %v272 = vld [vmem:[#allocation2 + $0x50] sm:$0xff]
  %v273 = vld [vmem:[#allocation2 + $0x60] sm:$0xff]
  %v274 = vld [vmem:[#allocation2 + $0x68] sm:$0xff]
  %v275 = vld [vmem:[#allocation2 + $0x78] sm:$0xff]
  %v276 = vld [vmem:[#allocation2 + $0x80] sm:$0xff]
  %v277 = vld [vmem:[#allocation2 + $0x90] sm:$0xff]
  %v278 = vld [vmem:[#allocation2 + $0x98] sm:$0xff]
  %v279 = vld [vmem:[#allocation2 + $0xa8] sm:$0xff]
  %v280 = vld [vmem:[#allocation2 + $0xb0] sm:$0xff]
  %v281 = vld [vmem:[#allocation2 + $0xc0] sm:$0xff]
  %v282 = vld [vmem:[#allocation2 + $0xc8] sm:$0xff]
  %v283 = vld [vmem:[#allocation2 + $0xd8] sm:$0xff]
  %v284 = vld [vmem:[#allocation2 + $0xe0] sm:$0xff]
  %v285 = vld [vmem:[#allocation2 + $0xf0] sm:$0xff]
  %v286 = vld [vmem:[#allocation2 + $0xf8] sm:$0xff]
  %v287 = vld [vmem:[#allocation2 + $0x108] sm:$0xff]
  %v288 = vld [vmem:[#allocation2 + $0x110] sm:$0xff]
  %v289 = vld [vmem:[#allocation2 + $0x120] sm:$0xff]
  %v290 = vld [vmem:[#allocation2 + $0x128] sm:$0xff]
  %v291 = vld [vmem:[#allocation2 + $0x138] sm:$0xff]
  %v292 = vld [vmem:[#allocation2 + $0x140] sm:$0xff]
  %v293 = vld [vmem:[#allocation2 + $0x150] sm:$0xff]
  %v294 = vld [vmem:[#allocation2 + $0x158] sm:$0xff]
  %v295 = vld [vmem:[#allocation2 + $0x168] sm:$0xff]
  %v296 = vld [vmem:[#allocation2 + $0x170] sm:$0xff]
  %v297 = vld [vmem:[#allocation2 + $0x1b0] sm:$0xff]
  %v298 = vld [vmem:[#allocation2 + $0x1b8] sm:$0xff]
  %v299 = vld [vmem:[#allocation2 + $0x1c8] sm:$0xff]
  %v300 = vld [vmem:[#allocation2 + $0x1d0] sm:$0xff]
  %v301 = vld [vmem:[#allocation2 + $0x1e0] sm:$0xff]
  %v302 = vld [vmem:[#allocation2 + $0x1e8] sm:$0xff]
  %v303 = vld [vmem:[#allocation2 + $0x1f8] sm:$0xff]
  %v304 = vld [vmem:[#allocation2 + $0x200] sm:$0xff]
  %v305 = vld [vmem:[#allocation2 + $0x210] sm:$0xff]
  %v306 = vld [vmem:[#allocation2 + $0x218] sm:$0xff]
  %v307 = vld [vmem:[#allocation2 + $0x228] sm:$0xff]
  %v308 = vld [vmem:[#allocation2 + $0x230] sm:$0xff]
  %v309 = vld [vmem:[#allocation2 + $0x240] sm:$0xff]
  %v310 = vld [vmem:[#allocation2 + $0x248] sm:$0xff]
  %v311 = vld [vmem:[#allocation2 + $0x258] sm:$0xff]
  %v312 = vld [vmem:[#allocation2 + $0x260] sm:$0xff]
  %v313 = vld [vmem:[#allocation2 + $0x270] sm:$0xff]
  %v314 = vld [vmem:[#allocation2 + $0x278] sm:$0xff]
  %v315 = vld [vmem:[#allocation2 + $0x288] sm:$0xff]
  %v316 = vld [vmem:[#allocation2 + $0x290] sm:$0xff]
  %v317 = vld [vmem:[#allocation2 + $0x2a0] sm:$0xff]
  %v318 = vld [vmem:[#allocation2 + $0x2a8] sm:$0xff]
  %v319 = vld [vmem:[#allocation2 + $0x2b8] sm:$0xff]
  %v320 = vld [vmem:[#allocation2 + $0x2c0] sm:$0xff]
  %v321 = vld [vmem:[#allocation2 + $0x2d0] sm:$0xff]
  %v322 = vld [vmem:[#allocation2 + $0x2d8] sm:$0xff]
  %v323 = vld [vmem:[#allocation2 + $0x2e8] sm:$0xff]
  %v324 = vld [vmem:[#allocation2 + $0x2f0] sm:$0xff]
  %v325 = vld [vmem:[#allocation2 + $0x300] sm:$0xff]
  %v326 = vld [vmem:[#allocation2 + $0x308] sm:$0xff]
  %v327 = vld [vmem:[#allocation2 + $0x318] sm:$0xff]
  %v328 = vld [vmem:[#allocation2 + $0x320] sm:$0xff]
  %329 = vst.msk [vmem:[#allocation3] sm:$0xff] %vm26, %v265
  %330 = vst.msk [vmem:[#allocation3 + $0x8] sm:$0xff] %vm26, %v266
  %331 = vst.msk [vmem:[#allocation3 + $0x10] sm:$0xff] %vm26, %v267
  %332 = vst.msk [vmem:[#allocation3 + $0x18] sm:$0xff] %vm26, %v268
  %333 = vst.msk [vmem:[#allocation3 + $0x20] sm:$0xff] %vm26, %v269
  %334 = vst.msk [vmem:[#allocation3 + $0x28] sm:$0xff] %vm26, %v270
  %335 = vst.msk [vmem:[#allocation3 + $0x30] sm:$0xff] %vm26, %v271
  %336 = vst.msk [vmem:[#allocation3 + $0x38] sm:$0xff] %vm26, %v272
  %337 = vst.msk [vmem:[#allocation3 + $0x40] sm:$0xff] %vm26, %v273
  %338 = vst.msk [vmem:[#allocation3 + $0x48] sm:$0xff] %vm26, %v274
  %339 = vst.msk [vmem:[#allocation3 + $0x50] sm:$0xff] %vm26, %v275
  %340 = vst.msk [vmem:[#allocation3 + $0x58] sm:$0xff] %vm26, %v276
  %341 = vst.msk [vmem:[#allocation3 + $0x60] sm:$0xff] %vm26, %v277
  %342 = vst.msk [vmem:[#allocation3 + $0x68] sm:$0xff] %vm26, %v278
  %343 = vst.msk [vmem:[#allocation3 + $0x70] sm:$0xff] %vm26, %v279
  %344 = vst.msk [vmem:[#allocation3 + $0x78] sm:$0xff] %vm26, %v280
  %345 = vst.msk [vmem:[#allocation3 + $0x80] sm:$0xff] %vm26, %v281
  %346 = vst.msk [vmem:[#allocation3 + $0x88] sm:$0xff] %vm26, %v282
  %347 = vst.msk [vmem:[#allocation3 + $0x90] sm:$0xff] %vm26, %v283
  %348 = vst.msk [vmem:[#allocation3 + $0x98] sm:$0xff] %vm26, %v284
  %349 = vst.msk [vmem:[#allocation3 + $0xa0] sm:$0xff] %vm26, %v285
  %350 = vst.msk [vmem:[#allocation3 + $0xa8] sm:$0xff] %vm26, %v286
  %351 = vst.msk [vmem:[#allocation3 + $0xb0] sm:$0xff] %vm26, %v287
  %352 = vst.msk [vmem:[#allocation3 + $0xb8] sm:$0xff] %vm26, %v288
  %353 = vst.msk [vmem:[#allocation3 + $0xc0] sm:$0xff] %vm26, %v289
  %354 = vst.msk [vmem:[#allocation3 + $0xc8] sm:$0xff] %vm26, %v290
  %355 = vst.msk [vmem:[#allocation3 + $0xd0] sm:$0xff] %vm26, %v291
  %356 = vst.msk [vmem:[#allocation3 + $0xd8] sm:$0xff] %vm26, %v292
  %357 = vst.msk [vmem:[#allocation3 + $0xe0] sm:$0xff] %vm26, %v293
  %358 = vst.msk [vmem:[#allocation3 + $0xe8] sm:$0xff] %vm26, %v294
  %359 = vst.msk [vmem:[#allocation3 + $0xf0] sm:$0xff] %vm26, %v295
  %360 = vst.msk [vmem:[#allocation3 + $0xf8] sm:$0xff] %vm26, %v296
  %361 = vst.msk [vmem:[#allocation3 + $0x100] sm:$0xff] %vm26, %v297
  %362 = vst.msk [vmem:[#allocation3 + $0x108] sm:$0xff] %vm26, %v298
  %363 = vst.msk [vmem:[#allocation3 + $0x110] sm:$0xff] %vm26, %v299
  %364 = vst.msk [vmem:[#allocation3 + $0x118] sm:$0xff] %vm26, %v300
  %365 = vst.msk [vmem:[#allocation3 + $0x120] sm:$0xff] %vm26, %v301
  %366 = vst.msk [vmem:[#allocation3 + $0x128] sm:$0xff] %vm26, %v302
  %367 = vst.msk [vmem:[#allocation3 + $0x130] sm:$0xff] %vm26, %v303
  %368 = vst.msk [vmem:[#allocation3 + $0x138] sm:$0xff] %vm26, %v304
  %369 = vst.msk [vmem:[#allocation3 + $0x140] sm:$0xff] %vm26, %v305
  %370 = vst.msk [vmem:[#allocation3 + $0x148] sm:$0xff] %vm26, %v306
  %371 = vst.msk [vmem:[#allocation3 + $0x150] sm:$0xff] %vm26, %v307
  %372 = vst.msk [vmem:[#allocation3 + $0x158] sm:$0xff] %vm26, %v308
  %373 = vst.msk [vmem:[#allocation3 + $0x160] sm:$0xff] %vm26, %v309
  %374 = vst.msk [vmem:[#allocation3 + $0x168] sm:$0xff] %vm26, %v310
  %375 = vst.msk [vmem:[#allocation3 + $0x170] sm:$0xff] %vm26, %v311
  %376 = vst.msk [vmem:[#allocation3 + $0x178] sm:$0xff] %vm26, %v312
  %377 = vst.msk [vmem:[#allocation3 + $0x180] sm:$0xff] %vm26, %v313
  %378 = vst.msk [vmem:[#allocation3 + $0x188] sm:$0xff] %vm26, %v314
  %379 = vst.msk [vmem:[#allocation3 + $0x190] sm:$0xff] %vm26, %v315
  %380 = vst.msk [vmem:[#allocation3 + $0x198] sm:$0xff] %vm26, %v316
  %381 = vst.msk [vmem:[#allocation3 + $0x1a0] sm:$0xff] %vm26, %v317
  %382 = vst.msk [vmem:[#allocation3 + $0x1a8] sm:$0xff] %vm26, %v318
  %383 = vst.msk [vmem:[#allocation3 + $0x1b0] sm:$0xff] %vm26, %v319
  %384 = vst.msk [vmem:[#allocation3 + $0x1b8] sm:$0xff] %vm26, %v320
  %385 = vst.msk [vmem:[#allocation3 + $0x1c0] sm:$0xff] %vm26, %v321
  %386 = vst.msk [vmem:[#allocation3 + $0x1c8] sm:$0xff] %vm26, %v322
  %387 = vst.msk [vmem:[#allocation3 + $0x1d0] sm:$0xff] %vm26, %v323
  %388 = vst.msk [vmem:[#allocation3 + $0x1d8] sm:$0xff] %vm26, %v324
  %389 = vst.msk [vmem:[#allocation3 + $0x1e0] sm:$0xff] %vm26, %v325
  %390 = vst.msk [vmem:[#allocation3 + $0x1e8] sm:$0xff] %vm26, %v326
  %391 = vst.msk [vmem:[#allocation3 + $0x1f0] sm:$0xff] %vm26, %v327
  %392 = vst.msk [vmem:[#allocation3 + $0x1f8] sm:$0xff] %vm26, %v328
  %v393 = vld [vmem:[#allocation2 + $0x1] sm:$0xff]
  %v394 = vld [vmem:[#allocation2 + $0x9] sm:$0xff]
  %v395 = vld [vmem:[#allocation2 + $0x19] sm:$0xff]
  %v396 = vld [vmem:[#allocation2 + $0x21] sm:$0xff]
  %v397 = vld [vmem:[#allocation2 + $0x31] sm:$0xff]
  %v398 = vld [vmem:[#allocation2 + $0x39] sm:$0xff]
  %v399 = vld [vmem:[#allocation2 + $0x49] sm:$0xff]
  %v400 = vld [vmem:[#allocation2 + $0x51] sm:$0xff]
  %v401 = vld [vmem:[#allocation2 + $0x61] sm:$0xff]
  %v402 = vld [vmem:[#allocation2 + $0x69] sm:$0xff]
  %v403 = vld [vmem:[#allocation2 + $0x79] sm:$0xff]
  %v404 = vld [vmem:[#allocation2 + $0x81] sm:$0xff]
  %v405 = vld [vmem:[#allocation2 + $0x91] sm:$0xff]
  %v406 = vld [vmem:[#allocation2 + $0x99] sm:$0xff]
  %v407 = vld [vmem:[#allocation2 + $0xa9] sm:$0xff]
  %v408 = vld [vmem:[#allocation2 + $0xb1] sm:$0xff]
  %v409 = vld [vmem:[#allocation2 + $0xc1] sm:$0xff]
  %v410 = vld [vmem:[#allocation2 + $0xc9] sm:$0xff]
  %v411 = vld [vmem:[#allocation2 + $0xd9] sm:$0xff]
  %v412 = vld [vmem:[#allocation2 + $0xe1] sm:$0xff]
  %v413 = vld [vmem:[#allocation2 + $0xf1] sm:$0xff]
  %v414 = vld [vmem:[#allocation2 + $0xf9] sm:$0xff]
  %v415 = vld [vmem:[#allocation2 + $0x109] sm:$0xff]
  %v416 = vld [vmem:[#allocation2 + $0x111] sm:$0xff]
  %v417 = vld [vmem:[#allocation2 + $0x121] sm:$0xff]
  %v418 = vld [vmem:[#allocation2 + $0x129] sm:$0xff]
  %v419 = vld [vmem:[#allocation2 + $0x139] sm:$0xff]
  %v420 = vld [vmem:[#allocation2 + $0x141] sm:$0xff]
  %v421 = vld [vmem:[#allocation2 + $0x151] sm:$0xff]
  %v422 = vld [vmem:[#allocation2 + $0x159] sm:$0xff]
  %v423 = vld [vmem:[#allocation2 + $0x169] sm:$0xff]
  %v424 = vld [vmem:[#allocation2 + $0x171] sm:$0xff]
  %v425 = vld [vmem:[#allocation2 + $0x1b1] sm:$0xff]
  %v426 = vld [vmem:[#allocation2 + $0x1b9] sm:$0xff]
  %v427 = vld [vmem:[#allocation2 + $0x1c9] sm:$0xff]
  %v428 = vld [vmem:[#allocation2 + $0x1d1] sm:$0xff]
  %v429 = vld [vmem:[#allocation2 + $0x1e1] sm:$0xff]
  %v430 = vld [vmem:[#allocation2 + $0x1e9] sm:$0xff]
  %v431 = vld [vmem:[#allocation2 + $0x1f9] sm:$0xff]
  %v432 = vld [vmem:[#allocation2 + $0x201] sm:$0xff]
  %v433 = vld [vmem:[#allocation2 + $0x211] sm:$0xff]
  %v434 = vld [vmem:[#allocation2 + $0x219] sm:$0xff]
  %v435 = vld [vmem:[#allocation2 + $0x229] sm:$0xff]
  %v436 = vld [vmem:[#allocation2 + $0x231] sm:$0xff]
  %v437 = vld [vmem:[#allocation2 + $0x241] sm:$0xff]
  %v438 = vld [vmem:[#allocation2 + $0x249] sm:$0xff]
  %v439 = vld [vmem:[#allocation2 + $0x259] sm:$0xff]
  %v440 = vld [vmem:[#allocation2 + $0x261] sm:$0xff]
  %v441 = vld [vmem:[#allocation2 + $0x271] sm:$0xff]
  %v442 = vld [vmem:[#allocation2 + $0x279] sm:$0xff]
  %v443 = vld [vmem:[#allocation2 + $0x289] sm:$0xff]
  %v444 = vld [vmem:[#allocation2 + $0x291] sm:$0xff]
  %v445 = vld [vmem:[#allocation2 + $0x2a1] sm:$0xff]
  %v446 = vld [vmem:[#allocation2 + $0x2a9] sm:$0xff]
  %v447 = vld [vmem:[#allocation2 + $0x2b9] sm:$0xff]
  %v448 = vld [vmem:[#allocation2 + $0x2c1] sm:$0xff]
  %v449 = vld [vmem:[#allocation2 + $0x2d1] sm:$0xff]
  %v450 = vld [vmem:[#allocation2 + $0x2d9] sm:$0xff]
  %v451 = vld [vmem:[#allocation2 + $0x2e9] sm:$0xff]
  %v452 = vld [vmem:[#allocation2 + $0x2f1] sm:$0xff]
  %v453 = vld [vmem:[#allocation2 + $0x301] sm:$0xff]
  %v454 = vld [vmem:[#allocation2 + $0x309] sm:$0xff]
  %v455 = vld [vmem:[#allocation2 + $0x319] sm:$0xff]
  %v456 = vld [vmem:[#allocation2 + $0x321] sm:$0xff]
  %521 = vrot.lane.b32.xlu0 %v393, 4
  %v522 = vpop.permute.xlu0 %521
  %523 = vrot.lane.b32.xlu0 %v394, 4
  %v524 = vpop.permute.xlu0 %523
  %525 = vrot.lane.b32.xlu0 %v395, 4
  %v526 = vpop.permute.xlu0 %525
  %527 = vrot.lane.b32.xlu0 %v396, 4
  %v528 = vpop.permute.xlu0 %527
  %529 = vrot.lane.b32.xlu0 %v397, 4
  %v530 = vpop.permute.xlu0 %529
  %531 = vrot.lane.b32.xlu0 %v398, 4
  %v532 = vpop.permute.xlu0 %531
  %533 = vrot.lane.b32.xlu0 %v399, 4
  %v534 = vpop.permute.xlu0 %533
  %535 = vrot.lane.b32.xlu0 %v400, 4
  %v536 = vpop.permute.xlu0 %535
  %537 = vrot.lane.b32.xlu0 %v401, 4
  %v538 = vpop.permute.xlu0 %537
  %539 = vrot.lane.b32.xlu0 %v402, 4
  %v540 = vpop.permute.xlu0 %539
  %541 = vrot.lane.b32.xlu0 %v403, 4
  %v542 = vpop.permute.xlu0 %541
  %543 = vrot.lane.b32.xlu0 %v404, 4
  %v544 = vpop.permute.xlu0 %543
  %545 = vrot.lane.b32.xlu0 %v405, 4
  %v546 = vpop.permute.xlu0 %545
  %547 = vrot.lane.b32.xlu0 %v406, 4
  %v548 = vpop.permute.xlu0 %547
  %549 = vrot.lane.b32.xlu0 %v407, 4
  %v550 = vpop.permute.xlu0 %549
  %551 = vrot.lane.b32.xlu0 %v408, 4
  %v552 = vpop.permute.xlu0 %551
  %553 = vrot.lane.b32.xlu0 %v409, 4
  %v554 = vpop.permute.xlu0 %553
  %555 = vrot.lane.b32.xlu0 %v410, 4
  %v556 = vpop.permute.xlu0 %555
  %557 = vrot.lane.b32.xlu0 %v411, 4
  %v558 = vpop.permute.xlu0 %557
  %559 = vrot.lane.b32.xlu0 %v412, 4
  %v560 = vpop.permute.xlu0 %559
  %561 = vrot.lane.b32.xlu0 %v413, 4
  %v562 = vpop.permute.xlu0 %561
  %563 = vrot.lane.b32.xlu0 %v414, 4
  %v564 = vpop.permute.xlu0 %563
  %565 = vrot.lane.b32.xlu0 %v415, 4
  %v566 = vpop.permute.xlu0 %565
  %567 = vrot.lane.b32.xlu0 %v416, 4
  %v568 = vpop.permute.xlu0 %567
  %569 = vrot.lane.b32.xlu0 %v417, 4
  %v570 = vpop.permute.xlu0 %569
  %571 = vrot.lane.b32.xlu0 %v418, 4
  %v572 = vpop.permute.xlu0 %571
  %573 = vrot.lane.b32.xlu0 %v419, 4
  %v574 = vpop.permute.xlu0 %573
  %575 = vrot.lane.b32.xlu0 %v420, 4
  %v576 = vpop.permute.xlu0 %575
  %577 = vrot.lane.b32.xlu0 %v421, 4
  %v578 = vpop.permute.xlu0 %577
  %579 = vrot.lane.b32.xlu0 %v422, 4
  %v580 = vpop.permute.xlu0 %579
  %581 = vrot.lane.b32.xlu0 %v423, 4
  %v582 = vpop.permute.xlu0 %581
  %583 = vrot.lane.b32.xlu0 %v424, 4
  %v584 = vpop.permute.xlu0 %583
  %585 = vrot.lane.b32.xlu0 %v425, 4
  %v586 = vpop.permute.xlu0 %585
  %587 = vrot.lane.b32.xlu0 %v426, 4
  %v588 = vpop.permute.xlu0 %587
  %589 = vrot.lane.b32.xlu0 %v427, 4
  %v590 = vpop.permute.xlu0 %589
  %591 = vrot.lane.b32.xlu0 %v428, 4
  %v592 = vpop.permute.xlu0 %591
  %593 = vrot.lane.b32.xlu0 %v429, 4
  %v594 = vpop.permute.xlu0 %593
  %595 = vrot.lane.b32.xlu0 %v430, 4
  %v596 = vpop.permute.xlu0 %595
  %597 = vrot.lane.b32.xlu0 %v431, 4
  %v598 = vpop.permute.xlu0 %597
  %599 = vrot.lane.b32.xlu0 %v432, 4
  %v600 = vpop.permute.xlu0 %599
  %601 = vrot.lane.b32.xlu0 %v433, 4
  %v602 = vpop.permute.xlu0 %601
  %603 = vrot.lane.b32.xlu0 %v434, 4
  %v604 = vpop.permute.xlu0 %603
  %605 = vrot.lane.b32.xlu0 %v435, 4
  %v606 = vpop.permute.xlu0 %605
  %607 = vrot.lane.b32.xlu0 %v436, 4
  %v608 = vpop.permute.xlu0 %607
  %609 = vrot.lane.b32.xlu0 %v437, 4
  %v610 = vpop.permute.xlu0 %609
  %611 = vrot.lane.b32.xlu0 %v438, 4
  %v612 = vpop.permute.xlu0 %611
  %613 = vrot.lane.b32.xlu0 %v439, 4
  %v614 = vpop.permute.xlu0 %613
  %615 = vrot.lane.b32.xlu0 %v440, 4
  %v616 = vpop.permute.xlu0 %615
  %617 = vrot.lane.b32.xlu0 %v441, 4
  %v618 = vpop.permute.xlu0 %617
  %619 = vrot.lane.b32.xlu0 %v442, 4
  %v620 = vpop.permute.xlu0 %619
  %621 = vrot.lane.b32.xlu0 %v443, 4
  %v622 = vpop.permute.xlu0 %621
  %623 = vrot.lane.b32.xlu0 %v444, 4
  %v624 = vpop.permute.xlu0 %623
  %625 = vrot.lane.b32.xlu0 %v445, 4
  %v626 = vpop.permute.xlu0 %625
  %627 = vrot.lane.b32.xlu0 %v446, 4
  %v628 = vpop.permute.xlu0 %627
  %629 = vrot.lane.b32.xlu0 %v447, 4
  %v630 = vpop.permute.xlu0 %629
  %631 = vrot.lane.b32.xlu0 %v448, 4
  %v632 = vpop.permute.xlu0 %631
  %633 = vrot.lane.b32.xlu0 %v449, 4
  %v634 = vpop.permute.xlu0 %633
  %635 = vrot.lane.b32.xlu0 %v450, 4
  %v636 = vpop.permute.xlu0 %635
  %637 = vrot.lane.b32.xlu0 %v451, 4
  %v638 = vpop.permute.xlu0 %637
  %639 = vrot.lane.b32.xlu0 %v452, 4
  %v640 = vpop.permute.xlu0 %639
  %641 = vrot.lane.b32.xlu0 %v453, 4
  %v642 = vpop.permute.xlu0 %641
  %643 = vrot.lane.b32.xlu0 %v454, 4
  %v644 = vpop.permute.xlu0 %643
  %645 = vrot.lane.b32.xlu0 %v455, 4
  %v646 = vpop.permute.xlu0 %645
  %647 = vrot.lane.b32.xlu0 %v456, 4
  %v648 = vpop.permute.xlu0 %647
  %vm713 = vcmask 64544
  %714 = vst.msk [vmem:[#allocation3] sm:$0xff] %vm713, %v522
  %715 = vst.msk [vmem:[#allocation3 + $0x8] sm:$0xff] %vm713, %v524
  %716 = vst.msk [vmem:[#allocation3 + $0x10] sm:$0xff] %vm713, %v526
  %717 = vst.msk [vmem:[#allocation3 + $0x18] sm:$0xff] %vm713, %v528
  %718 = vst.msk [vmem:[#allocation3 + $0x20] sm:$0xff] %vm713, %v530
  %719 = vst.msk [vmem:[#allocation3 + $0x28] sm:$0xff] %vm713, %v532
  %720 = vst.msk [vmem:[#allocation3 + $0x30] sm:$0xff] %vm713, %v534
  %721 = vst.msk [vmem:[#allocation3 + $0x38] sm:$0xff] %vm713, %v536
  %722 = vst.msk [vmem:[#allocation3 + $0x40] sm:$0xff] %vm713, %v538
  %723 = vst.msk [vmem:[#allocation3 + $0x48] sm:$0xff] %vm713, %v540
  %724 = vst.msk [vmem:[#allocation3 + $0x50] sm:$0xff] %vm713, %v542
  %725 = vst.msk [vmem:[#allocation3 + $0x58] sm:$0xff] %vm713, %v544
  %726 = vst.msk [vmem:[#allocation3 + $0x60] sm:$0xff] %vm713, %v546
  %727 = vst.msk [vmem:[#allocation3 + $0x68] sm:$0xff] %vm713, %v548
  %728 = vst.msk [vmem:[#allocation3 + $0x70] sm:$0xff] %vm713, %v550
  %729 = vst.msk [vmem:[#allocation3 + $0x78] sm:$0xff] %vm713, %v552
  %730 = vst.msk [vmem:[#allocation3 + $0x80] sm:$0xff] %vm713, %v554
  %731 = vst.msk [vmem:[#allocation3 + $0x88] sm:$0xff] %vm713, %v556
  %732 = vst.msk [vmem:[#allocation3 + $0x90] sm:$0xff] %vm713, %v558
  %733 = vst.msk [vmem:[#allocation3 + $0x98] sm:$0xff] %vm713, %v560
  %734 = vst.msk [vmem:[#allocation3 + $0xa0] sm:$0xff] %vm713, %v562
  %735 = vst.msk [vmem:[#allocation3 + $0xa8] sm:$0xff] %vm713, %v564
  %736 = vst.msk [vmem:[#allocation3 + $0xb0] sm:$0xff] %vm713, %v566
  %737 = vst.msk [vmem:[#allocation3 + $0xb8] sm:$0xff] %vm713, %v568
  %738 = vst.msk [vmem:[#allocation3 + $0xc0] sm:$0xff] %vm713, %v570
  %739 = vst.msk [vmem:[#allocation3 + $0xc8] sm:$0xff] %vm713, %v572
  %740 = vst.msk [vmem:[#allocation3 + $0xd0] sm:$0xff] %vm713, %v574
  %741 = vst.msk [vmem:[#allocation3 + $0xd8] sm:$0xff] %vm713, %v576
  %742 = vst.msk [vmem:[#allocation3 + $0xe0] sm:$0xff] %vm713, %v578
  %743 = vst.msk [vmem:[#allocation3 + $0xe8] sm:$0xff] %vm713, %v580
  %744 = vst.msk [vmem:[#allocation3 + $0xf0] sm:$0xff] %vm713, %v582
  %745 = vst.msk [vmem:[#allocation3 + $0xf8] sm:$0xff] %vm713, %v584
  %746 = vst.msk [vmem:[#allocation3 + $0x100] sm:$0xff] %vm713, %v586
  %747 = vst.msk [vmem:[#allocation3 + $0x108] sm:$0xff] %vm713, %v588
  %748 = vst.msk [vmem:[#allocation3 + $0x110] sm:$0xff] %vm713, %v590
  %749 = vst.msk [vmem:[#allocation3 + $0x118] sm:$0xff] %vm713, %v592
  %750 = vst.msk [vmem:[#allocation3 + $0x120] sm:$0xff] %vm713, %v594
  %751 = vst.msk [vmem:[#allocation3 + $0x128] sm:$0xff] %vm713, %v596
  %752 = vst.msk [vmem:[#allocation3 + $0x130] sm:$0xff] %vm713, %v598
  %753 = vst.msk [vmem:[#allocation3 + $0x138] sm:$0xff] %vm713, %v600
  %754 = vst.msk [vmem:[#allocation3 + $0x140] sm:$0xff] %vm713, %v602
  %755 = vst.msk [vmem:[#allocation3 + $0x148] sm:$0xff] %vm713, %v604
  %756 = vst.msk [vmem:[#allocation3 + $0x150] sm:$0xff] %vm713, %v606
  %757 = vst.msk [vmem:[#allocation3 + $0x158] sm:$0xff] %vm713, %v608
  %758 = vst.msk [vmem:[#allocation3 + $0x160] sm:$0xff] %vm713, %v610
  %759 = vst.msk [vmem:[#allocation3 + $0x168] sm:$0xff] %vm713, %v612
  %760 = vst.msk [vmem:[#allocation3 + $0x170] sm:$0xff] %vm713, %v614
  %761 = vst.msk [vmem:[#allocation3 + $0x178] sm:$0xff] %vm713, %v616
  %762 = vst.msk [vmem:[#allocation3 + $0x180] sm:$0xff] %vm713, %v618
  %763 = vst.msk [vmem:[#allocation3 + $0x188] sm:$0xff] %vm713, %v620
  %764 = vst.msk [vmem:[#allocation3 + $0x190] sm:$0xff] %vm713, %v622
  %765 = vst.msk [vmem:[#allocation3 + $0x198] sm:$0xff] %vm713, %v624
  %766 = vst.msk [vmem:[#allocation3 + $0x1a0] sm:$0xff] %vm713, %v626
  %767 = vst.msk [vmem:[#allocation3 + $0x1a8] sm:$0xff] %vm713, %v628
  %768 = vst.msk [vmem:[#allocation3 + $0x1b0] sm:$0xff] %vm713, %v630
  %769 = vst.msk [vmem:[#allocation3 + $0x1b8] sm:$0xff] %vm713, %v632
  %770 = vst.msk [vmem:[#allocation3 + $0x1c0] sm:$0xff] %vm713, %v634
  %771 = vst.msk [vmem:[#allocation3 + $0x1c8] sm:$0xff] %vm713, %v636
  %772 = vst.msk [vmem:[#allocation3 + $0x1d0] sm:$0xff] %vm713, %v638
  %773 = vst.msk [vmem:[#allocation3 + $0x1d8] sm:$0xff] %vm713, %v640
  %774 = vst.msk [vmem:[#allocation3 + $0x1e0] sm:$0xff] %vm713, %v642
  %775 = vst.msk [vmem:[#allocation3 + $0x1e8] sm:$0xff] %vm713, %v644
  %776 = vst.msk [vmem:[#allocation3 + $0x1f0] sm:$0xff] %vm713, %v646
  %777 = vst.msk [vmem:[#allocation3 + $0x1f8] sm:$0xff] %vm713, %v648
  %v778 = vld [vmem:[#allocation2 + $0x2] sm:$0xff]
  %v779 = vld [vmem:[#allocation2 + $0xa] sm:$0xff]
  %v780 = vld [vmem:[#allocation2 + $0x1a] sm:$0xff]
  %v781 = vld [vmem:[#allocation2 + $0x22] sm:$0xff]
  %v782 = vld [vmem:[#allocation2 + $0x32] sm:$0xff]
  %v783 = vld [vmem:[#allocation2 + $0x3a] sm:$0xff]
  %v784 = vld [vmem:[#allocation2 + $0x4a] sm:$0xff]
  %v785 = vld [vmem:[#allocation2 + $0x52] sm:$0xff]
  %v786 = vld [vmem:[#allocation2 + $0x62] sm:$0xff]
  %v787 = vld [vmem:[#allocation2 + $0x6a] sm:$0xff]
  %v788 = vld [vmem:[#allocation2 + $0x7a] sm:$0xff]
  %v789 = vld [vmem:[#allocation2 + $0x82] sm:$0xff]
  %v790 = vld [vmem:[#allocation2 + $0x92] sm:$0xff]
  %v791 = vld [vmem:[#allocation2 + $0x9a] sm:$0xff]
  %v792 = vld [vmem:[#allocation2 + $0xaa] sm:$0xff]
  %v793 = vld [vmem:[#allocation2 + $0xb2] sm:$0xff]
  %v794 = vld [vmem:[#allocation2 + $0xc2] sm:$0xff]
  %v795 = vld [vmem:[#allocation2 + $0xca] sm:$0xff]
  %v796 = vld [vmem:[#allocation2 + $0xda] sm:$0xff]
  %v797 = vld [vmem:[#allocation2 + $0xe2] sm:$0xff]
  %v798 = vld [vmem:[#allocation2 + $0xf2] sm:$0xff]
  %v799 = vld [vmem:[#allocation2 + $0xfa] sm:$0xff]
  %v800 = vld [vmem:[#allocation2 + $0x10a] sm:$0xff]
  %v801 = vld [vmem:[#allocation2 + $0x112] sm:$0xff]
  %v802 = vld [vmem:[#allocation2 + $0x122] sm:$0xff]
  %v803 = vld [vmem:[#allocation2 + $0x12a] sm:$0xff]
  %v804 = vld [vmem:[#allocation2 + $0x13a] sm:$0xff]
  %v805 = vld [vmem:[#allocation2 + $0x142] sm:$0xff]
  %v806 = vld [vmem:[#allocation2 + $0x152] sm:$0xff]
  %v807 = vld [vmem:[#allocation2 + $0x15a] sm:$0xff]
  %v808 = vld [vmem:[#allocation2 + $0x16a] sm:$0xff]
  %v809 = vld [vmem:[#allocation2 + $0x172] sm:$0xff]
  %v810 = vld [vmem:[#allocation2 + $0x1b2] sm:$0xff]
  %v811 = vld [vmem:[#allocation2 + $0x1ba] sm:$0xff]
  %v812 = vld [vmem:[#allocation2 + $0x1ca] sm:$0xff]
  %v813 = vld [vmem:[#allocation2 + $0x1d2] sm:$0xff]
  %v814 = vld [vmem:[#allocation2 + $0x1e2] sm:$0xff]
  %v815 = vld [vmem:[#allocation2 + $0x1ea] sm:$0xff]
  %v816 = vld [vmem:[#allocation2 + $0x1fa] sm:$0xff]
  %v817 = vld [vmem:[#allocation2 + $0x202] sm:$0xff]
  %v818 = vld [vmem:[#allocation2 + $0x212] sm:$0xff]
  %v819 = vld [vmem:[#allocation2 + $0x21a] sm:$0xff]
  %v820 = vld [vmem:[#allocation2 + $0x22a] sm:$0xff]
  %v821 = vld [vmem:[#allocation2 + $0x232] sm:$0xff]
  %v822 = vld [vmem:[#allocation2 + $0x242] sm:$0xff]
  %v823 = vld [vmem:[#allocation2 + $0x24a] sm:$0xff]
  %v824 = vld [vmem:[#allocation2 + $0x25a] sm:$0xff]
  %v825 = vld [vmem:[#allocation2 + $0x262] sm:$0xff]
  %v826 = vld [vmem:[#allocation2 + $0x272] sm:$0xff]
  %v827 = vld [vmem:[#allocation2 + $0x27a] sm:$0xff]
  %v828 = vld [vmem:[#allocation2 + $0x28a] sm:$0xff]
  %v829 = vld [vmem:[#allocation2 + $0x292] sm:$0xff]
  %v830 = vld [vmem:[#allocation2 + $0x2a2] sm:$0xff]
  %v831 = vld [vmem:[#allocation2 + $0x2aa] sm:$0xff]
  %v832 = vld [vmem:[#allocation2 + $0x2ba] sm:$0xff]
  %v833 = vld [vmem:[#allocation2 + $0x2c2] sm:$0xff]
  %v834 = vld [vmem:[#allocation2 + $0x2d2] sm:$0xff]
  %v835 = vld [vmem:[#allocation2 + $0x2da] sm:$0xff]
  %v836 = vld [vmem:[#allocation2 + $0x2ea] sm:$0xff]
  %v837 = vld [vmem:[#allocation2 + $0x2f2] sm:$0xff]
  %v838 = vld [vmem:[#allocation2 + $0x302] sm:$0xff]
  %v839 = vld [vmem:[#allocation2 + $0x30a] sm:$0xff]
  %v840 = vld [vmem:[#allocation2 + $0x31a] sm:$0xff]
  %v841 = vld [vmem:[#allocation2 + $0x322] sm:$0xff]
  %906 = vrot.lane.b32.xlu0 %v778, 8
  %v907 = vpop.permute.xlu0 %906
  %908 = vrot.lane.b32.xlu0 %v779, 8
  %v909 = vpop.permute.xlu0 %908
  %910 = vrot.lane.b32.xlu0 %v780, 8
  %v911 = vpop.permute.xlu0 %910
  %912 = vrot.lane.b32.xlu0 %v781, 8
  %v913 = vpop.permute.xlu0 %912
  %914 = vrot.lane.b32.xlu0 %v782, 8
  %v915 = vpop.permute.xlu0 %914
  %916 = vrot.lane.b32.xlu0 %v783, 8
  %v917 = vpop.permute.xlu0 %916
  %918 = vrot.lane.b32.xlu0 %v784, 8
  %v919 = vpop.permute.xlu0 %918
  %920 = vrot.lane.b32.xlu0 %v785, 8
  %v921 = vpop.permute.xlu0 %920
  %922 = vrot.lane.b32.xlu0 %v786, 8
  %v923 = vpop.permute.xlu0 %922
  %924 = vrot.lane.b32.xlu0 %v787, 8
  %v925 = vpop.permute.xlu0 %924
  %926 = vrot.lane.b32.xlu0 %v788, 8
  %v927 = vpop.permute.xlu0 %926
  %928 = vrot.lane.b32.xlu0 %v789, 8
  %v929 = vpop.permute.xlu0 %928
  %930 = vrot.lane.b32.xlu0 %v790, 8
  %v931 = vpop.permute.xlu0 %930
  %932 = vrot.lane.b32.xlu0 %v791, 8
  %v933 = vpop.permute.xlu0 %932
  %934 = vrot.lane.b32.xlu0 %v792, 8
  %v935 = vpop.permute.xlu0 %934
  %936 = vrot.lane.b32.xlu0 %v793, 8
  %v937 = vpop.permute.xlu0 %936
  %938 = vrot.lane.b32.xlu0 %v794, 8
  %v939 = vpop.permute.xlu0 %938
  %940 = vrot.lane.b32.xlu0 %v795, 8
  %v941 = vpop.permute.xlu0 %940
  %942 = vrot.lane.b32.xlu0 %v796, 8
  %v943 = vpop.permute.xlu0 %942
  %944 = vrot.lane.b32.xlu0 %v797, 8
  %v945 = vpop.permute.xlu0 %944
  %946 = vrot.lane.b32.xlu0 %v798, 8
  %v947 = vpop.permute.xlu0 %946
  %948 = vrot.lane.b32.xlu0 %v799, 8
  %v949 = vpop.permute.xlu0 %948
  %950 = vrot.lane.b32.xlu0 %v800, 8
  %v951 = vpop.permute.xlu0 %950
  %952 = vrot.lane.b32.xlu0 %v801, 8
  %v953 = vpop.permute.xlu0 %952
  %954 = vrot.lane.b32.xlu0 %v802, 8
  %v955 = vpop.permute.xlu0 %954
  %956 = vrot.lane.b32.xlu0 %v803, 8
  %v957 = vpop.permute.xlu0 %956
  %958 = vrot.lane.b32.xlu0 %v804, 8
  %v959 = vpop.permute.xlu0 %958
  %960 = vrot.lane.b32.xlu0 %v805, 8
  %v961 = vpop.permute.xlu0 %960
  %962 = vrot.lane.b32.xlu0 %v806, 8
  %v963 = vpop.permute.xlu0 %962
  %964 = vrot.lane.b32.xlu0 %v807, 8
  %v965 = vpop.permute.xlu0 %964
  %966 = vrot.lane.b32.xlu0 %v808, 8
  %v967 = vpop.permute.xlu0 %966
  %968 = vrot.lane.b32.xlu0 %v809, 8
  %v969 = vpop.permute.xlu0 %968
  %970 = vrot.lane.b32.xlu0 %v810, 8
  %v971 = vpop.permute.xlu0 %970
  %972 = vrot.lane.b32.xlu0 %v811, 8
  %v973 = vpop.permute.xlu0 %972
  %974 = vrot.lane.b32.xlu0 %v812, 8
  %v975 = vpop.permute.xlu0 %974
  %976 = vrot.lane.b32.xlu0 %v813, 8
  %v977 = vpop.permute.xlu0 %976
  %978 = vrot.lane.b32.xlu0 %v814, 8
  %v979 = vpop.permute.xlu0 %978
  %980 = vrot.lane.b32.xlu0 %v815, 8
  %v981 = vpop.permute.xlu0 %980
  %982 = vrot.lane.b32.xlu0 %v816, 8
  %v983 = vpop.permute.xlu0 %982
  %984 = vrot.lane.b32.xlu0 %v817, 8
  %v985 = vpop.permute.xlu0 %984
  %986 = vrot.lane.b32.xlu0 %v818, 8
  %v987 = vpop.permute.xlu0 %986
  %988 = vrot.lane.b32.xlu0 %v819, 8
  %v989 = vpop.permute.xlu0 %988
  %990 = vrot.lane.b32.xlu0 %v820, 8
  %v991 = vpop.permute.xlu0 %990
  %992 = vrot.lane.b32.xlu0 %v821, 8
  %v993 = vpop.permute.xlu0 %992
  %994 = vrot.lane.b32.xlu0 %v822, 8
  %v995 = vpop.permute.xlu0 %994
  %996 = vrot.lane.b32.xlu0 %v823, 8
  %v997 = vpop.permute.xlu0 %996
  %998 = vrot.lane.b32.xlu0 %v824, 8
  %v999 = vpop.permute.xlu0 %998
  %1000 = vrot.lane.b32.xlu0 %v825, 8
  %v1001 = vpop.permute.xlu0 %1000
  %1002 = vrot.lane.b32.xlu0 %v826, 8
  %v1003 = vpop.permute.xlu0 %1002
  %1004 = vrot.lane.b32.xlu0 %v827, 8
  %v1005 = vpop.permute.xlu0 %1004
  %1006 = vrot.lane.b32.xlu0 %v828, 8
  %v1007 = vpop.permute.xlu0 %1006
  %1008 = vrot.lane.b32.xlu0 %v829, 8
  %v1009 = vpop.permute.xlu0 %1008
  %1010 = vrot.lane.b32.xlu0 %v830, 8
  %v1011 = vpop.permute.xlu0 %1010
  %1012 = vrot.lane.b32.xlu0 %v831, 8
  %v1013 = vpop.permute.xlu0 %1012
  %1014 = vrot.lane.b32.xlu0 %v832, 8
  %v1015 = vpop.permute.xlu0 %1014
  %1016 = vrot.lane.b32.xlu0 %v833, 8
  %v1017 = vpop.permute.xlu0 %1016
  %1018 = vrot.lane.b32.xlu0 %v834, 8
  %v1019 = vpop.permute.xlu0 %1018
  %1020 = vrot.lane.b32.xlu0 %v835, 8
  %v1021 = vpop.permute.xlu0 %1020
  %1022 = vrot.lane.b32.xlu0 %v836, 8
  %v1023 = vpop.permute.xlu0 %1022
  %1024 = vrot.lane.b32.xlu0 %v837, 8
  %v1025 = vpop.permute.xlu0 %1024
  %1026 = vrot.lane.b32.xlu0 %v838, 8
  %v1027 = vpop.permute.xlu0 %1026
  %1028 = vrot.lane.b32.xlu0 %v839, 8
  %v1029 = vpop.permute.xlu0 %1028
  %1030 = vrot.lane.b32.xlu0 %v840, 8
  %v1031 = vpop.permute.xlu0 %1030
  %1032 = vrot.lane.b32.xlu0 %v841, 8
  %v1033 = vpop.permute.xlu0 %1032
  %vm1098 = vcmask 97344
  %1099 = vst.msk [vmem:[#allocation3] sm:$0xff] %vm1098, %v907
  %1100 = vst.msk [vmem:[#allocation3 + $0x8] sm:$0xff] %vm1098, %v909
  %1101 = vst.msk [vmem:[#allocation3 + $0x10] sm:$0xff] %vm1098, %v911
  %1102 = vst.msk [vmem:[#allocation3 + $0x18] sm:$0xff] %vm1098, %v913
  %1103 = vst.msk [vmem:[#allocation3 + $0x20] sm:$0xff] %vm1098, %v915
  %1104 = vst.msk [vmem:[#allocation3 + $0x28] sm:$0xff] %vm1098, %v917
  %1105 = vst.msk [vmem:[#allocation3 + $0x30] sm:$0xff] %vm1098, %v919
  %1106 = vst.msk [vmem:[#allocation3 + $0x38] sm:$0xff] %vm1098, %v921
  %1107 = vst.msk [vmem:[#allocation3 + $0x40] sm:$0xff] %vm1098, %v923
  %1108 = vst.msk [vmem:[#allocation3 + $0x48] sm:$0xff] %vm1098, %v925
  %1109 = vst.msk [vmem:[#allocation3 + $0x50] sm:$0xff] %vm1098, %v927
  %1110 = vst.msk [vmem:[#allocation3 + $0x58] sm:$0xff] %vm1098, %v929
  %1111 = vst.msk [vmem:[#allocation3 + $0x60] sm:$0xff] %vm1098, %v931
  %1112 = vst.msk [vmem:[#allocation3 + $0x68] sm:$0xff] %vm1098, %v933
  %1113 = vst.msk [vmem:[#allocation3 + $0x70] sm:$0xff] %vm1098, %v935
  %1114 = vst.msk [vmem:[#allocation3 + $0x78] sm:$0xff] %vm1098, %v937
  %1115 = vst.msk [vmem:[#allocation3 + $0x80] sm:$0xff] %vm1098, %v939
  %1116 = vst.msk [vmem:[#allocation3 + $0x88] sm:$0xff] %vm1098, %v941
  %1117 = vst.msk [vmem:[#allocation3 + $0x90] sm:$0xff] %vm1098, %v943
  %1118 = vst.msk [vmem:[#allocation3 + $0x98] sm:$0xff] %vm1098, %v945
  %1119 = vst.msk [vmem:[#allocation3 + $0xa0] sm:$0xff] %vm1098, %v947
  %1120 = vst.msk [vmem:[#allocation3 + $0xa8] sm:$0xff] %vm1098, %v949
  %1121 = vst.msk [vmem:[#allocation3 + $0xb0] sm:$0xff] %vm1098, %v951
  %1122 = vst.msk [vmem:[#allocation3 + $0xb8] sm:$0xff] %vm1098, %v953
  %1123 = vst.msk [vmem:[#allocation3 + $0xc0] sm:$0xff] %vm1098, %v955
  %1124 = vst.msk [vmem:[#allocation3 + $0xc8] sm:$0xff] %vm1098, %v957
  %1125 = vst.msk [vmem:[#allocation3 + $0xd0] sm:$0xff] %vm1098, %v959
  %1126 = vst.msk [vmem:[#allocation3 + $0xd8] sm:$0xff] %vm1098, %v961
  %1127 = vst.msk [vmem:[#allocation3 + $0xe0] sm:$0xff] %vm1098, %v963
  %1128 = vst.msk [vmem:[#allocation3 + $0xe8] sm:$0xff] %vm1098, %v965
  %1129 = vst.msk [vmem:[#allocation3 + $0xf0] sm:$0xff] %vm1098, %v967
  %1130 = vst.msk [vmem:[#allocation3 + $0xf8] sm:$0xff] %vm1098, %v969
  %1131 = vst.msk [vmem:[#allocation3 + $0x100] sm:$0xff] %vm1098, %v971
  %1132 = vst.msk [vmem:[#allocation3 + $0x108] sm:$0xff] %vm1098, %v973
  %1133 = vst.msk [vmem:[#allocation3 + $0x110] sm:$0xff] %vm1098, %v975
  %1134 = vst.msk [vmem:[#allocation3 + $0x118] sm:$0xff] %vm1098, %v977
  %1135 = vst.msk [vmem:[#allocation3 + $0x120] sm:$0xff] %vm1098, %v979
  %1136 = vst.msk [vmem:[#allocation3 + $0x128] sm:$0xff] %vm1098, %v981
  %1137 = vst.msk [vmem:[#allocation3 + $0x130] sm:$0xff] %vm1098, %v983
  %1138 = vst.msk [vmem:[#allocation3 + $0x138] sm:$0xff] %vm1098, %v985
  %1139 = vst.msk [vmem:[#allocation3 + $0x140] sm:$0xff] %vm1098, %v987
  %1140 = vst.msk [vmem:[#allocation3 + $0x148] sm:$0xff] %vm1098, %v989
  %1141 = vst.msk [vmem:[#allocation3 + $0x150] sm:$0xff] %vm1098, %v991
  %1142 = vst.msk [vmem:[#allocation3 + $0x158] sm:$0xff] %vm1098, %v993
  %1143 = vst.msk [vmem:[#allocation3 + $0x160] sm:$0xff] %vm1098, %v995
  %1144 = vst.msk [vmem:[#allocation3 + $0x168] sm:$0xff] %vm1098, %v997
  %1145 = vst.msk [vmem:[#allocation3 + $0x170] sm:$0xff] %vm1098, %v999
  %1146 = vst.msk [vmem:[#allocation3 + $0x178] sm:$0xff] %vm1098, %v1001
  %1147 = vst.msk [vmem:[#allocation3 + $0x180] sm:$0xff] %vm1098, %v1003
  %1148 = vst.msk [vmem:[#allocation3 + $0x188] sm:$0xff] %vm1098, %v1005
  %1149 = vst.msk [vmem:[#allocation3 + $0x190] sm:$0xff] %vm1098, %v1007
  %1150 = vst.msk [vmem:[#allocation3 + $0x198] sm:$0xff] %vm1098, %v1009
  %1151 = vst.msk [vmem:[#allocation3 + $0x1a0] sm:$0xff] %vm1098, %v1011
  %1152 = vst.msk [vmem:[#allocation3 + $0x1a8] sm:$0xff] %vm1098, %v1013
  %1153 = vst.msk [vmem:[#allocation3 + $0x1b0] sm:$0xff] %vm1098, %v1015
  %1154 = vst.msk [vmem:[#allocation3 + $0x1b8] sm:$0xff] %vm1098, %v1017
  %1155 = vst.msk [vmem:[#allocation3 + $0x1c0] sm:$0xff] %vm1098, %v1019
  %1156 = vst.msk [vmem:[#allocation3 + $0x1c8] sm:$0xff] %vm1098, %v1021
  %1157 = vst.msk [vmem:[#allocation3 + $0x1d0] sm:$0xff] %vm1098, %v1023
  %1158 = vst.msk [vmem:[#allocation3 + $0x1d8] sm:$0xff] %vm1098, %v1025
  %1159 = vst.msk [vmem:[#allocation3 + $0x1e0] sm:$0xff] %vm1098, %v1027
  %1160 = vst.msk [vmem:[#allocation3 + $0x1e8] sm:$0xff] %vm1098, %v1029
  %1161 = vst.msk [vmem:[#allocation3 + $0x1f0] sm:$0xff] %vm1098, %v1031
  %1162 = vst.msk [vmem:[#allocation3 + $0x1f8] sm:$0xff] %vm1098, %v1033
  %v1163 = vld [vmem:[%s200] sm:$0xff]
  %v1164 = vld [vmem:[%s200 + $0x8] sm:$0xff]
  %v1165 = vld [vmem:[%s200 + $0x18] sm:$0xff]
  %v1166 = vld [vmem:[%s200 + $0x20] sm:$0xff]
  %v1167 = vld [vmem:[%s200 + $0x30] sm:$0xff]
  %v1168 = vld [vmem:[%s200 + $0x38] sm:$0xff]
  %v1169 = vld [vmem:[%s200 + $0x48] sm:$0xff]
  %v1170 = vld [vmem:[%s200 + $0x50] sm:$0xff]
  %v1171 = vld [vmem:[%s200 + $0x60] sm:$0xff]
  %v1172 = vld [vmem:[%s200 + $0x68] sm:$0xff]
  %v1173 = vld [vmem:[%s200 + $0x78] sm:$0xff]
  %v1174 = vld [vmem:[%s200 + $0x80] sm:$0xff]
  %v1175 = vld [vmem:[%s200 + $0x90] sm:$0xff]
  %v1176 = vld [vmem:[%s200 + $0x98] sm:$0xff]
  %v1177 = vld [vmem:[%s200 + $0xa8] sm:$0xff]
  %v1178 = vld [vmem:[%s200 + $0xb0] sm:$0xff]
  %v1179 = vld [vmem:[%s200 + $0xc0] sm:$0xff]
  %v1180 = vld [vmem:[%s200 + $0xc8] sm:$0xff]
  %v1181 = vld [vmem:[%s200 + $0xd8] sm:$0xff]
  %v1182 = vld [vmem:[%s200 + $0xe0] sm:$0xff]
  %v1183 = vld [vmem:[%s200 + $0xf0] sm:$0xff]
  %v1184 = vld [vmem:[%s200 + $0xf8] sm:$0xff]
  %v1185 = vld [vmem:[%s200 + $0x108] sm:$0xff]
  %v1186 = vld [vmem:[%s200 + $0x110] sm:$0xff]
  %v1187 = vld [vmem:[%s200 + $0x120] sm:$0xff]
  %v1188 = vld [vmem:[%s200 + $0x128] sm:$0xff]
  %v1189 = vld [vmem:[%s200 + $0x138] sm:$0xff]
  %v1190 = vld [vmem:[%s200 + $0x140] sm:$0xff]
  %v1191 = vld [vmem:[%s200 + $0x150] sm:$0xff]
  %v1192 = vld [vmem:[%s200 + $0x158] sm:$0xff]
  %v1193 = vld [vmem:[%s200 + $0x168] sm:$0xff]
  %v1194 = vld [vmem:[%s200 + $0x170] sm:$0xff]
  %v1195 = vld [vmem:[%s200 + $0x1b0] sm:$0xff]
  %v1196 = vld [vmem:[%s200 + $0x1b8] sm:$0xff]
  %v1197 = vld [vmem:[%s200 + $0x1c8] sm:$0xff]
  %v1198 = vld [vmem:[%s200 + $0x1d0] sm:$0xff]
  %v1199 = vld [vmem:[%s200 + $0x1e0] sm:$0xff]
  %v1200 = vld [vmem:[%s200 + $0x1e8] sm:$0xff]
  %v1201 = vld [vmem:[%s200 + $0x1f8] sm:$0xff]
  %v1202 = vld [vmem:[%s200 + $0x200] sm:$0xff]
  %v1203 = vld [vmem:[%s200 + $0x210] sm:$0xff]
  %v1204 = vld [vmem:[%s200 + $0x218] sm:$0xff]
  %v1205 = vld [vmem:[%s200 + $0x228] sm:$0xff]
  %v1206 = vld [vmem:[%s200 + $0x230] sm:$0xff]
  %v1207 = vld [vmem:[%s200 + $0x240] sm:$0xff]
  %v1208 = vld [vmem:[%s200 + $0x248] sm:$0xff]
  %v1209 = vld [vmem:[%s200 + $0x258] sm:$0xff]
  %v1210 = vld [vmem:[%s200 + $0x260] sm:$0xff]
  %v1211 = vld [vmem:[%s200 + $0x270] sm:$0xff]
  %v1212 = vld [vmem:[%s200 + $0x278] sm:$0xff]
  %v1213 = vld [vmem:[%s200 + $0x288] sm:$0xff]
  %v1214 = vld [vmem:[%s200 + $0x290] sm:$0xff]
  %v1215 = vld [vmem:[%s200 + $0x2a0] sm:$0xff]
  %v1216 = vld [vmem:[%s200 + $0x2a8] sm:$0xff]
  %v1217 = vld [vmem:[%s200 + $0x2b8] sm:$0xff]
  %v1218 = vld [vmem:[%s200 + $0x2c0] sm:$0xff]
  %v1219 = vld [vmem:[%s200 + $0x2d0] sm:$0xff]
  %v1220 = vld [vmem:[%s200 + $0x2d8] sm:$0xff]
  %v1221 = vld [vmem:[%s200 + $0x2e8] sm:$0xff]
  %v1222 = vld [vmem:[%s200 + $0x2f0] sm:$0xff]
  %v1223 = vld [vmem:[%s200 + $0x300] sm:$0xff]
  %v1224 = vld [vmem:[%s200 + $0x308] sm:$0xff]
  %v1225 = vld [vmem:[%s200 + $0x318] sm:$0xff]
  %v1226 = vld [vmem:[%s200 + $0x320] sm:$0xff]
  %1291 = vrot.lane.b32.xlu0 %v1163, 12
  %v1292 = vpop.permute.xlu0 %1291
  %1293 = vrot.lane.b32.xlu0 %v1164, 12
  %v1294 = vpop.permute.xlu0 %1293
  %1295 = vrot.lane.b32.xlu0 %v1165, 12
  %v1296 = vpop.permute.xlu0 %1295
  %1297 = vrot.lane.b32.xlu0 %v1166, 12
  %v1298 = vpop.permute.xlu0 %1297
  %1299 = vrot.lane.b32.xlu0 %v1167, 12
  %v1300 = vpop.permute.xlu0 %1299
  %1301 = vrot.lane.b32.xlu0 %v1168, 12
  %v1302 = vpop.permute.xlu0 %1301
  %1303 = vrot.lane.b32.xlu0 %v1169, 12
  %v1304 = vpop.permute.xlu0 %1303
  %1305 = vrot.lane.b32.xlu0 %v1170, 12
  %v1306 = vpop.permute.xlu0 %1305
  %1307 = vrot.lane.b32.xlu0 %v1171, 12
  %v1308 = vpop.permute.xlu0 %1307
  %1309 = vrot.lane.b32.xlu0 %v1172, 12
  %v1310 = vpop.permute.xlu0 %1309
  %1311 = vrot.lane.b32.xlu0 %v1173, 12
  %v1312 = vpop.permute.xlu0 %1311
  %1313 = vrot.lane.b32.xlu0 %v1174, 12
  %v1314 = vpop.permute.xlu0 %1313
  %1315 = vrot.lane.b32.xlu0 %v1175, 12
  %v1316 = vpop.permute.xlu0 %1315
  %1317 = vrot.lane.b32.xlu0 %v1176, 12
  %v1318 = vpop.permute.xlu0 %1317
  %1319 = vrot.lane.b32.xlu0 %v1177, 12
  %v1320 = vpop.permute.xlu0 %1319
  %1321 = vrot.lane.b32.xlu0 %v1178, 12
  %v1322 = vpop.permute.xlu0 %1321
  %1323 = vrot.lane.b32.xlu0 %v1179, 12
  %v1324 = vpop.permute.xlu0 %1323
  %1325 = vrot.lane.b32.xlu0 %v1180, 12
  %v1326 = vpop.permute.xlu0 %1325
  %1327 = vrot.lane.b32.xlu0 %v1181, 12
  %v1328 = vpop.permute.xlu0 %1327
  %1329 = vrot.lane.b32.xlu0 %v1182, 12
  %v1330 = vpop.permute.xlu0 %1329
  %1331 = vrot.lane.b32.xlu0 %v1183, 12
  %v1332 = vpop.permute.xlu0 %1331
  %1333 = vrot.lane.b32.xlu0 %v1184, 12
  %v1334 = vpop.permute.xlu0 %1333
  %1335 = vrot.lane.b32.xlu0 %v1185, 12
  %v1336 = vpop.permute.xlu0 %1335
  %1337 = vrot.lane.b32.xlu0 %v1186, 12
  %v1338 = vpop.permute.xlu0 %1337
  %1339 = vrot.lane.b32.xlu0 %v1187, 12
  %v1340 = vpop.permute.xlu0 %1339
  %1341 = vrot.lane.b32.xlu0 %v1188, 12
  %v1342 = vpop.permute.xlu0 %1341
  %1343 = vrot.lane.b32.xlu0 %v1189, 12
  %v1344 = vpop.permute.xlu0 %1343
  %1345 = vrot.lane.b32.xlu0 %v1190, 12
  %v1346 = vpop.permute.xlu0 %1345
  %1347 = vrot.lane.b32.xlu0 %v1191, 12
  %v1348 = vpop.permute.xlu0 %1347
  %1349 = vrot.lane.b32.xlu0 %v1192, 12
  %v1350 = vpop.permute.xlu0 %1349
  %1351 = vrot.lane.b32.xlu0 %v1193, 12
  %v1352 = vpop.permute.xlu0 %1351
  %1353 = vrot.lane.b32.xlu0 %v1194, 12
  %v1354 = vpop.permute.xlu0 %1353
  %1355 = vrot.lane.b32.xlu0 %v1195, 12
  %v1356 = vpop.permute.xlu0 %1355
  %1357 = vrot.lane.b32.xlu0 %v1196, 12
  %v1358 = vpop.permute.xlu0 %1357
  %1359 = vrot.lane.b32.xlu0 %v1197, 12
  %v1360 = vpop.permute.xlu0 %1359
  %1361 = vrot.lane.b32.xlu0 %v1198, 12
  %v1362 = vpop.permute.xlu0 %1361
  %1363 = vrot.lane.b32.xlu0 %v1199, 12
  %v1364 = vpop.permute.xlu0 %1363
  %1365 = vrot.lane.b32.xlu0 %v1200, 12
  %v1366 = vpop.permute.xlu0 %1365
  %1367 = vrot.lane.b32.xlu0 %v1201, 12
  %v1368 = vpop.permute.xlu0 %1367
  %1369 = vrot.lane.b32.xlu0 %v1202, 12
  %v1370 = vpop.permute.xlu0 %1369
  %1371 = vrot.lane.b32.xlu0 %v1203, 12
  %v1372 = vpop.permute.xlu0 %1371
  %1373 = vrot.lane.b32.xlu0 %v1204, 12
  %v1374 = vpop.permute.xlu0 %1373
  %1375 = vrot.lane.b32.xlu0 %v1205, 12
  %v1376 = vpop.permute.xlu0 %1375
  %1377 = vrot.lane.b32.xlu0 %v1206, 12
  %v1378 = vpop.permute.xlu0 %1377
  %1379 = vrot.lane.b32.xlu0 %v1207, 12
  %v1380 = vpop.permute.xlu0 %1379
  %1381 = vrot.lane.b32.xlu0 %v1208, 12
  %v1382 = vpop.permute.xlu0 %1381
  %1383 = vrot.lane.b32.xlu0 %v1209, 12
  %v1384 = vpop.permute.xlu0 %1383
  %1385 = vrot.lane.b32.xlu0 %v1210, 12
  %v1386 = vpop.permute.xlu0 %1385
  %1387 = vrot.lane.b32.xlu0 %v1211, 12
  %v1388 = vpop.permute.xlu0 %1387
  %1389 = vrot.lane.b32.xlu0 %v1212, 12
  %v1390 = vpop.permute.xlu0 %1389
  %1391 = vrot.lane.b32.xlu0 %v1213, 12
  %v1392 = vpop.permute.xlu0 %1391
  %1393 = vrot.lane.b32.xlu0 %v1214, 12
  %v1394 = vpop.permute.xlu0 %1393
  %1395 = vrot.lane.b32.xlu0 %v1215, 12
  %v1396 = vpop.permute.xlu0 %1395
  %1397 = vrot.lane.b32.xlu0 %v1216, 12
  %v1398 = vpop.permute.xlu0 %1397
  %1399 = vrot.lane.b32.xlu0 %v1217, 12
  %v1400 = vpop.permute.xlu0 %1399
  %1401 = vrot.lane.b32.xlu0 %v1218, 12
  %v1402 = vpop.permute.xlu0 %1401
  %1403 = vrot.lane.b32.xlu0 %v1219, 12
  %v1404 = vpop.permute.xlu0 %1403
  %1405 = vrot.lane.b32.xlu0 %v1220, 12
  %v1406 = vpop.permute.xlu0 %1405
  %1407 = vrot.lane.b32.xlu0 %v1221, 12
  %v1408 = vpop.permute.xlu0 %1407
  %1409 = vrot.lane.b32.xlu0 %v1222, 12
  %v1410 = vpop.permute.xlu0 %1409
  %1411 = vrot.lane.b32.xlu0 %v1223, 12
  %v1412 = vpop.permute.xlu0 %1411
  %1413 = vrot.lane.b32.xlu0 %v1224, 12
  %v1414 = vpop.permute.xlu0 %1413
  %1415 = vrot.lane.b32.xlu0 %v1225, 12
  %v1416 = vpop.permute.xlu0 %1415
  %1417 = vrot.lane.b32.xlu0 %v1226, 12
  %v1418 = vpop.permute.xlu0 %1417
  %vm1483 = vcmask 130144
  %1484 = vst.msk [vmem:[#allocation3] sm:$0xff] %vm1483, %v1292
  %1485 = vst.msk [vmem:[#allocation3 + $0x8] sm:$0xff] %vm1483, %v1294
  %1486 = vst.msk [vmem:[#allocation3 + $0x10] sm:$0xff] %vm1483, %v1296
  %1487 = vst.msk [vmem:[#allocation3 + $0x18] sm:$0xff] %vm1483, %v1298
  %1488 = vst.msk [vmem:[#allocation3 + $0x20] sm:$0xff] %vm1483, %v1300
  %1489 = vst.msk [vmem:[#allocation3 + $0x28] sm:$0xff] %vm1483, %v1302
  %1490 = vst.msk [vmem:[#allocation3 + $0x30] sm:$0xff] %vm1483, %v1304
  %1491 = vst.msk [vmem:[#allocation3 + $0x38] sm:$0xff] %vm1483, %v1306
  %1492 = vst.msk [vmem:[#allocation3 + $0x40] sm:$0xff] %vm1483, %v1308
  %1493 = vst.msk [vmem:[#allocation3 + $0x48] sm:$0xff] %vm1483, %v1310
  %1494 = vst.msk [vmem:[#allocation3 + $0x50] sm:$0xff] %vm1483, %v1312
  %1495 = vst.msk [vmem:[#allocation3 + $0x58] sm:$0xff] %vm1483, %v1314
  %1496 = vst.msk [vmem:[#allocation3 + $0x60] sm:$0xff] %vm1483, %v1316
  %1497 = vst.msk [vmem:[#allocation3 + $0x68] sm:$0xff] %vm1483, %v1318
  %1498 = vst.msk [vmem:[#allocation3 + $0x70] sm:$0xff] %vm1483, %v1320
  %1499 = vst.msk [vmem:[#allocation3 + $0x78] sm:$0xff] %vm1483, %v1322
  %1500 = vst.msk [vmem:[#allocation3 + $0x80] sm:$0xff] %vm1483, %v1324
  %1501 = vst.msk [vmem:[#allocation3 + $0x88] sm:$0xff] %vm1483, %v1326
  %1502 = vst.msk [vmem:[#allocation3 + $0x90] sm:$0xff] %vm1483, %v1328
  %1503 = vst.msk [vmem:[#allocation3 + $0x98] sm:$0xff] %vm1483, %v1330
  %1504 = vst.msk [vmem:[#allocation3 + $0xa0] sm:$0xff] %vm1483, %v1332
  %1505 = vst.msk [vmem:[#allocation3 + $0xa8] sm:$0xff] %vm1483, %v1334
  %1506 = vst.msk [vmem:[#allocation3 + $0xb0] sm:$0xff] %vm1483, %v1336
  %1507 = vst.msk [vmem:[#allocation3 + $0xb8] sm:$0xff] %vm1483, %v1338
  %1508 = vst.msk [vmem:[#allocation3 + $0xc0] sm:$0xff] %vm1483, %v1340
  %1509 = vst.msk [vmem:[#allocation3 + $0xc8] sm:$0xff] %vm1483, %v1342
  %1510 = vst.msk [vmem:[#allocation3 + $0xd0] sm:$0xff] %vm1483, %v1344
  %1511 = vst.msk [vmem:[#allocation3 + $0xd8] sm:$0xff] %vm1483, %v1346
  %1512 = vst.msk [vmem:[#allocation3 + $0xe0] sm:$0xff] %vm1483, %v1348
  %1513 = vst.msk [vmem:[#allocation3 + $0xe8] sm:$0xff] %vm1483, %v1350
  %1514 = vst.msk [vmem:[#allocation3 + $0xf0] sm:$0xff] %vm1483, %v1352
  %1515 = vst.msk [vmem:[#allocation3 + $0xf8] sm:$0xff] %vm1483, %v1354
  %1516 = vst.msk [vmem:[#allocation3 + $0x100] sm:$0xff] %vm1483, %v1356
  %1517 = vst.msk [vmem:[#allocation3 + $0x108] sm:$0xff] %vm1483, %v1358
  %1518 = vst.msk [vmem:[#allocation3 + $0x110] sm:$0xff] %vm1483, %v1360
  %1519 = vst.msk [vmem:[#allocation3 + $0x118] sm:$0xff] %vm1483, %v1362
  %1520 = vst.msk [vmem:[#allocation3 + $0x120] sm:$0xff] %vm1483, %v1364
  %1521 = vst.msk [vmem:[#allocation3 + $0x128] sm:$0xff] %vm1483, %v1366
  %1522 = vst.msk [vmem:[#allocation3 + $0x130] sm:$0xff] %vm1483, %v1368
  %1523 = vst.msk [vmem:[#allocation3 + $0x138] sm:$0xff] %vm1483, %v1370
  %1524 = vst.msk [vmem:[#allocation3 + $0x140] sm:$0xff] %vm1483, %v1372
  %1525 = vst.msk [vmem:[#allocation3 + $0x148] sm:$0xff] %vm1483, %v1374
  %1526 = vst.msk [vmem:[#allocation3 + $0x150] sm:$0xff] %vm1483, %v1376
  %1527 = vst.msk [vmem:[#allocation3 + $0x158] sm:$0xff] %vm1483, %v1378
  %1528 = vst.msk [vmem:[#allocation3 + $0x160] sm:$0xff] %vm1483, %v1380
  %1529 = vst.msk [vmem:[#allocation3 + $0x168] sm:$0xff] %vm1483, %v1382
  %1530 = vst.msk [vmem:[#allocation3 + $0x170] sm:$0xff] %vm1483, %v1384
  %1531 = vst.msk [vmem:[#allocation3 + $0x178] sm:$0xff] %vm1483, %v1386
  %1532 = vst.msk [vmem:[#allocation3 + $0x180] sm:$0xff] %vm1483, %v1388
  %1533 = vst.msk [vmem:[#allocation3 + $0x188] sm:$0xff] %vm1483, %v1390
  %1534 = vst.msk [vmem:[#allocation3 + $0x190] sm:$0xff] %vm1483, %v1392
  %1535 = vst.msk [vmem:[#allocation3 + $0x198] sm:$0xff] %vm1483, %v1394
  %1536 = vst.msk [vmem:[#allocation3 + $0x1a0] sm:$0xff] %vm1483, %v1396
  %1537 = vst.msk [vmem:[#allocation3 + $0x1a8] sm:$0xff] %vm1483, %v1398
  %1538 = vst.msk [vmem:[#allocation3 + $0x1b0] sm:$0xff] %vm1483, %v1400
  %1539 = vst.msk [vmem:[#allocation3 + $0x1b8] sm:$0xff] %vm1483, %v1402
  %1540 = vst.msk [vmem:[#allocation3 + $0x1c0] sm:$0xff] %vm1483, %v1404
  %1541 = vst.msk [vmem:[#allocation3 + $0x1c8] sm:$0xff] %vm1483, %v1406
  %1542 = vst.msk [vmem:[#allocation3 + $0x1d0] sm:$0xff] %vm1483, %v1408
  %1543 = vst.msk [vmem:[#allocation3 + $0x1d8] sm:$0xff] %vm1483, %v1410
  %1544 = vst.msk [vmem:[#allocation3 + $0x1e0] sm:$0xff] %vm1483, %v1412
  %1545 = vst.msk [vmem:[#allocation3 + $0x1e8] sm:$0xff] %vm1483, %v1414
  %1546 = vst.msk [vmem:[#allocation3 + $0x1f0] sm:$0xff] %vm1483, %v1416
  %1547 = vst.msk [vmem:[#allocation3 + $0x1f8] sm:$0xff] %vm1483, %v1418
  %v1548 = vld [vmem:[%s200 + $0x1] sm:$0xff]
  %v1549 = vld [vmem:[%s200 + $0x9] sm:$0xff]
  %v1550 = vld [vmem:[%s200 + $0x19] sm:$0xff]
  %v1551 = vld [vmem:[%s200 + $0x21] sm:$0xff]
  %v1552 = vld [vmem:[%s200 + $0x31] sm:$0xff]
  %v1553 = vld [vmem:[%s200 + $0x39] sm:$0xff]
  %v1554 = vld [vmem:[%s200 + $0x49] sm:$0xff]
  %v1555 = vld [vmem:[%s200 + $0x51] sm:$0xff]
  %v1556 = vld [vmem:[%s200 + $0x61] sm:$0xff]
  %v1557 = vld [vmem:[%s200 + $0x69] sm:$0xff]
  %v1558 = vld [vmem:[%s200 + $0x79] sm:$0xff]
  %v1559 = vld [vmem:[%s200 + $0x81] sm:$0xff]
  %v1560 = vld [vmem:[%s200 + $0x91] sm:$0xff]
  %v1561 = vld [vmem:[%s200 + $0x99] sm:$0xff]
  %v1562 = vld [vmem:[%s200 + $0xa9] sm:$0xff]
  %v1563 = vld [vmem:[%s200 + $0xb1] sm:$0xff]
  %v1564 = vld [vmem:[%s200 + $0xc1] sm:$0xff]
  %v1565 = vld [vmem:[%s200 + $0xc9] sm:$0xff]
  %v1566 = vld [vmem:[%s200 + $0xd9] sm:$0xff]
  %v1567 = vld [vmem:[%s200 + $0xe1] sm:$0xff]
  %v1568 = vld [vmem:[%s200 + $0xf1] sm:$0xff]
  %v1569 = vld [vmem:[%s200 + $0xf9] sm:$0xff]
  %v1570 = vld [vmem:[%s200 + $0x109] sm:$0xff]
  %v1571 = vld [vmem:[%s200 + $0x111] sm:$0xff]
  %v1572 = vld [vmem:[%s200 + $0x121] sm:$0xff]
  %v1573 = vld [vmem:[%s200 + $0x129] sm:$0xff]
  %v1574 = vld [vmem:[%s200 + $0x139] sm:$0xff]
  %v1575 = vld [vmem:[%s200 + $0x141] sm:$0xff]
  %v1576 = vld [vmem:[%s200 + $0x151] sm:$0xff]
  %v1577 = vld [vmem:[%s200 + $0x159] sm:$0xff]
  %v1578 = vld [vmem:[%s200 + $0x169] sm:$0xff]
  %v1579 = vld [vmem:[%s200 + $0x171] sm:$0xff]
  %v1580 = vld [vmem:[%s200 + $0x1b1] sm:$0xff]
  %v1581 = vld [vmem:[%s200 + $0x1b9] sm:$0xff]
  %v1582 = vld [vmem:[%s200 + $0x1c9] sm:$0xff]
  %v1583 = vld [vmem:[%s200 + $0x1d1] sm:$0xff]
  %v1584 = vld [vmem:[%s200 + $0x1e1] sm:$0xff]
  %v1585 = vld [vmem:[%s200 + $0x1e9] sm:$0xff]
  %v1586 = vld [vmem:[%s200 + $0x1f9] sm:$0xff]
  %v1587 = vld [vmem:[%s200 + $0x201] sm:$0xff]
  %v1588 = vld [vmem:[%s200 + $0x211] sm:$0xff]
  %v1589 = vld [vmem:[%s200 + $0x219] sm:$0xff]
  %v1590 = vld [vmem:[%s200 + $0x229] sm:$0xff]
  %v1591 = vld [vmem:[%s200 + $0x231] sm:$0xff]
  %v1592 = vld [vmem:[%s200 + $0x241] sm:$0xff]
  %v1593 = vld [vmem:[%s200 + $0x249] sm:$0xff]
  %v1594 = vld [vmem:[%s200 + $0x259] sm:$0xff]
  %v1595 = vld [vmem:[%s200 + $0x261] sm:$0xff]
  %v1596 = vld [vmem:[%s200 + $0x271] sm:$0xff]
  %v1597 = vld [vmem:[%s200 + $0x279] sm:$0xff]
  %v1598 = vld [vmem:[%s200 + $0x289] sm:$0xff]
  %v1599 = vld [vmem:[%s200 + $0x291] sm:$0xff]
  %v1600 = vld [vmem:[%s200 + $0x2a1] sm:$0xff]
  %v1601 = vld [vmem:[%s200 + $0x2a9] sm:$0xff]
  %v1602 = vld [vmem:[%s200 + $0x2b9] sm:$0xff]
  %v1603 = vld [vmem:[%s200 + $0x2c1] sm:$0xff]
  %v1604 = vld [vmem:[%s200 + $0x2d1] sm:$0xff]
  %v1605 = vld [vmem:[%s200 + $0x2d9] sm:$0xff]
  %v1606 = vld [vmem:[%s200 + $0x2e9] sm:$0xff]
  %v1607 = vld [vmem:[%s200 + $0x2f1] sm:$0xff]
  %v1608 = vld [vmem:[%s200 + $0x301] sm:$0xff]
  %v1609 = vld [vmem:[%s200 + $0x309] sm:$0xff]
  %v1610 = vld [vmem:[%s200 + $0x319] sm:$0xff]
  %v1611 = vld [vmem:[%s200 + $0x321] sm:$0xff]
  %1676 = vrot.lane.b32.xlu0 %v1548, 16
  %v1677 = vpop.permute.xlu0 %1676
  %1678 = vrot.lane.b32.xlu0 %v1549, 16
  %v1679 = vpop.permute.xlu0 %1678
  %1680 = vrot.lane.b32.xlu0 %v1550, 16
  %v1681 = vpop.permute.xlu0 %1680
  %1682 = vrot.lane.b32.xlu0 %v1551, 16
  %v1683 = vpop.permute.xlu0 %1682
  %1684 = vrot.lane.b32.xlu0 %v1552, 16
  %v1685 = vpop.permute.xlu0 %1684
  %1686 = vrot.lane.b32.xlu0 %v1553, 16
  %v1687 = vpop.permute.xlu0 %1686
  %1688 = vrot.lane.b32.xlu0 %v1554, 16
  %v1689 = vpop.permute.xlu0 %1688
  %1690 = vrot.lane.b32.xlu0 %v1555, 16
  %v1691 = vpop.permute.xlu0 %1690
  %1692 = vrot.lane.b32.xlu0 %v1556, 16
  %v1693 = vpop.permute.xlu0 %1692
  %1694 = vrot.lane.b32.xlu0 %v1557, 16
  %v1695 = vpop.permute.xlu0 %1694
  %1696 = vrot.lane.b32.xlu0 %v1558, 16
  %v1697 = vpop.permute.xlu0 %1696
  %1698 = vrot.lane.b32.xlu0 %v1559, 16
  %v1699 = vpop.permute.xlu0 %1698
  %1700 = vrot.lane.b32.xlu0 %v1560, 16
  %v1701 = vpop.permute.xlu0 %1700
  %1702 = vrot.lane.b32.xlu0 %v1561, 16
  %v1703 = vpop.permute.xlu0 %1702
  %1704 = vrot.lane.b32.xlu0 %v1562, 16
  %v1705 = vpop.permute.xlu0 %1704
  %1706 = vrot.lane.b32.xlu0 %v1563, 16
  %v1707 = vpop.permute.xlu0 %1706
  %1708 = vrot.lane.b32.xlu0 %v1564, 16
  %v1709 = vpop.permute.xlu0 %1708
  %1710 = vrot.lane.b32.xlu0 %v1565, 16
  %v1711 = vpop.permute.xlu0 %1710
  %1712 = vrot.lane.b32.xlu0 %v1566, 16
  %v1713 = vpop.permute.xlu0 %1712
  %1714 = vrot.lane.b32.xlu0 %v1567, 16
  %v1715 = vpop.permute.xlu0 %1714
  %1716 = vrot.lane.b32.xlu0 %v1568, 16
  %v1717 = vpop.permute.xlu0 %1716
  %1718 = vrot.lane.b32.xlu0 %v1569, 16
  %v1719 = vpop.permute.xlu0 %1718
  %1720 = vrot.lane.b32.xlu0 %v1570, 16
  %v1721 = vpop.permute.xlu0 %1720
  %1722 = vrot.lane.b32.xlu0 %v1571, 16
  %v1723 = vpop.permute.xlu0 %1722
  %1724 = vrot.lane.b32.xlu0 %v1572, 16
  %v1725 = vpop.permute.xlu0 %1724
  %1726 = vrot.lane.b32.xlu0 %v1573, 16
  %v1727 = vpop.permute.xlu0 %1726
  %1728 = vrot.lane.b32.xlu0 %v1574, 16
  %v1729 = vpop.permute.xlu0 %1728
  %1730 = vrot.lane.b32.xlu0 %v1575, 16
  %v1731 = vpop.permute.xlu0 %1730
  %1732 = vrot.lane.b32.xlu0 %v1576, 16
  %v1733 = vpop.permute.xlu0 %1732
  %1734 = vrot.lane.b32.xlu0 %v1577, 16
  %v1735 = vpop.permute.xlu0 %1734
  %1736 = vrot.lane.b32.xlu0 %v1578, 16
  %v1737 = vpop.permute.xlu0 %1736
  %1738 = vrot.lane.b32.xlu0 %v1579, 16
  %v1739 = vpop.permute.xlu0 %1738
  %1740 = vrot.lane.b32.xlu0 %v1580, 16
  %v1741 = vpop.permute.xlu0 %1740
  %1742 = vrot.lane.b32.xlu0 %v1581, 16
  %v1743 = vpop.permute.xlu0 %1742
  %1744 = vrot.lane.b32.xlu0 %v1582, 16
  %v1745 = vpop.permute.xlu0 %1744
  %1746 = vrot.lane.b32.xlu0 %v1583, 16
  %v1747 = vpop.permute.xlu0 %1746
  %1748 = vrot.lane.b32.xlu0 %v1584, 16
  %v1749 = vpop.permute.xlu0 %1748
  %1750 = vrot.lane.b32.xlu0 %v1585, 16
  %v1751 = vpop.permute.xlu0 %1750
  %1752 = vrot.lane.b32.xlu0 %v1586, 16
  %v1753 = vpop.permute.xlu0 %1752
  %1754 = vrot.lane.b32.xlu0 %v1587, 16
  %v1755 = vpop.permute.xlu0 %1754
  %1756 = vrot.lane.b32.xlu0 %v1588, 16
  %v1757 = vpop.permute.xlu0 %1756
  %1758 = vrot.lane.b32.xlu0 %v1589, 16
  %v1759 = vpop.permute.xlu0 %1758
  %1760 = vrot.lane.b32.xlu0 %v1590, 16
  %v1761 = vpop.permute.xlu0 %1760
  %1762 = vrot.lane.b32.xlu0 %v1591, 16
  %v1763 = vpop.permute.xlu0 %1762
  %1764 = vrot.lane.b32.xlu0 %v1592, 16
  %v1765 = vpop.permute.xlu0 %1764
  %1766 = vrot.lane.b32.xlu0 %v1593, 16
  %v1767 = vpop.permute.xlu0 %1766
  %1768 = vrot.lane.b32.xlu0 %v1594, 16
  %v1769 = vpop.permute.xlu0 %1768
  %1770 = vrot.lane.b32.xlu0 %v1595, 16
  %v1771 = vpop.permute.xlu0 %1770
  %1772 = vrot.lane.b32.xlu0 %v1596, 16
  %v1773 = vpop.permute.xlu0 %1772
  %1774 = vrot.lane.b32.xlu0 %v1597, 16
  %v1775 = vpop.permute.xlu0 %1774
  %1776 = vrot.lane.b32.xlu0 %v1598, 16
  %v1777 = vpop.permute.xlu0 %1776
  %1778 = vrot.lane.b32.xlu0 %v1599, 16
  %v1779 = vpop.permute.xlu0 %1778
  %1780 = vrot.lane.b32.xlu0 %v1600, 16
  %v1781 = vpop.permute.xlu0 %1780
  %1782 = vrot.lane.b32.xlu0 %v1601, 16
  %v1783 = vpop.permute.xlu0 %1782
  %1784 = vrot.lane.b32.xlu0 %v1602, 16
  %v1785 = vpop.permute.xlu0 %1784
  %1786 = vrot.lane.b32.xlu0 %v1603, 16
  %v1787 = vpop.permute.xlu0 %1786
  %1788 = vrot.lane.b32.xlu0 %v1604, 16
  %v1789 = vpop.permute.xlu0 %1788
  %1790 = vrot.lane.b32.xlu0 %v1605, 16
  %v1791 = vpop.permute.xlu0 %1790
  %1792 = vrot.lane.b32.xlu0 %v1606, 16
  %v1793 = vpop.permute.xlu0 %1792
  %1794 = vrot.lane.b32.xlu0 %v1607, 16
  %v1795 = vpop.permute.xlu0 %1794
  %1796 = vrot.lane.b32.xlu0 %v1608, 16
  %v1797 = vpop.permute.xlu0 %1796
  %1798 = vrot.lane.b32.xlu0 %v1609, 16
  %v1799 = vpop.permute.xlu0 %1798
  %1800 = vrot.lane.b32.xlu0 %v1610, 16
  %v1801 = vpop.permute.xlu0 %1800
  %1802 = vrot.lane.b32.xlu0 %v1611, 16
  %v1803 = vpop.permute.xlu0 %1802
  %vm1868 = vcmask 162944
  %1869 = vst.msk [vmem:[#allocation3] sm:$0xff] %vm1868, %v1677
  %1870 = vst.msk [vmem:[#allocation3 + $0x8] sm:$0xff] %vm1868, %v1679
  %1871 = vst.msk [vmem:[#allocation3 + $0x10] sm:$0xff] %vm1868, %v1681
  %1872 = vst.msk [vmem:[#allocation3 + $0x18] sm:$0xff] %vm1868, %v1683
  %1873 = vst.msk [vmem:[#allocation3 + $0x20] sm:$0xff] %vm1868, %v1685
  %1874 = vst.msk [vmem:[#allocation3 + $0x28] sm:$0xff] %vm1868, %v1687
  %1875 = vst.msk [vmem:[#allocation3 + $0x30] sm:$0xff] %vm1868, %v1689
  %1876 = vst.msk [vmem:[#allocation3 + $0x38] sm:$0xff] %vm1868, %v1691
  %1877 = vst.msk [vmem:[#allocation3 + $0x40] sm:$0xff] %vm1868, %v1693
  %1878 = vst.msk [vmem:[#allocation3 + $0x48] sm:$0xff] %vm1868, %v1695
  %1879 = vst.msk [vmem:[#allocation3 + $0x50] sm:$0xff] %vm1868, %v1697
  %1880 = vst.msk [vmem:[#allocation3 + $0x58] sm:$0xff] %vm1868, %v1699
  %1881 = vst.msk [vmem:[#allocation3 + $0x60] sm:$0xff] %vm1868, %v1701
  %1882 = vst.msk [vmem:[#allocation3 + $0x68] sm:$0xff] %vm1868, %v1703
  %1883 = vst.msk [vmem:[#allocation3 + $0x70] sm:$0xff] %vm1868, %v1705
  %1884 = vst.msk [vmem:[#allocation3 + $0x78] sm:$0xff] %vm1868, %v1707
  %1885 = vst.msk [vmem:[#allocation3 + $0x80] sm:$0xff] %vm1868, %v1709
  %1886 = vst.msk [vmem:[#allocation3 + $0x88] sm:$0xff] %vm1868, %v1711
  %1887 = vst.msk [vmem:[#allocation3 + $0x90] sm:$0xff] %vm1868, %v1713
  %1888 = vst.msk [vmem:[#allocation3 + $0x98] sm:$0xff] %vm1868, %v1715
  %1889 = vst.msk [vmem:[#allocation3 + $0xa0] sm:$0xff] %vm1868, %v1717
  %1890 = vst.msk [vmem:[#allocation3 + $0xa8] sm:$0xff] %vm1868, %v1719
  %1891 = vst.msk [vmem:[#allocation3 + $0xb0] sm:$0xff] %vm1868, %v1721
  %1892 = vst.msk [vmem:[#allocation3 + $0xb8] sm:$0xff] %vm1868, %v1723
  %1893 = vst.msk [vmem:[#allocation3 + $0xc0] sm:$0xff] %vm1868, %v1725
  %1894 = vst.msk [vmem:[#allocation3 + $0xc8] sm:$0xff] %vm1868, %v1727
  %1895 = vst.msk [vmem:[#allocation3 + $0xd0] sm:$0xff] %vm1868, %v1729
  %1896 = vst.msk [vmem:[#allocation3 + $0xd8] sm:$0xff] %vm1868, %v1731
  %1897 = vst.msk [vmem:[#allocation3 + $0xe0] sm:$0xff] %vm1868, %v1733
  %1898 = vst.msk [vmem:[#allocation3 + $0xe8] sm:$0xff] %vm1868, %v1735
  %1899 = vst.msk [vmem:[#allocation3 + $0xf0] sm:$0xff] %vm1868, %v1737
  %1900 = vst.msk [vmem:[#allocation3 + $0xf8] sm:$0xff] %vm1868, %v1739
  %1901 = vst.msk [vmem:[#allocation3 + $0x100] sm:$0xff] %vm1868, %v1741
  %1902 = vst.msk [vmem:[#allocation3 + $0x108] sm:$0xff] %vm1868, %v1743
  %1903 = vst.msk [vmem:[#allocation3 + $0x110] sm:$0xff] %vm1868, %v1745
  %1904 = vst.msk [vmem:[#allocation3 + $0x118] sm:$0xff] %vm1868, %v1747
  %1905 = vst.msk [vmem:[#allocation3 + $0x120] sm:$0xff] %vm1868, %v1749
  %1906 = vst.msk [vmem:[#allocation3 + $0x128] sm:$0xff] %vm1868, %v1751
  %1907 = vst.msk [vmem:[#allocation3 + $0x130] sm:$0xff] %vm1868, %v1753
  %1908 = vst.msk [vmem:[#allocation3 + $0x138] sm:$0xff] %vm1868, %v1755
  %1909 = vst.msk [vmem:[#allocation3 + $0x140] sm:$0xff] %vm1868, %v1757
  %1910 = vst.msk [vmem:[#allocation3 + $0x148] sm:$0xff] %vm1868, %v1759
  %1911 = vst.msk [vmem:[#allocation3 + $0x150] sm:$0xff] %vm1868, %v1761
  %1912 = vst.msk [vmem:[#allocation3 + $0x158] sm:$0xff] %vm1868, %v1763
  %1913 = vst.msk [vmem:[#allocation3 + $0x160] sm:$0xff] %vm1868, %v1765
  %1914 = vst.msk [vmem:[#allocation3 + $0x168] sm:$0xff] %vm1868, %v1767
  %1915 = vst.msk [vmem:[#allocation3 + $0x170] sm:$0xff] %vm1868, %v1769
  %1916 = vst.msk [vmem:[#allocation3 + $0x178] sm:$0xff] %vm1868, %v1771
  %1917 = vst.msk [vmem:[#allocation3 + $0x180] sm:$0xff] %vm1868, %v1773
  %1918 = vst.msk [vmem:[#allocation3 + $0x188] sm:$0xff] %vm1868, %v1775
  %1919 = vst.msk [vmem:[#allocation3 + $0x190] sm:$0xff] %vm1868, %v1777
  %1920 = vst.msk [vmem:[#allocation3 + $0x198] sm:$0xff] %vm1868, %v1779
  %1921 = vst.msk [vmem:[#allocation3 + $0x1a0] sm:$0xff] %vm1868, %v1781
  %1922 = vst.msk [vmem:[#allocation3 + $0x1a8] sm:$0xff] %vm1868, %v1783
  %1923 = vst.msk [vmem:[#allocation3 + $0x1b0] sm:$0xff] %vm1868, %v1785
  %1924 = vst.msk [vmem:[#allocation3 + $0x1b8] sm:$0xff] %vm1868, %v1787
  %1925 = vst.msk [vmem:[#allocation3 + $0x1c0] sm:$0xff] %vm1868, %v1789
  %1926 = vst.msk [vmem:[#allocation3 + $0x1c8] sm:$0xff] %vm1868, %v1791
  %1927 = vst.msk [vmem:[#allocation3 + $0x1d0] sm:$0xff] %vm1868, %v1793
  %1928 = vst.msk [vmem:[#allocation3 + $0x1d8] sm:$0xff] %vm1868, %v1795
  %1929 = vst.msk [vmem:[#allocation3 + $0x1e0] sm:$0xff] %vm1868, %v1797
  %1930 = vst.msk [vmem:[#allocation3 + $0x1e8] sm:$0xff] %vm1868, %v1799
  %1931 = vst.msk [vmem:[#allocation3 + $0x1f0] sm:$0xff] %vm1868, %v1801
  %1932 = vst.msk [vmem:[#allocation3 + $0x1f8] sm:$0xff] %vm1868, %v1803
  %v1933 = vld [vmem:[%s200 + $0x2] sm:$0xff]
  %v1934 = vld [vmem:[%s200 + $0xa] sm:$0xff]
  %v1935 = vld [vmem:[%s200 + $0x1a] sm:$0xff]
  %v1936 = vld [vmem:[%s200 + $0x22] sm:$0xff]
  %v1937 = vld [vmem:[%s200 + $0x32] sm:$0xff]
  %v1938 = vld [vmem:[%s200 + $0x3a] sm:$0xff]
  %v1939 = vld [vmem:[%s200 + $0x4a] sm:$0xff]
  %v1940 = vld [vmem:[%s200 + $0x52] sm:$0xff]
  %v1941 = vld [vmem:[%s200 + $0x62] sm:$0xff]
  %v1942 = vld [vmem:[%s200 + $0x6a] sm:$0xff]
  %v1943 = vld [vmem:[%s200 + $0x7a] sm:$0xff]
  %v1944 = vld [vmem:[%s200 + $0x82] sm:$0xff]
  %v1945 = vld [vmem:[%s200 + $0x92] sm:$0xff]
  %v1946 = vld [vmem:[%s200 + $0x9a] sm:$0xff]
  %v1947 = vld [vmem:[%s200 + $0xaa] sm:$0xff]
  %v1948 = vld [vmem:[%s200 + $0xb2] sm:$0xff]
  %v1949 = vld [vmem:[%s200 + $0xc2] sm:$0xff]
  %v1950 = vld [vmem:[%s200 + $0xca] sm:$0xff]
  %v1951 = vld [vmem:[%s200 + $0xda] sm:$0xff]
  %v1952 = vld [vmem:[%s200 + $0xe2] sm:$0xff]
  %v1953 = vld [vmem:[%s200 + $0xf2] sm:$0xff]
  %v1954 = vld [vmem:[%s200 + $0xfa] sm:$0xff]
  %v1955 = vld [vmem:[%s200 + $0x10a] sm:$0xff]
  %v1956 = vld [vmem:[%s200 + $0x112] sm:$0xff]
  %v1957 = vld [vmem:[%s200 + $0x122] sm:$0xff]
  %v1958 = vld [vmem:[%s200 + $0x12a] sm:$0xff]
  %v1959 = vld [vmem:[%s200 + $0x13a] sm:$0xff]
  %v1960 = vld [vmem:[%s200 + $0x142] sm:$0xff]
  %v1961 = vld [vmem:[%s200 + $0x152] sm:$0xff]
  %v1962 = vld [vmem:[%s200 + $0x15a] sm:$0xff]
  %v1963 = vld [vmem:[%s200 + $0x16a] sm:$0xff]
  %v1964 = vld [vmem:[%s200 + $0x172] sm:$0xff]
  %v1965 = vld [vmem:[%s200 + $0x1b2] sm:$0xff]
  %v1966 = vld [vmem:[%s200 + $0x1ba] sm:$0xff]
  %v1967 = vld [vmem:[%s200 + $0x1ca] sm:$0xff]
  %v1968 = vld [vmem:[%s200 + $0x1d2] sm:$0xff]
  %v1969 = vld [vmem:[%s200 + $0x1e2] sm:$0xff]
  %v1970 = vld [vmem:[%s200 + $0x1ea] sm:$0xff]
  %v1971 = vld [vmem:[%s200 + $0x1fa] sm:$0xff]
  %v1972 = vld [vmem:[%s200 + $0x202] sm:$0xff]
  %v1973 = vld [vmem:[%s200 + $0x212] sm:$0xff]
  %v1974 = vld [vmem:[%s200 + $0x21a] sm:$0xff]
  %v1975 = vld [vmem:[%s200 + $0x22a] sm:$0xff]
  %v1976 = vld [vmem:[%s200 + $0x232] sm:$0xff]
  %v1977 = vld [vmem:[%s200 + $0x242] sm:$0xff]
  %v1978 = vld [vmem:[%s200 + $0x24a] sm:$0xff]
  %v1979 = vld [vmem:[%s200 + $0x25a] sm:$0xff]
  %v1980 = vld [vmem:[%s200 + $0x262] sm:$0xff]
  %v1981 = vld [vmem:[%s200 + $0x272] sm:$0xff]
  %v1982 = vld [vmem:[%s200 + $0x27a] sm:$0xff]
  %v1983 = vld [vmem:[%s200 + $0x28a] sm:$0xff]
  %v1984 = vld [vmem:[%s200 + $0x292] sm:$0xff]
  %v1985 = vld [vmem:[%s200 + $0x2a2] sm:$0xff]
  %v1986 = vld [vmem:[%s200 + $0x2aa] sm:$0xff]
  %v1987 = vld [vmem:[%s200 + $0x2ba] sm:$0xff]
  %v1988 = vld [vmem:[%s200 + $0x2c2] sm:$0xff]
  %v1989 = vld [vmem:[%s200 + $0x2d2] sm:$0xff]
  %v1990 = vld [vmem:[%s200 + $0x2da] sm:$0xff]
  %v1991 = vld [vmem:[%s200 + $0x2ea] sm:$0xff]
  %v1992 = vld [vmem:[%s200 + $0x2f2] sm:$0xff]
  %v1993 = vld [vmem:[%s200 + $0x302] sm:$0xff]
  %v1994 = vld [vmem:[%s200 + $0x30a] sm:$0xff]
  %v1995 = vld [vmem:[%s200 + $0x31a] sm:$0xff]
  %v1996 = vld [vmem:[%s200 + $0x322] sm:$0xff]
  %2061 = vrot.lane.b32.xlu0 %v1933, 20
  %v2062 = vpop.permute.xlu0 %2061
  %2063 = vrot.lane.b32.xlu0 %v1934, 20
  %v2064 = vpop.permute.xlu0 %2063
  %2065 = vrot.lane.b32.xlu0 %v1935, 20
  %v2066 = vpop.permute.xlu0 %2065
  %2067 = vrot.lane.b32.xlu0 %v1936, 20
  %v2068 = vpop.permute.xlu0 %2067
  %2069 = vrot.lane.b32.xlu0 %v1937, 20
  %v2070 = vpop.permute.xlu0 %2069
  %2071 = vrot.lane.b32.xlu0 %v1938, 20
  %v2072 = vpop.permute.xlu0 %2071
  %2073 = vrot.lane.b32.xlu0 %v1939, 20
  %v2074 = vpop.permute.xlu0 %2073
  %2075 = vrot.lane.b32.xlu0 %v1940, 20
  %v2076 = vpop.permute.xlu0 %2075
  %2077 = vrot.lane.b32.xlu0 %v1941, 20
  %v2078 = vpop.permute.xlu0 %2077
  %2079 = vrot.lane.b32.xlu0 %v1942, 20
  %v2080 = vpop.permute.xlu0 %2079
  %2081 = vrot.lane.b32.xlu0 %v1943, 20
  %v2082 = vpop.permute.xlu0 %2081
  %2083 = vrot.lane.b32.xlu0 %v1944, 20
  %v2084 = vpop.permute.xlu0 %2083
  %2085 = vrot.lane.b32.xlu0 %v1945, 20
  %v2086 = vpop.permute.xlu0 %2085
  %2087 = vrot.lane.b32.xlu0 %v1946, 20
  %v2088 = vpop.permute.xlu0 %2087
  %2089 = vrot.lane.b32.xlu0 %v1947, 20
  %v2090 = vpop.permute.xlu0 %2089
  %2091 = vrot.lane.b32.xlu0 %v1948, 20
  %v2092 = vpop.permute.xlu0 %2091
  %2093 = vrot.lane.b32.xlu0 %v1949, 20
  %v2094 = vpop.permute.xlu0 %2093
  %2095 = vrot.lane.b32.xlu0 %v1950, 20
  %v2096 = vpop.permute.xlu0 %2095
  %2097 = vrot.lane.b32.xlu0 %v1951, 20
  %v2098 = vpop.permute.xlu0 %2097
  %2099 = vrot.lane.b32.xlu0 %v1952, 20
  %v2100 = vpop.permute.xlu0 %2099
  %2101 = vrot.lane.b32.xlu0 %v1953, 20
  %v2102 = vpop.permute.xlu0 %2101
  %2103 = vrot.lane.b32.xlu0 %v1954, 20
  %v2104 = vpop.permute.xlu0 %2103
  %2105 = vrot.lane.b32.xlu0 %v1955, 20
  %v2106 = vpop.permute.xlu0 %2105
  %2107 = vrot.lane.b32.xlu0 %v1956, 20
  %v2108 = vpop.permute.xlu0 %2107
  %2109 = vrot.lane.b32.xlu0 %v1957, 20
  %v2110 = vpop.permute.xlu0 %2109
  %2111 = vrot.lane.b32.xlu0 %v1958, 20
  %v2112 = vpop.permute.xlu0 %2111
  %2113 = vrot.lane.b32.xlu0 %v1959, 20
  %v2114 = vpop.permute.xlu0 %2113
  %2115 = vrot.lane.b32.xlu0 %v1960, 20
  %v2116 = vpop.permute.xlu0 %2115
  %2117 = vrot.lane.b32.xlu0 %v1961, 20
  %v2118 = vpop.permute.xlu0 %2117
  %2119 = vrot.lane.b32.xlu0 %v1962, 20
  %v2120 = vpop.permute.xlu0 %2119
  %2121 = vrot.lane.b32.xlu0 %v1963, 20
  %v2122 = vpop.permute.xlu0 %2121
  %2123 = vrot.lane.b32.xlu0 %v1964, 20
  %v2124 = vpop.permute.xlu0 %2123
  %2125 = vrot.lane.b32.xlu0 %v1965, 20
  %v2126 = vpop.permute.xlu0 %2125
  %2127 = vrot.lane.b32.xlu0 %v1966, 20
  %v2128 = vpop.permute.xlu0 %2127
  %2129 = vrot.lane.b32.xlu0 %v1967, 20
  %v2130 = vpop.permute.xlu0 %2129
  %2131 = vrot.lane.b32.xlu0 %v1968, 20
  %v2132 = vpop.permute.xlu0 %2131
  %2133 = vrot.lane.b32.xlu0 %v1969, 20
  %v2134 = vpop.permute.xlu0 %2133
  %2135 = vrot.lane.b32.xlu0 %v1970, 20
  %v2136 = vpop.permute.xlu0 %2135
  %2137 = vrot.lane.b32.xlu0 %v1971, 20
  %v2138 = vpop.permute.xlu0 %2137
  %2139 = vrot.lane.b32.xlu0 %v1972, 20
  %v2140 = vpop.permute.xlu0 %2139
  %2141 = vrot.lane.b32.xlu0 %v1973, 20
  %v2142 = vpop.permute.xlu0 %2141
  %2143 = vrot.lane.b32.xlu0 %v1974, 20
  %v2144 = vpop.permute.xlu0 %2143
  %2145 = vrot.lane.b32.xlu0 %v1975, 20
  %v2146 = vpop.permute.xlu0 %2145
  %2147 = vrot.lane.b32.xlu0 %v1976, 20
  %v2148 = vpop.permute.xlu0 %2147
  %2149 = vrot.lane.b32.xlu0 %v1977, 20
  %v2150 = vpop.permute.xlu0 %2149
  %2151 = vrot.lane.b32.xlu0 %v1978, 20
  %v2152 = vpop.permute.xlu0 %2151
  %2153 = vrot.lane.b32.xlu0 %v1979, 20
  %v2154 = vpop.permute.xlu0 %2153
  %2155 = vrot.lane.b32.xlu0 %v1980, 20
  %v2156 = vpop.permute.xlu0 %2155
  %2157 = vrot.lane.b32.xlu0 %v1981, 20
  %v2158 = vpop.permute.xlu0 %2157
  %2159 = vrot.lane.b32.xlu0 %v1982, 20
  %v2160 = vpop.permute.xlu0 %2159
  %2161 = vrot.lane.b32.xlu0 %v1983, 20
  %v2162 = vpop.permute.xlu0 %2161
  %2163 = vrot.lane.b32.xlu0 %v1984, 20
  %v2164 = vpop.permute.xlu0 %2163
  %2165 = vrot.lane.b32.xlu0 %v1985, 20
  %v2166 = vpop.permute.xlu0 %2165
  %2167 = vrot.lane.b32.xlu0 %v1986, 20
  %v2168 = vpop.permute.xlu0 %2167
  %2169 = vrot.lane.b32.xlu0 %v1987, 20
  %v2170 = vpop.permute.xlu0 %2169
  %2171 = vrot.lane.b32.xlu0 %v1988, 20
  %v2172 = vpop.permute.xlu0 %2171
  %2173 = vrot.lane.b32.xlu0 %v1989, 20
  %v2174 = vpop.permute.xlu0 %2173
  %2175 = vrot.lane.b32.xlu0 %v1990, 20
  %v2176 = vpop.permute.xlu0 %2175
  %2177 = vrot.lane.b32.xlu0 %v1991, 20
  %v2178 = vpop.permute.xlu0 %2177
  %2179 = vrot.lane.b32.xlu0 %v1992, 20
  %v2180 = vpop.permute.xlu0 %2179
  %2181 = vrot.lane.b32.xlu0 %v1993, 20
  %v2182 = vpop.permute.xlu0 %2181
  %2183 = vrot.lane.b32.xlu0 %v1994, 20
  %v2184 = vpop.permute.xlu0 %2183
  %2185 = vrot.lane.b32.xlu0 %v1995, 20
  %v2186 = vpop.permute.xlu0 %2185
  %2187 = vrot.lane.b32.xlu0 %v1996, 20
  %v2188 = vpop.permute.xlu0 %2187
  %vm2253 = vcmask 195744
  %2254 = vst.msk [vmem:[#allocation3] sm:$0xff] %vm2253, %v2062
  %2255 = vst.msk [vmem:[#allocation3 + $0x8] sm:$0xff] %vm2253, %v2064
  %2256 = vst.msk [vmem:[#allocation3 + $0x10] sm:$0xff] %vm2253, %v2066
  %2257 = vst.msk [vmem:[#allocation3 + $0x18] sm:$0xff] %vm2253, %v2068
  %2258 = vst.msk [vmem:[#allocation3 + $0x20] sm:$0xff] %vm2253, %v2070
  %2259 = vst.msk [vmem:[#allocation3 + $0x28] sm:$0xff] %vm2253, %v2072
  %2260 = vst.msk [vmem:[#allocation3 + $0x30] sm:$0xff] %vm2253, %v2074
  %2261 = vst.msk [vmem:[#allocation3 + $0x38] sm:$0xff] %vm2253, %v2076
  %2262 = vst.msk [vmem:[#allocation3 + $0x40] sm:$0xff] %vm2253, %v2078
  %2263 = vst.msk [vmem:[#allocation3 + $0x48] sm:$0xff] %vm2253, %v2080
  %2264 = vst.msk [vmem:[#allocation3 + $0x50] sm:$0xff] %vm2253, %v2082
  %2265 = vst.msk [vmem:[#allocation3 + $0x58] sm:$0xff] %vm2253, %v2084
  %2266 = vst.msk [vmem:[#allocation3 + $0x60] sm:$0xff] %vm2253, %v2086
  %2267 = vst.msk [vmem:[#allocation3 + $0x68] sm:$0xff] %vm2253, %v2088
  %2268 = vst.msk [vmem:[#allocation3 + $0x70] sm:$0xff] %vm2253, %v2090
  %2269 = vst.msk [vmem:[#allocation3 + $0x78] sm:$0xff] %vm2253, %v2092
  %2270 = vst.msk [vmem:[#allocation3 + $0x80] sm:$0xff] %vm2253, %v2094
  %2271 = vst.msk [vmem:[#allocation3 + $0x88] sm:$0xff] %vm2253, %v2096
  %2272 = vst.msk [vmem:[#allocation3 + $0x90] sm:$0xff] %vm2253, %v2098
  %2273 = vst.msk [vmem:[#allocation3 + $0x98] sm:$0xff] %vm2253, %v2100
  %2274 = vst.msk [vmem:[#allocation3 + $0xa0] sm:$0xff] %vm2253, %v2102
  %2275 = vst.msk [vmem:[#allocation3 + $0xa8] sm:$0xff] %vm2253, %v2104
  %2276 = vst.msk [vmem:[#allocation3 + $0xb0] sm:$0xff] %vm2253, %v2106
  %2277 = vst.msk [vmem:[#allocation3 + $0xb8] sm:$0xff] %vm2253, %v2108
  %2278 = vst.msk [vmem:[#allocation3 + $0xc0] sm:$0xff] %vm2253, %v2110
  %2279 = vst.msk [vmem:[#allocation3 + $0xc8] sm:$0xff] %vm2253, %v2112
  %2280 = vst.msk [vmem:[#allocation3 + $0xd0] sm:$0xff] %vm2253, %v2114
  %2281 = vst.msk [vmem:[#allocation3 + $0xd8] sm:$0xff] %vm2253, %v2116
  %2282 = vst.msk [vmem:[#allocation3 + $0xe0] sm:$0xff] %vm2253, %v2118
  %2283 = vst.msk [vmem:[#allocation3 + $0xe8] sm:$0xff] %vm2253, %v2120
  %2284 = vst.msk [vmem:[#allocation3 + $0xf0] sm:$0xff] %vm2253, %v2122
  %2285 = vst.msk [vmem:[#allocation3 + $0xf8] sm:$0xff] %vm2253, %v2124
  %2286 = vst.msk [vmem:[#allocation3 + $0x100] sm:$0xff] %vm2253, %v2126
  %2287 = vst.msk [vmem:[#allocation3 + $0x108] sm:$0xff] %vm2253, %v2128
  %2288 = vst.msk [vmem:[#allocation3 + $0x110] sm:$0xff] %vm2253, %v2130
  %2289 = vst.msk [vmem:[#allocation3 + $0x118] sm:$0xff] %vm2253, %v2132
  %2290 = vst.msk [vmem:[#allocation3 + $0x120] sm:$0xff] %vm2253, %v2134
  %2291 = vst.msk [vmem:[#allocation3 + $0x128] sm:$0xff] %vm2253, %v2136
  %2292 = vst.msk [vmem:[#allocation3 + $0x130] sm:$0xff] %vm2253, %v2138
  %2293 = vst.msk [vmem:[#allocation3 + $0x138] sm:$0xff] %vm2253, %v2140
  %2294 = vst.msk [vmem:[#allocation3 + $0x140] sm:$0xff] %vm2253, %v2142
  %2295 = vst.msk [vmem:[#allocation3 + $0x148] sm:$0xff] %vm2253, %v2144
  %2296 = vst.msk [vmem:[#allocation3 + $0x150] sm:$0xff] %vm2253, %v2146
  %2297 = vst.msk [vmem:[#allocation3 + $0x158] sm:$0xff] %vm2253, %v2148
  %2298 = vst.msk [vmem:[#allocation3 + $0x160] sm:$0xff] %vm2253, %v2150
  %2299 = vst.msk [vmem:[#allocation3 + $0x168] sm:$0xff] %vm2253, %v2152
  %2300 = vst.msk [vmem:[#allocation3 + $0x170] sm:$0xff] %vm2253, %v2154
  %2301 = vst.msk [vmem:[#allocation3 + $0x178] sm:$0xff] %vm2253, %v2156
  %2302 = vst.msk [vmem:[#allocation3 + $0x180] sm:$0xff] %vm2253, %v2158
  %2303 = vst.msk [vmem:[#allocation3 + $0x188] sm:$0xff] %vm2253, %v2160
  %2304 = vst.msk [vmem:[#allocation3 + $0x190] sm:$0xff] %vm2253, %v2162
  %2305 = vst.msk [vmem:[#allocation3 + $0x198] sm:$0xff] %vm2253, %v2164
  %2306 = vst.msk [vmem:[#allocation3 + $0x1a0] sm:$0xff] %vm2253, %v2166
  %2307 = vst.msk [vmem:[#allocation3 + $0x1a8] sm:$0xff] %vm2253, %v2168
  %2308 = vst.msk [vmem:[#allocation3 + $0x1b0] sm:$0xff] %vm2253, %v2170
  %2309 = vst.msk [vmem:[#allocation3 + $0x1b8] sm:$0xff] %vm2253, %v2172
  %2310 = vst.msk [vmem:[#allocation3 + $0x1c0] sm:$0xff] %vm2253, %v2174
  %2311 = vst.msk [vmem:[#allocation3 + $0x1c8] sm:$0xff] %vm2253, %v2176
  %2312 = vst.msk [vmem:[#allocation3 + $0x1d0] sm:$0xff] %vm2253, %v2178
  %2313 = vst.msk [vmem:[#allocation3 + $0x1d8] sm:$0xff] %vm2253, %v2180
  %2314 = vst.msk [vmem:[#allocation3 + $0x1e0] sm:$0xff] %vm2253, %v2182
  %2315 = vst.msk [vmem:[#allocation3 + $0x1e8] sm:$0xff] %vm2253, %v2184
  %2316 = vst.msk [vmem:[#allocation3 + $0x1f0] sm:$0xff] %vm2253, %v2186
  %2317 = vst.msk [vmem:[#allocation3 + $0x1f8] sm:$0xff] %vm2253, %v2188
  %s2318 = scalar_lea.vmem [#allocation2], 48
  %v2319 = vld [vmem:[%s2318] sm:$0xff]
  %v2320 = vld [vmem:[%s2318 + $0x8] sm:$0xff]
  %v2321 = vld [vmem:[%s2318 + $0x18] sm:$0xff]
  %v2322 = vld [vmem:[%s2318 + $0x20] sm:$0xff]
  %v2323 = vld [vmem:[%s2318 + $0x30] sm:$0xff]
  %v2324 = vld [vmem:[%s2318 + $0x38] sm:$0xff]
  %v2325 = vld [vmem:[%s2318 + $0x48] sm:$0xff]
  %v2326 = vld [vmem:[%s2318 + $0x50] sm:$0xff]
  %v2327 = vld [vmem:[%s2318 + $0x60] sm:$0xff]
  %v2328 = vld [vmem:[%s2318 + $0x68] sm:$0xff]
  %v2329 = vld [vmem:[%s2318 + $0x78] sm:$0xff]
  %v2330 = vld [vmem:[%s2318 + $0x80] sm:$0xff]
  %v2331 = vld [vmem:[%s2318 + $0x90] sm:$0xff]
  %v2332 = vld [vmem:[%s2318 + $0x98] sm:$0xff]
  %v2333 = vld [vmem:[%s2318 + $0xa8] sm:$0xff]
  %v2334 = vld [vmem:[%s2318 + $0xb0] sm:$0xff]
  %v2335 = vld [vmem:[%s2318 + $0xc0] sm:$0xff]
  %v2336 = vld [vmem:[%s2318 + $0xc8] sm:$0xff]
  %v2337 = vld [vmem:[%s2318 + $0xd8] sm:$0xff]
  %v2338 = vld [vmem:[%s2318 + $0xe0] sm:$0xff]
  %v2339 = vld [vmem:[%s2318 + $0xf0] sm:$0xff]
  %v2340 = vld [vmem:[%s2318 + $0xf8] sm:$0xff]
  %v2341 = vld [vmem:[%s2318 + $0x108] sm:$0xff]
  %v2342 = vld [vmem:[%s2318 + $0x110] sm:$0xff]
  %v2343 = vld [vmem:[%s2318 + $0x120] sm:$0xff]
  %v2344 = vld [vmem:[%s2318 + $0x128] sm:$0xff]
  %v2345 = vld [vmem:[%s2318 + $0x138] sm:$0xff]
  %v2346 = vld [vmem:[%s2318 + $0x140] sm:$0xff]
  %v2347 = vld [vmem:[%s2318 + $0x150] sm:$0xff]
  %v2348 = vld [vmem:[%s2318 + $0x158] sm:$0xff]
  %v2349 = vld [vmem:[%s2318 + $0x168] sm:$0xff]
  %v2350 = vld [vmem:[%s2318 + $0x170] sm:$0xff]
  %v2351 = vld [vmem:[%s2318 + $0x1b0] sm:$0xff]
  %v2352 = vld [vmem:[%s2318 + $0x1b8] sm:$0xff]
  %v2353 = vld [vmem:[%s2318 + $0x1c8] sm:$0xff]
  %v2354 = vld [vmem:[%s2318 + $0x1d0] sm:$0xff]
  %v2355 = vld [vmem:[%s2318 + $0x1e0] sm:$0xff]
  %v2356 = vld [vmem:[%s2318 + $0x1e8] sm:$0xff]
  %v2357 = vld [vmem:[%s2318 + $0x1f8] sm:$0xff]
  %v2358 = vld [vmem:[%s2318 + $0x200] sm:$0xff]
  %v2359 = vld [vmem:[%s2318 + $0x210] sm:$0xff]
  %v2360 = vld [vmem:[%s2318 + $0x218] sm:$0xff]
  %v2361 = vld [vmem:[%s2318 + $0x228] sm:$0xff]
  %v2362 = vld [vmem:[%s2318 + $0x230] sm:$0xff]
  %v2363 = vld [vmem:[%s2318 + $0x240] sm:$0xff]
  %v2364 = vld [vmem:[%s2318 + $0x248] sm:$0xff]
  %v2365 = vld [vmem:[%s2318 + $0x258] sm:$0xff]
  %v2366 = vld [vmem:[%s2318 + $0x260] sm:$0xff]
  %v2367 = vld [vmem:[%s2318 + $0x270] sm:$0xff]
  %v2368 = vld [vmem:[%s2318 + $0x278] sm:$0xff]
  %v2369 = vld [vmem:[%s2318 + $0x288] sm:$0xff]
  %v2370 = vld [vmem:[%s2318 + $0x290] sm:$0xff]
  %v2371 = vld [vmem:[%s2318 + $0x2a0] sm:$0xff]
  %v2372 = vld [vmem:[%s2318 + $0x2a8] sm:$0xff]
  %v2373 = vld [vmem:[%s2318 + $0x2b8] sm:$0xff]
  %v2374 = vld [vmem:[%s2318 + $0x2c0] sm:$0xff]
  %v2375 = vld [vmem:[%s2318 + $0x2d0] sm:$0xff]
  %v2376 = vld [vmem:[%s2318 + $0x2d8] sm:$0xff]
  %v2377 = vld [vmem:[%s2318 + $0x2e8] sm:$0xff]
  %v2378 = vld [vmem:[%s2318 + $0x2f0] sm:$0xff]
  %v2379 = vld [vmem:[%s2318 + $0x300] sm:$0xff]
  %v2380 = vld [vmem:[%s2318 + $0x308] sm:$0xff]
  %v2381 = vld [vmem:[%s2318 + $0x318] sm:$0xff]
  %v2382 = vld [vmem:[%s2318 + $0x320] sm:$0xff]
  %2447 = vrot.lane.b32.xlu0 %v2319, 24
  %v2448 = vpop.permute.xlu0 %2447
  %2449 = vrot.lane.b32.xlu0 %v2320, 24
  %v2450 = vpop.permute.xlu0 %2449
  %2451 = vrot.lane.b32.xlu0 %v2321, 24
  %v2452 = vpop.permute.xlu0 %2451
  %2453 = vrot.lane.b32.xlu0 %v2322, 24
  %v2454 = vpop.permute.xlu0 %2453
  %2455 = vrot.lane.b32.xlu0 %v2323, 24
  %v2456 = vpop.permute.xlu0 %2455
  %2457 = vrot.lane.b32.xlu0 %v2324, 24
  %v2458 = vpop.permute.xlu0 %2457
  %2459 = vrot.lane.b32.xlu0 %v2325, 24
  %v2460 = vpop.permute.xlu0 %2459
  %2461 = vrot.lane.b32.xlu0 %v2326, 24
  %v2462 = vpop.permute.xlu0 %2461
  %2463 = vrot.lane.b32.xlu0 %v2327, 24
  %v2464 = vpop.permute.xlu0 %2463
  %2465 = vrot.lane.b32.xlu0 %v2328, 24
  %v2466 = vpop.permute.xlu0 %2465
  %2467 = vrot.lane.b32.xlu0 %v2329, 24
  %v2468 = vpop.permute.xlu0 %2467
  %2469 = vrot.lane.b32.xlu0 %v2330, 24
  %v2470 = vpop.permute.xlu0 %2469
  %2471 = vrot.lane.b32.xlu0 %v2331, 24
  %v2472 = vpop.permute.xlu0 %2471
  %2473 = vrot.lane.b32.xlu0 %v2332, 24
  %v2474 = vpop.permute.xlu0 %2473
  %2475 = vrot.lane.b32.xlu0 %v2333, 24
  %v2476 = vpop.permute.xlu0 %2475
  %2477 = vrot.lane.b32.xlu0 %v2334, 24
  %v2478 = vpop.permute.xlu0 %2477
  %2479 = vrot.lane.b32.xlu0 %v2335, 24
  %v2480 = vpop.permute.xlu0 %2479
  %2481 = vrot.lane.b32.xlu0 %v2336, 24
  %v2482 = vpop.permute.xlu0 %2481
  %2483 = vrot.lane.b32.xlu0 %v2337, 24
  %v2484 = vpop.permute.xlu0 %2483
  %2485 = vrot.lane.b32.xlu0 %v2338, 24
  %v2486 = vpop.permute.xlu0 %2485
  %2487 = vrot.lane.b32.xlu0 %v2339, 24
  %v2488 = vpop.permute.xlu0 %2487
  %2489 = vrot.lane.b32.xlu0 %v2340, 24
  %v2490 = vpop.permute.xlu0 %2489
  %2491 = vrot.lane.b32.xlu0 %v2341, 24
  %v2492 = vpop.permute.xlu0 %2491
  %2493 = vrot.lane.b32.xlu0 %v2342, 24
  %v2494 = vpop.permute.xlu0 %2493
  %2495 = vrot.lane.b32.xlu0 %v2343, 24
  %v2496 = vpop.permute.xlu0 %2495
  %2497 = vrot.lane.b32.xlu0 %v2344, 24
  %v2498 = vpop.permute.xlu0 %2497
  %2499 = vrot.lane.b32.xlu0 %v2345, 24
  %v2500 = vpop.permute.xlu0 %2499
  %2501 = vrot.lane.b32.xlu0 %v2346, 24
  %v2502 = vpop.permute.xlu0 %2501
  %2503 = vrot.lane.b32.xlu0 %v2347, 24
  %v2504 = vpop.permute.xlu0 %2503
  %2505 = vrot.lane.b32.xlu0 %v2348, 24
  %v2506 = vpop.permute.xlu0 %2505
  %2507 = vrot.lane.b32.xlu0 %v2349, 24
  %v2508 = vpop.permute.xlu0 %2507
  %2509 = vrot.lane.b32.xlu0 %v2350, 24
  %v2510 = vpop.permute.xlu0 %2509
  %2511 = vrot.lane.b32.xlu0 %v2351, 24
  %v2512 = vpop.permute.xlu0 %2511
  %2513 = vrot.lane.b32.xlu0 %v2352, 24
  %v2514 = vpop.permute.xlu0 %2513
  %2515 = vrot.lane.b32.xlu0 %v2353, 24
  %v2516 = vpop.permute.xlu0 %2515
  %2517 = vrot.lane.b32.xlu0 %v2354, 24
  %v2518 = vpop.permute.xlu0 %2517
  %2519 = vrot.lane.b32.xlu0 %v2355, 24
  %v2520 = vpop.permute.xlu0 %2519
  %2521 = vrot.lane.b32.xlu0 %v2356, 24
  %v2522 = vpop.permute.xlu0 %2521
  %2523 = vrot.lane.b32.xlu0 %v2357, 24
  %v2524 = vpop.permute.xlu0 %2523
  %2525 = vrot.lane.b32.xlu0 %v2358, 24
  %v2526 = vpop.permute.xlu0 %2525
  %2527 = vrot.lane.b32.xlu0 %v2359, 24
  %v2528 = vpop.permute.xlu0 %2527
  %2529 = vrot.lane.b32.xlu0 %v2360, 24
  %v2530 = vpop.permute.xlu0 %2529
  %2531 = vrot.lane.b32.xlu0 %v2361, 24
  %v2532 = vpop.permute.xlu0 %2531
  %2533 = vrot.lane.b32.xlu0 %v2362, 24
  %v2534 = vpop.permute.xlu0 %2533
  %2535 = vrot.lane.b32.xlu0 %v2363, 24
  %v2536 = vpop.permute.xlu0 %2535
  %2537 = vrot.lane.b32.xlu0 %v2364, 24
  %v2538 = vpop.permute.xlu0 %2537
  %2539 = vrot.lane.b32.xlu0 %v2365, 24
  %v2540 = vpop.permute.xlu0 %2539
  %2541 = vrot.lane.b32.xlu0 %v2366, 24
  %v2542 = vpop.permute.xlu0 %2541
  %2543 = vrot.lane.b32.xlu0 %v2367, 24
  %v2544 = vpop.permute.xlu0 %2543
  %2545 = vrot.lane.b32.xlu0 %v2368, 24
  %v2546 = vpop.permute.xlu0 %2545
  %2547 = vrot.lane.b32.xlu0 %v2369, 24
  %v2548 = vpop.permute.xlu0 %2547
  %2549 = vrot.lane.b32.xlu0 %v2370, 24
  %v2550 = vpop.permute.xlu0 %2549
  %2551 = vrot.lane.b32.xlu0 %v2371, 24
  %v2552 = vpop.permute.xlu0 %2551
  %2553 = vrot.lane.b32.xlu0 %v2372, 24
  %v2554 = vpop.permute.xlu0 %2553
  %2555 = vrot.lane.b32.xlu0 %v2373, 24
  %v2556 = vpop.permute.xlu0 %2555
  %2557 = vrot.lane.b32.xlu0 %v2374, 24
  %v2558 = vpop.permute.xlu0 %2557
  %2559 = vrot.lane.b32.xlu0 %v2375, 24
  %v2560 = vpop.permute.xlu0 %2559
  %2561 = vrot.lane.b32.xlu0 %v2376, 24
  %v2562 = vpop.permute.xlu0 %2561
  %2563 = vrot.lane.b32.xlu0 %v2377, 24
  %v2564 = vpop.permute.xlu0 %2563
  %2565 = vrot.lane.b32.xlu0 %v2378, 24
  %v2566 = vpop.permute.xlu0 %2565
  %2567 = vrot.lane.b32.xlu0 %v2379, 24
  %v2568 = vpop.permute.xlu0 %2567
  %2569 = vrot.lane.b32.xlu0 %v2380, 24
  %v2570 = vpop.permute.xlu0 %2569
  %2571 = vrot.lane.b32.xlu0 %v2381, 24
  %v2572 = vpop.permute.xlu0 %2571
  %2573 = vrot.lane.b32.xlu0 %v2382, 24
  %v2574 = vpop.permute.xlu0 %2573
  %vm2639 = vcmask 228544
  %2640 = vst.msk [vmem:[#allocation3] sm:$0xff] %vm2639, %v2448
  %2641 = vst.msk [vmem:[#allocation3 + $0x8] sm:$0xff] %vm2639, %v2450
  %2642 = vst.msk [vmem:[#allocation3 + $0x10] sm:$0xff] %vm2639, %v2452
  %2643 = vst.msk [vmem:[#allocation3 + $0x18] sm:$0xff] %vm2639, %v2454
  %2644 = vst.msk [vmem:[#allocation3 + $0x20] sm:$0xff] %vm2639, %v2456
  %2645 = vst.msk [vmem:[#allocation3 + $0x28] sm:$0xff] %vm2639, %v2458
  %2646 = vst.msk [vmem:[#allocation3 + $0x30] sm:$0xff] %vm2639, %v2460
  %2647 = vst.msk [vmem:[#allocation3 + $0x38] sm:$0xff] %vm2639, %v2462
  %2648 = vst.msk [vmem:[#allocation3 + $0x40] sm:$0xff] %vm2639, %v2464
  %2649 = vst.msk [vmem:[#allocation3 + $0x48] sm:$0xff] %vm2639, %v2466
  %2650 = vst.msk [vmem:[#allocation3 + $0x50] sm:$0xff] %vm2639, %v2468
  %2651 = vst.msk [vmem:[#allocation3 + $0x58] sm:$0xff] %vm2639, %v2470
  %2652 = vst.msk [vmem:[#allocation3 + $0x60] sm:$0xff] %vm2639, %v2472
  %2653 = vst.msk [vmem:[#allocation3 + $0x68] sm:$0xff] %vm2639, %v2474
  %2654 = vst.msk [vmem:[#allocation3 + $0x70] sm:$0xff] %vm2639, %v2476
  %2655 = vst.msk [vmem:[#allocation3 + $0x78] sm:$0xff] %vm2639, %v2478
  %2656 = vst.msk [vmem:[#allocation3 + $0x80] sm:$0xff] %vm2639, %v2480
  %2657 = vst.msk [vmem:[#allocation3 + $0x88] sm:$0xff] %vm2639, %v2482
  %2658 = vst.msk [vmem:[#allocation3 + $0x90] sm:$0xff] %vm2639, %v2484
  %2659 = vst.msk [vmem:[#allocation3 + $0x98] sm:$0xff] %vm2639, %v2486
  %2660 = vst.msk [vmem:[#allocation3 + $0xa0] sm:$0xff] %vm2639, %v2488
  %2661 = vst.msk [vmem:[#allocation3 + $0xa8] sm:$0xff] %vm2639, %v2490
  %2662 = vst.msk [vmem:[#allocation3 + $0xb0] sm:$0xff] %vm2639, %v2492
  %2663 = vst.msk [vmem:[#allocation3 + $0xb8] sm:$0xff] %vm2639, %v2494
  %2664 = vst.msk [vmem:[#allocation3 + $0xc0] sm:$0xff] %vm2639, %v2496
  %2665 = vst.msk [vmem:[#allocation3 + $0xc8] sm:$0xff] %vm2639, %v2498
  %2666 = vst.msk [vmem:[#allocation3 + $0xd0] sm:$0xff] %vm2639, %v2500
  %2667 = vst.msk [vmem:[#allocation3 + $0xd8] sm:$0xff] %vm2639, %v2502
  %2668 = vst.msk [vmem:[#allocation3 + $0xe0] sm:$0xff] %vm2639, %v2504
  %2669 = vst.msk [vmem:[#allocation3 + $0xe8] sm:$0xff] %vm2639, %v2506
  %2670 = vst.msk [vmem:[#allocation3 + $0xf0] sm:$0xff] %vm2639, %v2508
  %2671 = vst.msk [vmem:[#allocation3 + $0xf8] sm:$0xff] %vm2639, %v2510
  %2672 = vst.msk [vmem:[#allocation3 + $0x100] sm:$0xff] %vm2639, %v2512
  %2673 = vst.msk [vmem:[#allocation3 + $0x108] sm:$0xff] %vm2639, %v2514
  %2674 = vst.msk [vmem:[#allocation3 + $0x110] sm:$0xff] %vm2639, %v2516
  %2675 = vst.msk [vmem:[#allocation3 + $0x118] sm:$0xff] %vm2639, %v2518
  %2676 = vst.msk [vmem:[#allocation3 + $0x120] sm:$0xff] %vm2639, %v2520
  %2677 = vst.msk [vmem:[#allocation3 + $0x128] sm:$0xff] %vm2639, %v2522
  %2678 = vst.msk [vmem:[#allocation3 + $0x130] sm:$0xff] %vm2639, %v2524
  %2679 = vst.msk [vmem:[#allocation3 + $0x138] sm:$0xff] %vm2639, %v2526
  %2680 = vst.msk [vmem:[#allocation3 + $0x140] sm:$0xff] %vm2639, %v2528
  %2681 = vst.msk [vmem:[#allocation3 + $0x148] sm:$0xff] %vm2639, %v2530
  %2682 = vst.msk [vmem:[#allocation3 + $0x150] sm:$0xff] %vm2639, %v2532
  %2683 = vst.msk [vmem:[#allocation3 + $0x158] sm:$0xff] %vm2639, %v2534
  %2684 = vst.msk [vmem:[#allocation3 + $0x160] sm:$0xff] %vm2639, %v2536
  %2685 = vst.msk [vmem:[#allocation3 + $0x168] sm:$0xff] %vm2639, %v2538
  %2686 = vst.msk [vmem:[#allocation3 + $0x170] sm:$0xff] %vm2639, %v2540
  %2687 = vst.msk [vmem:[#allocation3 + $0x178] sm:$0xff] %vm2639, %v2542
  %2688 = vst.msk [vmem:[#allocation3 + $0x180] sm:$0xff] %vm2639, %v2544
  %2689 = vst.msk [vmem:[#allocation3 + $0x188] sm:$0xff] %vm2639, %v2546
  %2690 = vst.msk [vmem:[#allocation3 + $0x190] sm:$0xff] %vm2639, %v2548
  %2691 = vst.msk [vmem:[#allocation3 + $0x198] sm:$0xff] %vm2639, %v2550
  %2692 = vst.msk [vmem:[#allocation3 + $0x1a0] sm:$0xff] %vm2639, %v2552
  %2693 = vst.msk [vmem:[#allocation3 + $0x1a8] sm:$0xff] %vm2639, %v2554
  %2694 = vst.msk [vmem:[#allocation3 + $0x1b0] sm:$0xff] %vm2639, %v2556
  %2695 = vst.msk [vmem:[#allocation3 + $0x1b8] sm:$0xff] %vm2639, %v2558
  %2696 = vst.msk [vmem:[#allocation3 + $0x1c0] sm:$0xff] %vm2639, %v2560
  %2697 = vst.msk [vmem:[#allocation3 + $0x1c8] sm:$0xff] %vm2639, %v2562
  %2698 = vst.msk [vmem:[#allocation3 + $0x1d0] sm:$0xff] %vm2639, %v2564
  %2699 = vst.msk [vmem:[#allocation3 + $0x1d8] sm:$0xff] %vm2639, %v2566
  %2700 = vst.msk [vmem:[#allocation3 + $0x1e0] sm:$0xff] %vm2639, %v2568
  %2701 = vst.msk [vmem:[#allocation3 + $0x1e8] sm:$0xff] %vm2639, %v2570
  %2702 = vst.msk [vmem:[#allocation3 + $0x1f0] sm:$0xff] %vm2639, %v2572
  %2703 = vst.msk [vmem:[#allocation3 + $0x1f8] sm:$0xff] %vm2639, %v2574
  %v2704 = vld [vmem:[%s2318 + $0x1] sm:$0xff]
  %v2705 = vld [vmem:[%s2318 + $0x9] sm:$0xff]
  %v2706 = vld [vmem:[%s2318 + $0x19] sm:$0xff]
  %v2707 = vld [vmem:[%s2318 + $0x21] sm:$0xff]
  %v2708 = vld [vmem:[%s2318 + $0x31] sm:$0xff]
  %v2709 = vld [vmem:[%s2318 + $0x39] sm:$0xff]
  %v2710 = vld [vmem:[%s2318 + $0x49] sm:$0xff]
  %v2711 = vld [vmem:[%s2318 + $0x51] sm:$0xff]
  %v2712 = vld [vmem:[%s2318 + $0x61] sm:$0xff]
  %v2713 = vld [vmem:[%s2318 + $0x69] sm:$0xff]
  %v2714 = vld [vmem:[%s2318 + $0x79] sm:$0xff]
  %v2715 = vld [vmem:[%s2318 + $0x81] sm:$0xff]
  %v2716 = vld [vmem:[%s2318 + $0x91] sm:$0xff]
  %v2717 = vld [vmem:[%s2318 + $0x99] sm:$0xff]
  %v2718 = vld [vmem:[%s2318 + $0xa9] sm:$0xff]
  %v2719 = vld [vmem:[%s2318 + $0xb1] sm:$0xff]
  %v2720 = vld [vmem:[%s2318 + $0xc1] sm:$0xff]
  %v2721 = vld [vmem:[%s2318 + $0xc9] sm:$0xff]
  %v2722 = vld [vmem:[%s2318 + $0xd9] sm:$0xff]
  %v2723 = vld [vmem:[%s2318 + $0xe1] sm:$0xff]
  %v2724 = vld [vmem:[%s2318 + $0xf1] sm:$0xff]
  %v2725 = vld [vmem:[%s2318 + $0xf9] sm:$0xff]
  %v2726 = vld [vmem:[%s2318 + $0x109] sm:$0xff]
  %v2727 = vld [vmem:[%s2318 + $0x111] sm:$0xff]
  %v2728 = vld [vmem:[%s2318 + $0x121] sm:$0xff]
  %v2729 = vld [vmem:[%s2318 + $0x129] sm:$0xff]
  %v2730 = vld [vmem:[%s2318 + $0x139] sm:$0xff]
  %v2731 = vld [vmem:[%s2318 + $0x141] sm:$0xff]
  %v2732 = vld [vmem:[%s2318 + $0x151] sm:$0xff]
  %v2733 = vld [vmem:[%s2318 + $0x159] sm:$0xff]
  %v2734 = vld [vmem:[%s2318 + $0x169] sm:$0xff]
  %v2735 = vld [vmem:[%s2318 + $0x171] sm:$0xff]
  %v2736 = vld [vmem:[%s2318 + $0x1b1] sm:$0xff]
  %v2737 = vld [vmem:[%s2318 + $0x1b9] sm:$0xff]
  %v2738 = vld [vmem:[%s2318 + $0x1c9] sm:$0xff]
  %v2739 = vld [vmem:[%s2318 + $0x1d1] sm:$0xff]
  %v2740 = vld [vmem:[%s2318 + $0x1e1] sm:$0xff]
  %v2741 = vld [vmem:[%s2318 + $0x1e9] sm:$0xff]
  %v2742 = vld [vmem:[%s2318 + $0x1f9] sm:$0xff]
  %v2743 = vld [vmem:[%s2318 + $0x201] sm:$0xff]
  %v2744 = vld [vmem:[%s2318 + $0x211] sm:$0xff]
  %v2745 = vld [vmem:[%s2318 + $0x219] sm:$0xff]
  %v2746 = vld [vmem:[%s2318 + $0x229] sm:$0xff]
  %v2747 = vld [vmem:[%s2318 + $0x231] sm:$0xff]
  %v2748 = vld [vmem:[%s2318 + $0x241] sm:$0xff]
  %v2749 = vld [vmem:[%s2318 + $0x249] sm:$0xff]
  %v2750 = vld [vmem:[%s2318 + $0x259] sm:$0xff]
  %v2751 = vld [vmem:[%s2318 + $0x261] sm:$0xff]
  %v2752 = vld [vmem:[%s2318 + $0x271] sm:$0xff]
  %v2753 = vld [vmem:[%s2318 + $0x279] sm:$0xff]
  %v2754 = vld [vmem:[%s2318 + $0x289] sm:$0xff]
  %v2755 = vld [vmem:[%s2318 + $0x291] sm:$0xff]
  %v2756 = vld [vmem:[%s2318 + $0x2a1] sm:$0xff]
  %v2757 = vld [vmem:[%s2318 + $0x2a9] sm:$0xff]
  %v2758 = vld [vmem:[%s2318 + $0x2b9] sm:$0xff]
  %v2759 = vld [vmem:[%s2318 + $0x2c1] sm:$0xff]
  %v2760 = vld [vmem:[%s2318 + $0x2d1] sm:$0xff]
  %v2761 = vld [vmem:[%s2318 + $0x2d9] sm:$0xff]
  %v2762 = vld [vmem:[%s2318 + $0x2e9] sm:$0xff]
  %v2763 = vld [vmem:[%s2318 + $0x2f1] sm:$0xff]
  %v2764 = vld [vmem:[%s2318 + $0x301] sm:$0xff]
  %v2765 = vld [vmem:[%s2318 + $0x309] sm:$0xff]
  %v2766 = vld [vmem:[%s2318 + $0x319] sm:$0xff]
  %v2767 = vld [vmem:[%s2318 + $0x321] sm:$0xff]
  %2832 = vrot.lane.b32.xlu0 %v2704, 28
  %v2833 = vpop.permute.xlu0 %2832
  %2834 = vrot.lane.b32.xlu0 %v2705, 28
  %v2835 = vpop.permute.xlu0 %2834
  %2836 = vrot.lane.b32.xlu0 %v2706, 28
  %v2837 = vpop.permute.xlu0 %2836
  %2838 = vrot.lane.b32.xlu0 %v2707, 28
  %v2839 = vpop.permute.xlu0 %2838
  %2840 = vrot.lane.b32.xlu0 %v2708, 28
  %v2841 = vpop.permute.xlu0 %2840
  %2842 = vrot.lane.b32.xlu0 %v2709, 28
  %v2843 = vpop.permute.xlu0 %2842
  %2844 = vrot.lane.b32.xlu0 %v2710, 28
  %v2845 = vpop.permute.xlu0 %2844
  %2846 = vrot.lane.b32.xlu0 %v2711, 28
  %v2847 = vpop.permute.xlu0 %2846
  %2848 = vrot.lane.b32.xlu0 %v2712, 28
  %v2849 = vpop.permute.xlu0 %2848
  %2850 = vrot.lane.b32.xlu0 %v2713, 28
  %v2851 = vpop.permute.xlu0 %2850
  %2852 = vrot.lane.b32.xlu0 %v2714, 28
  %v2853 = vpop.permute.xlu0 %2852
  %2854 = vrot.lane.b32.xlu0 %v2715, 28
  %v2855 = vpop.permute.xlu0 %2854
  %2856 = vrot.lane.b32.xlu0 %v2716, 28
  %v2857 = vpop.permute.xlu0 %2856
  %2858 = vrot.lane.b32.xlu0 %v2717, 28
  %v2859 = vpop.permute.xlu0 %2858
  %2860 = vrot.lane.b32.xlu0 %v2718, 28
  %v2861 = vpop.permute.xlu0 %2860
  %2862 = vrot.lane.b32.xlu0 %v2719, 28
  %v2863 = vpop.permute.xlu0 %2862
  %2864 = vrot.lane.b32.xlu0 %v2720, 28
  %v2865 = vpop.permute.xlu0 %2864
  %2866 = vrot.lane.b32.xlu0 %v2721, 28
  %v2867 = vpop.permute.xlu0 %2866
  %2868 = vrot.lane.b32.xlu0 %v2722, 28
  %v2869 = vpop.permute.xlu0 %2868
  %2870 = vrot.lane.b32.xlu0 %v2723, 28
  %v2871 = vpop.permute.xlu0 %2870
  %2872 = vrot.lane.b32.xlu0 %v2724, 28
  %v2873 = vpop.permute.xlu0 %2872
  %2874 = vrot.lane.b32.xlu0 %v2725, 28
  %v2875 = vpop.permute.xlu0 %2874
  %2876 = vrot.lane.b32.xlu0 %v2726, 28
  %v2877 = vpop.permute.xlu0 %2876
  %2878 = vrot.lane.b32.xlu0 %v2727, 28
  %v2879 = vpop.permute.xlu0 %2878
  %2880 = vrot.lane.b32.xlu0 %v2728, 28
  %v2881 = vpop.permute.xlu0 %2880
  %2882 = vrot.lane.b32.xlu0 %v2729, 28
  %v2883 = vpop.permute.xlu0 %2882
  %2884 = vrot.lane.b32.xlu0 %v2730, 28
  %v2885 = vpop.permute.xlu0 %2884
  %2886 = vrot.lane.b32.xlu0 %v2731, 28
  %v2887 = vpop.permute.xlu0 %2886
  %2888 = vrot.lane.b32.xlu0 %v2732, 28
  %v2889 = vpop.permute.xlu0 %2888
  %2890 = vrot.lane.b32.xlu0 %v2733, 28
  %v2891 = vpop.permute.xlu0 %2890
  %2892 = vrot.lane.b32.xlu0 %v2734, 28
  %v2893 = vpop.permute.xlu0 %2892
  %2894 = vrot.lane.b32.xlu0 %v2735, 28
  %v2895 = vpop.permute.xlu0 %2894
  %2896 = vrot.lane.b32.xlu0 %v2736, 28
  %v2897 = vpop.permute.xlu0 %2896
  %2898 = vrot.lane.b32.xlu0 %v2737, 28
  %v2899 = vpop.permute.xlu0 %2898
  %2900 = vrot.lane.b32.xlu0 %v2738, 28
  %v2901 = vpop.permute.xlu0 %2900
  %2902 = vrot.lane.b32.xlu0 %v2739, 28
  %v2903 = vpop.permute.xlu0 %2902
  %2904 = vrot.lane.b32.xlu0 %v2740, 28
  %v2905 = vpop.permute.xlu0 %2904
  %2906 = vrot.lane.b32.xlu0 %v2741, 28
  %v2907 = vpop.permute.xlu0 %2906
  %2908 = vrot.lane.b32.xlu0 %v2742, 28
  %v2909 = vpop.permute.xlu0 %2908
  %2910 = vrot.lane.b32.xlu0 %v2743, 28
  %v2911 = vpop.permute.xlu0 %2910
  %2912 = vrot.lane.b32.xlu0 %v2744, 28
  %v2913 = vpop.permute.xlu0 %2912
  %2914 = vrot.lane.b32.xlu0 %v2745, 28
  %v2915 = vpop.permute.xlu0 %2914
  %2916 = vrot.lane.b32.xlu0 %v2746, 28
  %v2917 = vpop.permute.xlu0 %2916
  %2918 = vrot.lane.b32.xlu0 %v2747, 28
  %v2919 = vpop.permute.xlu0 %2918
  %2920 = vrot.lane.b32.xlu0 %v2748, 28
  %v2921 = vpop.permute.xlu0 %2920
  %2922 = vrot.lane.b32.xlu0 %v2749, 28
  %v2923 = vpop.permute.xlu0 %2922
  %2924 = vrot.lane.b32.xlu0 %v2750, 28
  %v2925 = vpop.permute.xlu0 %2924
  %2926 = vrot.lane.b32.xlu0 %v2751, 28
  %v2927 = vpop.permute.xlu0 %2926
  %2928 = vrot.lane.b32.xlu0 %v2752, 28
  %v2929 = vpop.permute.xlu0 %2928
  %2930 = vrot.lane.b32.xlu0 %v2753, 28
  %v2931 = vpop.permute.xlu0 %2930
  %2932 = vrot.lane.b32.xlu0 %v2754, 28
  %v2933 = vpop.permute.xlu0 %2932
  %2934 = vrot.lane.b32.xlu0 %v2755, 28
  %v2935 = vpop.permute.xlu0 %2934
  %2936 = vrot.lane.b32.xlu0 %v2756, 28
  %v2937 = vpop.permute.xlu0 %2936
  %2938 = vrot.lane.b32.xlu0 %v2757, 28
  %v2939 = vpop.permute.xlu0 %2938
  %2940 = vrot.lane.b32.xlu0 %v2758, 28
  %v2941 = vpop.permute.xlu0 %2940
  %2942 = vrot.lane.b32.xlu0 %v2759, 28
  %v2943 = vpop.permute.xlu0 %2942
  %2944 = vrot.lane.b32.xlu0 %v2760, 28
  %v2945 = vpop.permute.xlu0 %2944
  %2946 = vrot.lane.b32.xlu0 %v2761, 28
  %v2947 = vpop.permute.xlu0 %2946
  %2948 = vrot.lane.b32.xlu0 %v2762, 28
  %v2949 = vpop.permute.xlu0 %2948
  %2950 = vrot.lane.b32.xlu0 %v2763, 28
  %v2951 = vpop.permute.xlu0 %2950
  %2952 = vrot.lane.b32.xlu0 %v2764, 28
  %v2953 = vpop.permute.xlu0 %2952
  %2954 = vrot.lane.b32.xlu0 %v2765, 28
  %v2955 = vpop.permute.xlu0 %2954
  %2956 = vrot.lane.b32.xlu0 %v2766, 28
  %v2957 = vpop.permute.xlu0 %2956
  %2958 = vrot.lane.b32.xlu0 %v2767, 28
  %v2959 = vpop.permute.xlu0 %2958
  %vm3024 = vcmask 261344
  %3025 = vst.msk [vmem:[#allocation3] sm:$0xff] %vm3024, %v2833
  %3026 = vst.msk [vmem:[#allocation3 + $0x8] sm:$0xff] %vm3024, %v2835
  %3027 = vst.msk [vmem:[#allocation3 + $0x10] sm:$0xff] %vm3024, %v2837
  %3028 = vst.msk [vmem:[#allocation3 + $0x18] sm:$0xff] %vm3024, %v2839
  %3029 = vst.msk [vmem:[#allocation3 + $0x20] sm:$0xff] %vm3024, %v2841
  %3030 = vst.msk [vmem:[#allocation3 + $0x28] sm:$0xff] %vm3024, %v2843
  %3031 = vst.msk [vmem:[#allocation3 + $0x30] sm:$0xff] %vm3024, %v2845
  %3032 = vst.msk [vmem:[#allocation3 + $0x38] sm:$0xff] %vm3024, %v2847
  %3033 = vst.msk [vmem:[#allocation3 + $0x40] sm:$0xff] %vm3024, %v2849
  %3034 = vst.msk [vmem:[#allocation3 + $0x48] sm:$0xff] %vm3024, %v2851
  %3035 = vst.msk [vmem:[#allocation3 + $0x50] sm:$0xff] %vm3024, %v2853
  %3036 = vst.msk [vmem:[#allocation3 + $0x58] sm:$0xff] %vm3024, %v2855
  %3037 = vst.msk [vmem:[#allocation3 + $0x60] sm:$0xff] %vm3024, %v2857
  %3038 = vst.msk [vmem:[#allocation3 + $0x68] sm:$0xff] %vm3024, %v2859
  %3039 = vst.msk [vmem:[#allocation3 + $0x70] sm:$0xff] %vm3024, %v2861
  %3040 = vst.msk [vmem:[#allocation3 + $0x78] sm:$0xff] %vm3024, %v2863
  %3041 = vst.msk [vmem:[#allocation3 + $0x80] sm:$0xff] %vm3024, %v2865
  %3042 = vst.msk [vmem:[#allocation3 + $0x88] sm:$0xff] %vm3024, %v2867
  %3043 = vst.msk [vmem:[#allocation3 + $0x90] sm:$0xff] %vm3024, %v2869
  %3044 = vst.msk [vmem:[#allocation3 + $0x98] sm:$0xff] %vm3024, %v2871
  %3045 = vst.msk [vmem:[#allocation3 + $0xa0] sm:$0xff] %vm3024, %v2873
  %3046 = vst.msk [vmem:[#allocation3 + $0xa8] sm:$0xff] %vm3024, %v2875
  %3047 = vst.msk [vmem:[#allocation3 + $0xb0] sm:$0xff] %vm3024, %v2877
  %3048 = vst.msk [vmem:[#allocation3 + $0xb8] sm:$0xff] %vm3024, %v2879
  %3049 = vst.msk [vmem:[#allocation3 + $0xc0] sm:$0xff] %vm3024, %v2881
  %3050 = vst.msk [vmem:[#allocation3 + $0xc8] sm:$0xff] %vm3024, %v2883
  %3051 = vst.msk [vmem:[#allocation3 + $0xd0] sm:$0xff] %vm3024, %v2885
  %3052 = vst.msk [vmem:[#allocation3 + $0xd8] sm:$0xff] %vm3024, %v2887
  %3053 = vst.msk [vmem:[#allocation3 + $0xe0] sm:$0xff] %vm3024, %v2889
  %3054 = vst.msk [vmem:[#allocation3 + $0xe8] sm:$0xff] %vm3024, %v2891
  %3055 = vst.msk [vmem:[#allocation3 + $0xf0] sm:$0xff] %vm3024, %v2893
  %3056 = vst.msk [vmem:[#allocation3 + $0xf8] sm:$0xff] %vm3024, %v2895
  %3057 = vst.msk [vmem:[#allocation3 + $0x100] sm:$0xff] %vm3024, %v2897
  %3058 = vst.msk [vmem:[#allocation3 + $0x108] sm:$0xff] %vm3024, %v2899
  %3059 = vst.msk [vmem:[#allocation3 + $0x110] sm:$0xff] %vm3024, %v2901
  %3060 = vst.msk [vmem:[#allocation3 + $0x118] sm:$0xff] %vm3024, %v2903
  %3061 = vst.msk [vmem:[#allocation3 + $0x120] sm:$0xff] %vm3024, %v2905
  %3062 = vst.msk [vmem:[#allocation3 + $0x128] sm:$0xff] %vm3024, %v2907
  %3063 = vst.msk [vmem:[#allocation3 + $0x130] sm:$0xff] %vm3024, %v2909
  %3064 = vst.msk [vmem:[#allocation3 + $0x138] sm:$0xff] %vm3024, %v2911
  %3065 = vst.msk [vmem:[#allocation3 + $0x140] sm:$0xff] %vm3024, %v2913
  %3066 = vst.msk [vmem:[#allocation3 + $0x148] sm:$0xff] %vm3024, %v2915
  %3067 = vst.msk [vmem:[#allocation3 + $0x150] sm:$0xff] %vm3024, %v2917
  %3068 = vst.msk [vmem:[#allocation3 + $0x158] sm:$0xff] %vm3024, %v2919
  %3069 = vst.msk [vmem:[#allocation3 + $0x160] sm:$0xff] %vm3024, %v2921
  %3070 = vst.msk [vmem:[#allocation3 + $0x168] sm:$0xff] %vm3024, %v2923
  %3071 = vst.msk [vmem:[#allocation3 + $0x170] sm:$0xff] %vm3024, %v2925
  %3072 = vst.msk [vmem:[#allocation3 + $0x178] sm:$0xff] %vm3024, %v2927
  %3073 = vst.msk [vmem:[#allocation3 + $0x180] sm:$0xff] %vm3024, %v2929
  %3074 = vst.msk [vmem:[#allocation3 + $0x188] sm:$0xff] %vm3024, %v2931
  %3075 = vst.msk [vmem:[#allocation3 + $0x190] sm:$0xff] %vm3024, %v2933
  %3076 = vst.msk [vmem:[#allocation3 + $0x198] sm:$0xff] %vm3024, %v2935
  %3077 = vst.msk [vmem:[#allocation3 + $0x1a0] sm:$0xff] %vm3024, %v2937
  %3078 = vst.msk [vmem:[#allocation3 + $0x1a8] sm:$0xff] %vm3024, %v2939
  %3079 = vst.msk [vmem:[#allocation3 + $0x1b0] sm:$0xff] %vm3024, %v2941
  %3080 = vst.msk [vmem:[#allocation3 + $0x1b8] sm:$0xff] %vm3024, %v2943
  %3081 = vst.msk [vmem:[#allocation3 + $0x1c0] sm:$0xff] %vm3024, %v2945
  %3082 = vst.msk [vmem:[#allocation3 + $0x1c8] sm:$0xff] %vm3024, %v2947
  %3083 = vst.msk [vmem:[#allocation3 + $0x1d0] sm:$0xff] %vm3024, %v2949
  %3084 = vst.msk [vmem:[#allocation3 + $0x1d8] sm:$0xff] %vm3024, %v2951
  %3085 = vst.msk [vmem:[#allocation3 + $0x1e0] sm:$0xff] %vm3024, %v2953
  %3086 = vst.msk [vmem:[#allocation3 + $0x1e8] sm:$0xff] %vm3024, %v2955
  %3087 = vst.msk [vmem:[#allocation3 + $0x1f0] sm:$0xff] %vm3024, %v2957
  %3088 = vst.msk [vmem:[#allocation3 + $0x1f8] sm:$0xff] %vm3024, %v2959
  %v3089 = vld [vmem:[%s2318 + $0x2] sm:$0xff]
  %v3090 = vld [vmem:[%s2318 + $0xa] sm:$0xff]
  %v3091 = vld [vmem:[%s2318 + $0x1a] sm:$0xff]
  %v3092 = vld [vmem:[%s2318 + $0x22] sm:$0xff]
  %v3093 = vld [vmem:[%s2318 + $0x32] sm:$0xff]
  %v3094 = vld [vmem:[%s2318 + $0x3a] sm:$0xff]
  %v3095 = vld [vmem:[%s2318 + $0x4a] sm:$0xff]
  %v3096 = vld [vmem:[%s2318 + $0x52] sm:$0xff]
  %v3097 = vld [vmem:[%s2318 + $0x62] sm:$0xff]
  %v3098 = vld [vmem:[%s2318 + $0x6a] sm:$0xff]
  %v3099 = vld [vmem:[%s2318 + $0x7a] sm:$0xff]
  %v3100 = vld [vmem:[%s2318 + $0x82] sm:$0xff]
  %v3101 = vld [vmem:[%s2318 + $0x92] sm:$0xff]
  %v3102 = vld [vmem:[%s2318 + $0x9a] sm:$0xff]
  %v3103 = vld [vmem:[%s2318 + $0xaa] sm:$0xff]
  %v3104 = vld [vmem:[%s2318 + $0xb2] sm:$0xff]
  %v3105 = vld [vmem:[%s2318 + $0xc2] sm:$0xff]
  %v3106 = vld [vmem:[%s2318 + $0xca] sm:$0xff]
  %v3107 = vld [vmem:[%s2318 + $0xda] sm:$0xff]
  %v3108 = vld [vmem:[%s2318 + $0xe2] sm:$0xff]
  %v3109 = vld [vmem:[%s2318 + $0xf2] sm:$0xff]
  %v3110 = vld [vmem:[%s2318 + $0xfa] sm:$0xff]
  %v3111 = vld [vmem:[%s2318 + $0x10a] sm:$0xff]
  %v3112 = vld [vmem:[%s2318 + $0x112] sm:$0xff]
  %v3113 = vld [vmem:[%s2318 + $0x122] sm:$0xff]
  %v3114 = vld [vmem:[%s2318 + $0x12a] sm:$0xff]
  %v3115 = vld [vmem:[%s2318 + $0x13a] sm:$0xff]
  %v3116 = vld [vmem:[%s2318 + $0x142] sm:$0xff]
  %v3117 = vld [vmem:[%s2318 + $0x152] sm:$0xff]
  %v3118 = vld [vmem:[%s2318 + $0x15a] sm:$0xff]
  %v3119 = vld [vmem:[%s2318 + $0x16a] sm:$0xff]
  %v3120 = vld [vmem:[%s2318 + $0x172] sm:$0xff]
  %v3121 = vld [vmem:[%s2318 + $0x1b2] sm:$0xff]
  %v3122 = vld [vmem:[%s2318 + $0x1ba] sm:$0xff]
  %v3123 = vld [vmem:[%s2318 + $0x1ca] sm:$0xff]
  %v3124 = vld [vmem:[%s2318 + $0x1d2] sm:$0xff]
  %v3125 = vld [vmem:[%s2318 + $0x1e2] sm:$0xff]
  %v3126 = vld [vmem:[%s2318 + $0x1ea] sm:$0xff]
  %v3127 = vld [vmem:[%s2318 + $0x1fa] sm:$0xff]
  %v3128 = vld [vmem:[%s2318 + $0x202] sm:$0xff]
  %v3129 = vld [vmem:[%s2318 + $0x212] sm:$0xff]
  %v3130 = vld [vmem:[%s2318 + $0x21a] sm:$0xff]
  %v3131 = vld [vmem:[%s2318 + $0x22a] sm:$0xff]
  %v3132 = vld [vmem:[%s2318 + $0x232] sm:$0xff]
  %v3133 = vld [vmem:[%s2318 + $0x242] sm:$0xff]
  %v3134 = vld [vmem:[%s2318 + $0x24a] sm:$0xff]
  %v3135 = vld [vmem:[%s2318 + $0x25a] sm:$0xff]
  %v3136 = vld [vmem:[%s2318 + $0x262] sm:$0xff]
  %v3137 = vld [vmem:[%s2318 + $0x272] sm:$0xff]
  %v3138 = vld [vmem:[%s2318 + $0x27a] sm:$0xff]
  %v3139 = vld [vmem:[%s2318 + $0x28a] sm:$0xff]
  %v3140 = vld [vmem:[%s2318 + $0x292] sm:$0xff]
  %v3141 = vld [vmem:[%s2318 + $0x2a2] sm:$0xff]
  %v3142 = vld [vmem:[%s2318 + $0x2aa] sm:$0xff]
  %v3143 = vld [vmem:[%s2318 + $0x2ba] sm:$0xff]
  %v3144 = vld [vmem:[%s2318 + $0x2c2] sm:$0xff]
  %v3145 = vld [vmem:[%s2318 + $0x2d2] sm:$0xff]
  %v3146 = vld [vmem:[%s2318 + $0x2da] sm:$0xff]
  %v3147 = vld [vmem:[%s2318 + $0x2ea] sm:$0xff]
  %v3148 = vld [vmem:[%s2318 + $0x2f2] sm:$0xff]
  %v3149 = vld [vmem:[%s2318 + $0x302] sm:$0xff]
  %v3150 = vld [vmem:[%s2318 + $0x30a] sm:$0xff]
  %v3151 = vld [vmem:[%s2318 + $0x31a] sm:$0xff]
  %v3152 = vld [vmem:[%s2318 + $0x322] sm:$0xff]
  %3217 = vrot.lane.b32.xlu0 %v3089, 32
  %v3218 = vpop.permute.xlu0 %3217
  %3219 = vrot.lane.b32.xlu0 %v3090, 32
  %v3220 = vpop.permute.xlu0 %3219
  %3221 = vrot.lane.b32.xlu0 %v3091, 32
  %v3222 = vpop.permute.xlu0 %3221
  %3223 = vrot.lane.b32.xlu0 %v3092, 32
  %v3224 = vpop.permute.xlu0 %3223
  %3225 = vrot.lane.b32.xlu0 %v3093, 32
  %v3226 = vpop.permute.xlu0 %3225
  %3227 = vrot.lane.b32.xlu0 %v3094, 32
  %v3228 = vpop.permute.xlu0 %3227
  %3229 = vrot.lane.b32.xlu0 %v3095, 32
  %v3230 = vpop.permute.xlu0 %3229
  %3231 = vrot.lane.b32.xlu0 %v3096, 32
  %v3232 = vpop.permute.xlu0 %3231
  %3233 = vrot.lane.b32.xlu0 %v3097, 32
  %v3234 = vpop.permute.xlu0 %3233
  %3235 = vrot.lane.b32.xlu0 %v3098, 32
  %v3236 = vpop.permute.xlu0 %3235
  %3237 = vrot.lane.b32.xlu0 %v3099, 32
  %v3238 = vpop.permute.xlu0 %3237
  %3239 = vrot.lane.b32.xlu0 %v3100, 32
  %v3240 = vpop.permute.xlu0 %3239
  %3241 = vrot.lane.b32.xlu0 %v3101, 32
  %v3242 = vpop.permute.xlu0 %3241
  %3243 = vrot.lane.b32.xlu0 %v3102, 32
  %v3244 = vpop.permute.xlu0 %3243
  %3245 = vrot.lane.b32.xlu0 %v3103, 32
  %v3246 = vpop.permute.xlu0 %3245
  %3247 = vrot.lane.b32.xlu0 %v3104, 32
  %v3248 = vpop.permute.xlu0 %3247
  %3249 = vrot.lane.b32.xlu0 %v3105, 32
  %v3250 = vpop.permute.xlu0 %3249
  %3251 = vrot.lane.b32.xlu0 %v3106, 32
  %v3252 = vpop.permute.xlu0 %3251
  %3253 = vrot.lane.b32.xlu0 %v3107, 32
  %v3254 = vpop.permute.xlu0 %3253
  %3255 = vrot.lane.b32.xlu0 %v3108, 32
  %v3256 = vpop.permute.xlu0 %3255
  %3257 = vrot.lane.b32.xlu0 %v3109, 32
  %v3258 = vpop.permute.xlu0 %3257
  %3259 = vrot.lane.b32.xlu0 %v3110, 32
  %v3260 = vpop.permute.xlu0 %3259
  %3261 = vrot.lane.b32.xlu0 %v3111, 32
  %v3262 = vpop.permute.xlu0 %3261
  %3263 = vrot.lane.b32.xlu0 %v3112, 32
  %v3264 = vpop.permute.xlu0 %3263
  %3265 = vrot.lane.b32.xlu0 %v3113, 32
  %v3266 = vpop.permute.xlu0 %3265
  %3267 = vrot.lane.b32.xlu0 %v3114, 32
  %v3268 = vpop.permute.xlu0 %3267
  %3269 = vrot.lane.b32.xlu0 %v3115, 32
  %v3270 = vpop.permute.xlu0 %3269
  %3271 = vrot.lane.b32.xlu0 %v3116, 32
  %v3272 = vpop.permute.xlu0 %3271
  %3273 = vrot.lane.b32.xlu0 %v3117, 32
  %v3274 = vpop.permute.xlu0 %3273
  %3275 = vrot.lane.b32.xlu0 %v3118, 32
  %v3276 = vpop.permute.xlu0 %3275
  %3277 = vrot.lane.b32.xlu0 %v3119, 32
  %v3278 = vpop.permute.xlu0 %3277
  %3279 = vrot.lane.b32.xlu0 %v3120, 32
  %v3280 = vpop.permute.xlu0 %3279
  %3281 = vrot.lane.b32.xlu0 %v3121, 32
  %v3282 = vpop.permute.xlu0 %3281
  %3283 = vrot.lane.b32.xlu0 %v3122, 32
  %v3284 = vpop.permute.xlu0 %3283
  %3285 = vrot.lane.b32.xlu0 %v3123, 32
  %v3286 = vpop.permute.xlu0 %3285
  %3287 = vrot.lane.b32.xlu0 %v3124, 32
  %v3288 = vpop.permute.xlu0 %3287
  %3289 = vrot.lane.b32.xlu0 %v3125, 32
  %v3290 = vpop.permute.xlu0 %3289
  %3291 = vrot.lane.b32.xlu0 %v3126, 32
  %v3292 = vpop.permute.xlu0 %3291
  %3293 = vrot.lane.b32.xlu0 %v3127, 32
  %v3294 = vpop.permute.xlu0 %3293
  %3295 = vrot.lane.b32.xlu0 %v3128, 32
  %v3296 = vpop.permute.xlu0 %3295
  %3297 = vrot.lane.b32.xlu0 %v3129, 32
  %v3298 = vpop.permute.xlu0 %3297
  %3299 = vrot.lane.b32.xlu0 %v3130, 32
  %v3300 = vpop.permute.xlu0 %3299
  %3301 = vrot.lane.b32.xlu0 %v3131, 32
  %v3302 = vpop.permute.xlu0 %3301
  %3303 = vrot.lane.b32.xlu0 %v3132, 32
  %v3304 = vpop.permute.xlu0 %3303
  %3305 = vrot.lane.b32.xlu0 %v3133, 32
  %v3306 = vpop.permute.xlu0 %3305
  %3307 = vrot.lane.b32.xlu0 %v3134, 32
  %v3308 = vpop.permute.xlu0 %3307
  %3309 = vrot.lane.b32.xlu0 %v3135, 32
  %v3310 = vpop.permute.xlu0 %3309
  %3311 = vrot.lane.b32.xlu0 %v3136, 32
  %v3312 = vpop.permute.xlu0 %3311
  %3313 = vrot.lane.b32.xlu0 %v3137, 32
  %v3314 = vpop.permute.xlu0 %3313
  %3315 = vrot.lane.b32.xlu0 %v3138, 32
  %v3316 = vpop.permute.xlu0 %3315
  %3317 = vrot.lane.b32.xlu0 %v3139, 32
  %v3318 = vpop.permute.xlu0 %3317
  %3319 = vrot.lane.b32.xlu0 %v3140, 32
  %v3320 = vpop.permute.xlu0 %3319
  %3321 = vrot.lane.b32.xlu0 %v3141, 32
  %v3322 = vpop.permute.xlu0 %3321
  %3323 = vrot.lane.b32.xlu0 %v3142, 32
  %v3324 = vpop.permute.xlu0 %3323
  %3325 = vrot.lane.b32.xlu0 %v3143, 32
  %v3326 = vpop.permute.xlu0 %3325
  %3327 = vrot.lane.b32.xlu0 %v3144, 32
  %v3328 = vpop.permute.xlu0 %3327
  %3329 = vrot.lane.b32.xlu0 %v3145, 32
  %v3330 = vpop.permute.xlu0 %3329
  %3331 = vrot.lane.b32.xlu0 %v3146, 32
  %v3332 = vpop.permute.xlu0 %3331
  %3333 = vrot.lane.b32.xlu0 %v3147, 32
  %v3334 = vpop.permute.xlu0 %3333
  %3335 = vrot.lane.b32.xlu0 %v3148, 32
  %v3336 = vpop.permute.xlu0 %3335
  %3337 = vrot.lane.b32.xlu0 %v3149, 32
  %v3338 = vpop.permute.xlu0 %3337
  %3339 = vrot.lane.b32.xlu0 %v3150, 32
  %v3340 = vpop.permute.xlu0 %3339
  %3341 = vrot.lane.b32.xlu0 %v3151, 32
  %v3342 = vpop.permute.xlu0 %3341
  %3343 = vrot.lane.b32.xlu0 %v3152, 32
  %v3344 = vpop.permute.xlu0 %3343
  %vm3409 = vcmask 294144
  %3410 = vst.msk [vmem:[#allocation3] sm:$0xff] %vm3409, %v3218
  %3411 = vst.msk [vmem:[#allocation3 + $0x8] sm:$0xff] %vm3409, %v3220
  %3412 = vst.msk [vmem:[#allocation3 + $0x10] sm:$0xff] %vm3409, %v3222
  %3413 = vst.msk [vmem:[#allocation3 + $0x18] sm:$0xff] %vm3409, %v3224
  %3414 = vst.msk [vmem:[#allocation3 + $0x20] sm:$0xff] %vm3409, %v3226
  %3415 = vst.msk [vmem:[#allocation3 + $0x28] sm:$0xff] %vm3409, %v3228
  %3416 = vst.msk [vmem:[#allocation3 + $0x30] sm:$0xff] %vm3409, %v3230
  %3417 = vst.msk [vmem:[#allocation3 + $0x38] sm:$0xff] %vm3409, %v3232
  %3418 = vst.msk [vmem:[#allocation3 + $0x40] sm:$0xff] %vm3409, %v3234
  %3419 = vst.msk [vmem:[#allocation3 + $0x48] sm:$0xff] %vm3409, %v3236
  %3420 = vst.msk [vmem:[#allocation3 + $0x50] sm:$0xff] %vm3409, %v3238
  %3421 = vst.msk [vmem:[#allocation3 + $0x58] sm:$0xff] %vm3409, %v3240
  %3422 = vst.msk [vmem:[#allocation3 + $0x60] sm:$0xff] %vm3409, %v3242
  %3423 = vst.msk [vmem:[#allocation3 + $0x68] sm:$0xff] %vm3409, %v3244
  %3424 = vst.msk [vmem:[#allocation3 + $0x70] sm:$0xff] %vm3409, %v3246
  %3425 = vst.msk [vmem:[#allocation3 + $0x78] sm:$0xff] %vm3409, %v3248
  %3426 = vst.msk [vmem:[#allocation3 + $0x80] sm:$0xff] %vm3409, %v3250
  %3427 = vst.msk [vmem:[#allocation3 + $0x88] sm:$0xff] %vm3409, %v3252
  %3428 = vst.msk [vmem:[#allocation3 + $0x90] sm:$0xff] %vm3409, %v3254
  %3429 = vst.msk [vmem:[#allocation3 + $0x98] sm:$0xff] %vm3409, %v3256
  %3430 = vst.msk [vmem:[#allocation3 + $0xa0] sm:$0xff] %vm3409, %v3258
  %3431 = vst.msk [vmem:[#allocation3 + $0xa8] sm:$0xff] %vm3409, %v3260
  %3432 = vst.msk [vmem:[#allocation3 + $0xb0] sm:$0xff] %vm3409, %v3262
  %3433 = vst.msk [vmem:[#allocation3 + $0xb8] sm:$0xff] %vm3409, %v3264
  %3434 = vst.msk [vmem:[#allocation3 + $0xc0] sm:$0xff] %vm3409, %v3266
  %3435 = vst.msk [vmem:[#allocation3 + $0xc8] sm:$0xff] %vm3409, %v3268
  %3436 = vst.msk [vmem:[#allocation3 + $0xd0] sm:$0xff] %vm3409, %v3270
  %3437 = vst.msk [vmem:[#allocation3 + $0xd8] sm:$0xff] %vm3409, %v3272
  %3438 = vst.msk [vmem:[#allocation3 + $0xe0] sm:$0xff] %vm3409, %v3274
  %3439 = vst.msk [vmem:[#allocation3 + $0xe8] sm:$0xff] %vm3409, %v3276
  %3440 = vst.msk [vmem:[#allocation3 + $0xf0] sm:$0xff] %vm3409, %v3278
  %3441 = vst.msk [vmem:[#allocation3 + $0xf8] sm:$0xff] %vm3409, %v3280
  %3442 = vst.msk [vmem:[#allocation3 + $0x100] sm:$0xff] %vm3409, %v3282
  %3443 = vst.msk [vmem:[#allocation3 + $0x108] sm:$0xff] %vm3409, %v3284
  %3444 = vst.msk [vmem:[#allocation3 + $0x110] sm:$0xff] %vm3409, %v3286
  %3445 = vst.msk [vmem:[#allocation3 + $0x118] sm:$0xff] %vm3409, %v3288
  %3446 = vst.msk [vmem:[#allocation3 + $0x120] sm:$0xff] %vm3409, %v3290
  %3447 = vst.msk [vmem:[#allocation3 + $0x128] sm:$0xff] %vm3409, %v3292
  %3448 = vst.msk [vmem:[#allocation3 + $0x130] sm:$0xff] %vm3409, %v3294
  %3449 = vst.msk [vmem:[#allocation3 + $0x138] sm:$0xff] %vm3409, %v3296
  %3450 = vst.msk [vmem:[#allocation3 + $0x140] sm:$0xff] %vm3409, %v3298
  %3451 = vst.msk [vmem:[#allocation3 + $0x148] sm:$0xff] %vm3409, %v3300
  %3452 = vst.msk [vmem:[#allocation3 + $0x150] sm:$0xff] %vm3409, %v3302
  %3453 = vst.msk [vmem:[#allocation3 + $0x158] sm:$0xff] %vm3409, %v3304
  %3454 = vst.msk [vmem:[#allocation3 + $0x160] sm:$0xff] %vm3409, %v3306
  %3455 = vst.msk [vmem:[#allocation3 + $0x168] sm:$0xff] %vm3409, %v3308
  %3456 = vst.msk [vmem:[#allocation3 + $0x170] sm:$0xff] %vm3409, %v3310
  %3457 = vst.msk [vmem:[#allocation3 + $0x178] sm:$0xff] %vm3409, %v3312
  %3458 = vst.msk [vmem:[#allocation3 + $0x180] sm:$0xff] %vm3409, %v3314
  %3459 = vst.msk [vmem:[#allocation3 + $0x188] sm:$0xff] %vm3409, %v3316
  %3460 = vst.msk [vmem:[#allocation3 + $0x190] sm:$0xff] %vm3409, %v3318
  %3461 = vst.msk [vmem:[#allocation3 + $0x198] sm:$0xff] %vm3409, %v3320
  %3462 = vst.msk [vmem:[#allocation3 + $0x1a0] sm:$0xff] %vm3409, %v3322
  %3463 = vst.msk [vmem:[#allocation3 + $0x1a8] sm:$0xff] %vm3409, %v3324
  %3464 = vst.msk [vmem:[#allocation3 + $0x1b0] sm:$0xff] %vm3409, %v3326
  %3465 = vst.msk [vmem:[#allocation3 + $0x1b8] sm:$0xff] %vm3409, %v3328
  %3466 = vst.msk [vmem:[#allocation3 + $0x1c0] sm:$0xff] %vm3409, %v3330
  %3467 = vst.msk [vmem:[#allocation3 + $0x1c8] sm:$0xff] %vm3409, %v3332
  %3468 = vst.msk [vmem:[#allocation3 + $0x1d0] sm:$0xff] %vm3409, %v3334
  %3469 = vst.msk [vmem:[#allocation3 + $0x1d8] sm:$0xff] %vm3409, %v3336
  %3470 = vst.msk [vmem:[#allocation3 + $0x1e0] sm:$0xff] %vm3409, %v3338
  %3471 = vst.msk [vmem:[#allocation3 + $0x1e8] sm:$0xff] %vm3409, %v3340
  %3472 = vst.msk [vmem:[#allocation3 + $0x1f0] sm:$0xff] %vm3409, %v3342
  %3473 = vst.msk [vmem:[#allocation3 + $0x1f8] sm:$0xff] %vm3409, %v3344
  %v3474 = vld [vmem:[#allocation3] sm:$0xff]
  %v3475 = vld [vmem:[#allocation3 + $0x8] sm:$0xff]
  %v3476 = vld [vmem:[#allocation3 + $0x10] sm:$0xff]
  %v3477 = vld [vmem:[#allocation3 + $0x18] sm:$0xff]
  %v3478 = vld [vmem:[#allocation3 + $0x20] sm:$0xff]
  %v3479 = vld [vmem:[#allocation3 + $0x28] sm:$0xff]
  %v3480 = vld [vmem:[#allocation3 + $0x30] sm:$0xff]
  %v3481 = vld [vmem:[#allocation3 + $0x38] sm:$0xff]
  %v3482 = vld [vmem:[#allocation3 + $0x40] sm:$0xff]
  %v3483 = vld [vmem:[#allocation3 + $0x48] sm:$0xff]
  %v3484 = vld [vmem:[#allocation3 + $0x50] sm:$0xff]
  %v3485 = vld [vmem:[#allocation3 + $0x58] sm:$0xff]
  %v3486 = vld [vmem:[#allocation3 + $0x60] sm:$0xff]
  %v3487 = vld [vmem:[#allocation3 + $0x68] sm:$0xff]
  %v3488 = vld [vmem:[#allocation3 + $0x70] sm:$0xff]
  %v3489 = vld [vmem:[#allocation3 + $0x78] sm:$0xff]
  %v3490 = vld [vmem:[#allocation3 + $0x80] sm:$0xff]
  %v3491 = vld [vmem:[#allocation3 + $0x88] sm:$0xff]
  %v3492 = vld [vmem:[#allocation3 + $0x90] sm:$0xff]
  %v3493 = vld [vmem:[#allocation3 + $0x98] sm:$0xff]
  %v3494 = vld [vmem:[#allocation3 + $0xa0] sm:$0xff]
  %v3495 = vld [vmem:[#allocation3 + $0xa8] sm:$0xff]
  %v3496 = vld [vmem:[#allocation3 + $0xb0] sm:$0xff]
  %v3497 = vld [vmem:[#allocation3 + $0xb8] sm:$0xff]
  %v3498 = vld [vmem:[#allocation3 + $0xc0] sm:$0xff]
  %v3499 = vld [vmem:[#allocation3 + $0xc8] sm:$0xff]
  %v3500 = vld [vmem:[#allocation3 + $0xd0] sm:$0xff]
  %v3501 = vld [vmem:[#allocation3 + $0xd8] sm:$0xff]
  %v3502 = vld [vmem:[#allocation3 + $0xe0] sm:$0xff]
  %v3503 = vld [vmem:[#allocation3 + $0xe8] sm:$0xff]
  %v3504 = vld [vmem:[#allocation3 + $0xf0] sm:$0xff]
  %v3505 = vld [vmem:[#allocation3 + $0xf8] sm:$0xff]
  %v3506 = vld [vmem:[#allocation3 + $0x100] sm:$0xff]
  %v3507 = vld [vmem:[#allocation3 + $0x108] sm:$0xff]
  %v3508 = vld [vmem:[#allocation3 + $0x110] sm:$0xff]
  %v3509 = vld [vmem:[#allocation3 + $0x118] sm:$0xff]
  %v3510 = vld [vmem:[#allocation3 + $0x120] sm:$0xff]
  %v3511 = vld [vmem:[#allocation3 + $0x128] sm:$0xff]
  %v3512 = vld [vmem:[#allocation3 + $0x130] sm:$0xff]
  %v3513 = vld [vmem:[#allocation3 + $0x138] sm:$0xff]
  %v3514 = vld [vmem:[#allocation3 + $0x140] sm:$0xff]
  %v3515 = vld [vmem:[#allocation3 + $0x148] sm:$0xff]
  %v3516 = vld [vmem:[#allocation3 + $0x150] sm:$0xff]
  %v3517 = vld [vmem:[#allocation3 + $0x158] sm:$0xff]
  %v3518 = vld [vmem:[#allocation3 + $0x160] sm:$0xff]
  %v3519 = vld [vmem:[#allocation3 + $0x168] sm:$0xff]
  %v3520 = vld [vmem:[#allocation3 + $0x170] sm:$0xff]
  %v3521 = vld [vmem:[#allocation3 + $0x178] sm:$0xff]
  %v3522 = vld [vmem:[#allocation3 + $0x180] sm:$0xff]
  %v3523 = vld [vmem:[#allocation3 + $0x188] sm:$0xff]
  %v3524 = vld [vmem:[#allocation3 + $0x190] sm:$0xff]
  %v3525 = vld [vmem:[#allocation3 + $0x198] sm:$0xff]
  %v3526 = vld [vmem:[#allocation3 + $0x1a0] sm:$0xff]
  %v3527 = vld [vmem:[#allocation3 + $0x1a8] sm:$0xff]
  %v3528 = vld [vmem:[#allocation3 + $0x1b0] sm:$0xff]
  %v3529 = vld [vmem:[#allocation3 + $0x1b8] sm:$0xff]
  %v3530 = vld [vmem:[#allocation3 + $0x1c0] sm:$0xff]
  %v3531 = vld [vmem:[#allocation3 + $0x1c8] sm:$0xff]
  %v3532 = vld [vmem:[#allocation3 + $0x1d0] sm:$0xff]
  %v3533 = vld [vmem:[#allocation3 + $0x1d8] sm:$0xff]
  %v3534 = vld [vmem:[#allocation3 + $0x1e0] sm:$0xff]
  %v3535 = vld [vmem:[#allocation3 + $0x1e8] sm:$0xff]
  %v3536 = vld [vmem:[#allocation3 + $0x1f0] sm:$0xff]
  %v3537 = vld [vmem:[#allocation3 + $0x1f8] sm:$0xff]
  %v3538 = vld [vmem:[%s1] sm:$0xff]
  %v3539 = vld [vmem:[%s1 + $0x8] sm:$0xff]
  %v3540 = vld [vmem:[%s1 + $0x10] sm:$0xff]
  %v3541 = vld [vmem:[%s1 + $0x18] sm:$0xff]
  %v3542 = vld [vmem:[%s1 + $0x20] sm:$0xf]
  %vm3543 = vcmask 293888
  %v3545 = vsel %vm3543, %v3474, 0
  %v3548 = vsel %vm3543, %v3475, 0
  %v3551 = vsel %vm3543, %v3476, 0
  %v3554 = vsel %vm3543, %v3477, 0
  %v3557 = vsel %vm3543, %v3478, 0
  %v3560 = vsel %vm3543, %v3479, 0
  %v3563 = vsel %vm3543, %v3480, 0
  %v3566 = vsel %vm3543, %v3481, 0
  %v3569 = vsel %vm3543, %v3482, 0
  %v3572 = vsel %vm3543, %v3483, 0
  %v3575 = vsel %vm3543, %v3484, 0
  %v3578 = vsel %vm3543, %v3485, 0
  %v3581 = vsel %vm3543, %v3486, 0
  %v3584 = vsel %vm3543, %v3487, 0
  %v3587 = vsel %vm3543, %v3488, 0
  %v3590 = vsel %vm3543, %v3489, 0
  %v3593 = vsel %vm3543, %v3490, 0
  %v3596 = vsel %vm3543, %v3491, 0
  %v3599 = vsel %vm3543, %v3492, 0
  %v3602 = vsel %vm3543, %v3493, 0
  %v3605 = vsel %vm3543, %v3494, 0
  %v3608 = vsel %vm3543, %v3495, 0
  %v3611 = vsel %vm3543, %v3496, 0
  %v3614 = vsel %vm3543, %v3497, 0
  %v3617 = vsel %vm3543, %v3498, 0
  %v3620 = vsel %vm3543, %v3499, 0
  %v3623 = vsel %vm3543, %v3500, 0
  %v3626 = vsel %vm3543, %v3501, 0
  %v3629 = vsel %vm3543, %v3502, 0
  %v3632 = vsel %vm3543, %v3503, 0
  %v3635 = vsel %vm3543, %v3504, 0
  %v3638 = vsel %vm3543, %v3505, 0
  %v3641 = vsel %vm3543, %v3506, 0
  %v3644 = vsel %vm3543, %v3507, 0
  %v3647 = vsel %vm3543, %v3508, 0
  %v3650 = vsel %vm3543, %v3509, 0
  %v3653 = vsel %vm3543, %v3510, 0
  %v3656 = vsel %vm3543, %v3511, 0
  %v3659 = vsel %vm3543, %v3512, 0
  %v3662 = vsel %vm3543, %v3513, 0
  %v3665 = vsel %vm3543, %v3514, 0
  %v3668 = vsel %vm3543, %v3515, 0
  %v3671 = vsel %vm3543, %v3516, 0
  %v3674 = vsel %vm3543, %v3517, 0
  %v3677 = vsel %vm3543, %v3518, 0
  %v3680 = vsel %vm3543, %v3519, 0
  %v3683 = vsel %vm3543, %v3520, 0
  %v3686 = vsel %vm3543, %v3521, 0
  %v3689 = vsel %vm3543, %v3522, 0
  %v3692 = vsel %vm3543, %v3523, 0
  %v3695 = vsel %vm3543, %v3524, 0
  %v3698 = vsel %vm3543, %v3525, 0
  %v3701 = vsel %vm3543, %v3526, 0
  %v3704 = vsel %vm3543, %v3527, 0
  %v3707 = vsel %vm3543, %v3528, 0
  %v3710 = vsel %vm3543, %v3529, 0
  %v3713 = vsel %vm3543, %v3530, 0
  %v3716 = vsel %vm3543, %v3531, 0
  %v3719 = vsel %vm3543, %v3532, 0
  %v3722 = vsel %vm3543, %v3533, 0
  %v3725 = vsel %vm3543, %v3534, 0
  %v3728 = vsel %vm3543, %v3535, 0
  %v3731 = vsel %vm3543, %v3536, 0
  %v3734 = vsel %vm3543, %v3537, 0
  %vm3736 = vcmask 1043456
  %v3738 = vsel %vm3736, %v3542, 0
  %3740 = vmatprep.subr.mxu0 0.0
  %3741 = vmatpush1.msra.mxu0 %v3538
  %3742 = vmatprep.subr.mxu0 0.0
  %3743 = vmatpush1.msra.mxu0 %v3539
  %3744 = vmatprep.subr.mxu0 0.0
  %3745 = vmatpush1.msra.mxu0 %v3540
  %3746 = vmatprep.subr.mxu0 0.0
  %3747 = vmatpush1.msra.mxu0 %v3541
  %3748 = vmatprep.subr.mxu0 0.0
  %3749 = vmatpush1.msra.mxu0 %v3738
  %3750 = vmatprep.subr.mxu0 0.0
  %3751 = vmatpush1.msra.mxu0 0.0
  %3752 = vmatprep.subr.mxu0 0.0
  %3753 = vmatpush1.msra.mxu0 0.0
  %3754 = vmatprep.subr.mxu0 0.0
  %3755 = vmatpush1.msra.mxu0 0.0
  %3756 = vmatprep.subr.mxu0 0.0
  %3757 = vmatpush1.msra.mxu0 0.0
  %3758 = vmatprep.subr.mxu0 0.0
  %3759 = vmatpush1.msra.mxu0 0.0
  %3760 = vmatprep.subr.mxu0 0.0
  %3761 = vmatpush1.msra.mxu0 0.0
  %3762 = vmatprep.subr.mxu0 0.0
  %3763 = vmatpush1.msra.mxu0 0.0
  %3764 = vmatprep.subr.mxu0 0.0
  %3765 = vmatpush1.msra.mxu0 0.0
  %3766 = vmatprep.subr.mxu0 0.0
  %3767 = vmatpush1.msra.mxu0 0.0
  %3768 = vmatprep.subr.mxu0 0.0
  %3769 = vmatpush1.msra.mxu0 0.0
  %3770 = vmatprep.subr.mxu0 0.0
  %3771 = vmatpush1.msra.mxu0 0.0
  %3772 = vmatprep.subr.mxu0 0.0
  %3773 = vmatpush1.msra.mxu0 0.0
  %3774 = vmatprep.subr.mxu0 0.0
  %3775 = vmatpush1.msra.mxu0 0.0
  %3776 = vmatprep.subr.mxu0 0.0
  %3777 = vmatpush1.msra.mxu0 0.0
  %3778 = vmatprep.subr.mxu0 0.0
  %3779 = vmatpush1.msra.mxu0 0.0
  %3780 = vmatprep.subr.mxu0 0.0
  %3781 = vmatpush1.msra.mxu0 0.0
  %3782 = vmatprep.subr.mxu0 0.0
  %3783 = vmatpush1.msra.mxu0 0.0
  %3784 = vmatprep.subr.mxu0 0.0
  %3785 = vmatpush1.msra.mxu0 0.0
  %3786 = vmatprep.subr.mxu0 0.0
  %3787 = vmatpush1.msra.mxu0 0.0
  %3788 = vmatprep.subr.mxu0 0.0
  %3789 = vmatpush1.msra.mxu0 0.0
  %3790 = vmatprep.subr.mxu0 0.0
  %3791 = vmatpush1.msra.mxu0 0.0
  %3792 = vmatprep.subr.mxu0 0.0
  %3793 = vmatpush1.msra.mxu0 0.0
  %3794 = vmatprep.subr.mxu0 0.0
  %3795 = vmatpush1.msra.mxu0 0.0
  %3796 = vmatprep.subr.mxu0 0.0
  %3797 = vmatpush1.msra.mxu0 0.0
  %3798 = vmatprep.subr.mxu0 0.0
  %3799 = vmatpush1.msra.mxu0 0.0
  %3800 = vmatprep.subr.mxu0 0.0
  %3801 = vmatpush1.msra.mxu0 0.0
  %3802 = vmatprep.subr.mxu0 0.0
  %3803 = vmatpush1.msra.mxu0 0.0
  %3804 = vmatprep.mubr.f32.mxu0 0.0
  %3805 = vmatmul.mubr.f32.gmra.mrb[0].mxu0 %v3545
  %v3806 = vpop.f32.mrb[0].mxu0
  %v3807 = vadd.f32 0.0, %v3806
  %v3808 = vpop.f32.mrb[0].mxu0
  %3809 = vmatprep.mubr.f32.mxu0 0.0
  %3810 = vmatmul.mubr.f32.gmra.mrb[0].mxu0 %v3548
  %v3811 = vpop.f32.mrb[0].mxu0
  %v3812 = vadd.f32 0.0, %v3811
  %v3813 = vpop.f32.mrb[0].mxu0
  %3814 = vmatprep.mubr.f32.mxu0 0.0
  %3815 = vmatmul.mubr.f32.gmra.mrb[0].mxu0 %v3551
  %v3816 = vpop.f32.mrb[0].mxu0
  %v3817 = vadd.f32 0.0, %v3816
  %v3818 = vpop.f32.mrb[0].mxu0
  %3819 = vmatprep.mubr.f32.mxu0 0.0
  %3820 = vmatmul.mubr.f32.gmra.mrb[0].mxu0 %v3554
  %v3821 = vpop.f32.mrb[0].mxu0
  %v3822 = vadd.f32 0.0, %v3821
  %v3823 = vpop.f32.mrb[0].mxu0
  %3824 = vmatprep.mubr.f32.mxu0 0.0
  %3825 = vmatmul.mubr.f32.gmra.mrb[0].mxu0 %v3557
  %v3826 = vpop.f32.mrb[0].mxu0
  %v3827 = vadd.f32 0.0, %v3826
  %v3828 = vpop.f32.mrb[0].mxu0
  %3829 = vmatprep.mubr.f32.mxu0 0.0
  %3830 = vmatmul.mubr.f32.gmra.mrb[0].mxu0 %v3560
  %v3831 = vpop.f32.mrb[0].mxu0
  %v3832 = vadd.f32 0.0, %v3831
  %v3833 = vpop.f32.mrb[0].mxu0
  %3834 = vmatprep.mubr.f32.mxu0 0.0
  %3835 = vmatmul.mubr.f32.gmra.mrb[0].mxu0 %v3563
  %v3836 = vpop.f32.mrb[0].mxu0
  %v3837 = vadd.f32 0.0, %v3836
  %v3838 = vpop.f32.mrb[0].mxu0
  %3839 = vmatprep.mubr.f32.mxu0 0.0
  %3840 = vmatmul.mubr.f32.gmra.mrb[0].mxu0 %v3566
  %v3841 = vpop.f32.mrb[0].mxu0
  %v3842 = vadd.f32 0.0, %v3841
  %v3843 = vpop.f32.mrb[0].mxu0
  %3844 = vmatprep.mubr.f32.mxu0 0.0
  %3845 = vmatmul.mubr.f32.gmra.mrb[0].mxu0 %v3569
  %v3846 = vpop.f32.mrb[0].mxu0
  %v3847 = vadd.f32 0.0, %v3846
  %v3848 = vpop.f32.mrb[0].mxu0
  %3849 = vmatprep.mubr.f32.mxu0 0.0
  %3850 = vmatmul.mubr.f32.gmra.mrb[0].mxu0 %v3572
  %v3851 = vpop.f32.mrb[0].mxu0
  %v3852 = vadd.f32 0.0, %v3851
  %v3853 = vpop.f32.mrb[0].mxu0
  %3854 = vmatprep.mubr.f32.mxu0 0.0
  %3855 = vmatmul.mubr.f32.gmra.mrb[0].mxu0 %v3575
  %v3856 = vpop.f32.mrb[0].mxu0
  %v3857 = vadd.f32 0.0, %v3856
  %v3858 = vpop.f32.mrb[0].mxu0
  %3859 = vmatprep.mubr.f32.mxu0 0.0
  %3860 = vmatmul.mubr.f32.gmra.mrb[0].mxu0 %v3578
  %v3861 = vpop.f32.mrb[0].mxu0
  %v3862 = vadd.f32 0.0, %v3861
  %v3863 = vpop.f32.mrb[0].mxu0
  %3864 = vmatprep.mubr.f32.mxu0 0.0
  %3865 = vmatmul.mubr.f32.gmra.mrb[0].mxu0 %v3581
  %v3866 = vpop.f32.mrb[0].mxu0
  %v3867 = vadd.f32 0.0, %v3866
  %v3868 = vpop.f32.mrb[0].mxu0
  %3869 = vmatprep.mubr.f32.mxu0 0.0
  %3870 = vmatmul.mubr.f32.gmra.mrb[0].mxu0 %v3584
  %v3871 = vpop.f32.mrb[0].mxu0
  %v3872 = vadd.f32 0.0, %v3871
  %v3873 = vpop.f32.mrb[0].mxu0
  %3874 = vmatprep.mubr.f32.mxu0 0.0
  %3875 = vmatmul.mubr.f32.gmra.mrb[0].mxu0 %v3587
  %v3876 = vpop.f32.mrb[0].mxu0
  %v3877 = vadd.f32 0.0, %v3876
  %v3878 = vpop.f32.mrb[0].mxu0
  %3879 = vmatprep.mubr.f32.mxu0 0.0
  %3880 = vmatmul.mubr.f32.gmra.mrb[0].mxu0 %v3590
  %v3881 = vpop.f32.mrb[0].mxu0
  %v3882 = vadd.f32 0.0, %v3881
  %v3883 = vpop.f32.mrb[0].mxu0
  %3884 = vmatprep.mubr.f32.mxu0 0.0
  %3885 = vmatmul.mubr.f32.gmra.mrb[0].mxu0 %v3593
  %v3886 = vpop.f32.mrb[0].mxu0
  %v3887 = vadd.f32 0.0, %v3886
  %v3888 = vpop.f32.mrb[0].mxu0
  %3889 = vmatprep.mubr.f32.mxu0 0.0
  %3890 = vmatmul.mubr.f32.gmra.mrb[0].mxu0 %v3596
  %v3891 = vpop.f32.mrb[0].mxu0
  %v3892 = vadd.f32 0.0, %v3891
  %v3893 = vpop.f32.mrb[0].mxu0
  %3894 = vmatprep.mubr.f32.mxu0 0.0
  %3895 = vmatmul.mubr.f32.gmra.mrb[0].mxu0 %v3599
  %v3896 = vpop.f32.mrb[0].mxu0
  %v3897 = vadd.f32 0.0, %v3896
  %v3898 = vpop.f32.mrb[0].mxu0
  %3899 = vmatprep.mubr.f32.mxu0 0.0
  %3900 = vmatmul.mubr.f32.gmra.mrb[0].mxu0 %v3602
  %v3901 = vpop.f32.mrb[0].mxu0
  %v3902 = vadd.f32 0.0, %v3901
  %v3903 = vpop.f32.mrb[0].mxu0
  %3904 = vmatprep.mubr.f32.mxu0 0.0
  %3905 = vmatmul.mubr.f32.gmra.mrb[0].mxu0 %v3605
  %v3906 = vpop.f32.mrb[0].mxu0
  %v3907 = vadd.f32 0.0, %v3906
  %v3908 = vpop.f32.mrb[0].mxu0
  %3909 = vmatprep.mubr.f32.mxu0 0.0
  %3910 = vmatmul.mubr.f32.gmra.mrb[0].mxu0 %v3608
  %v3911 = vpop.f32.mrb[0].mxu0
  %v3912 = vadd.f32 0.0, %v3911
  %v3913 = vpop.f32.mrb[0].mxu0
  %3914 = vmatprep.mubr.f32.mxu0 0.0
  %3915 = vmatmul.mubr.f32.gmra.mrb[0].mxu0 %v3611
  %v3916 = vpop.f32.mrb[0].mxu0
  %v3917 = vadd.f32 0.0, %v3916
  %v3918 = vpop.f32.mrb[0].mxu0
  %3919 = vmatprep.mubr.f32.mxu0 0.0
  %3920 = vmatmul.mubr.f32.gmra.mrb[0].mxu0 %v3614
  %v3921 = vpop.f32.mrb[0].mxu0
  %v3922 = vadd.f32 0.0, %v3921
  %v3923 = vpop.f32.mrb[0].mxu0
  %3924 = vmatprep.mubr.f32.mxu0 0.0
  %3925 = vmatmul.mubr.f32.gmra.mrb[0].mxu0 %v3617
  %v3926 = vpop.f32.mrb[0].mxu0
  %v3927 = vadd.f32 0.0, %v3926
  %v3928 = vpop.f32.mrb[0].mxu0
  %3929 = vmatprep.mubr.f32.mxu0 0.0
  %3930 = vmatmul.mubr.f32.gmra.mrb[0].mxu0 %v3620
  %v3931 = vpop.f32.mrb[0].mxu0
  %v3932 = vadd.f32 0.0, %v3931
  %v3933 = vpop.f32.mrb[0].mxu0
  %3934 = vmatprep.mubr.f32.mxu0 0.0
  %3935 = vmatmul.mubr.f32.gmra.mrb[0].mxu0 %v3623
  %v3936 = vpop.f32.mrb[0].mxu0
  %v3937 = vadd.f32 0.0, %v3936
  %v3938 = vpop.f32.mrb[0].mxu0
  %3939 = vmatprep.mubr.f32.mxu0 0.0
  %3940 = vmatmul.mubr.f32.gmra.mrb[0].mxu0 %v3626
  %v3941 = vpop.f32.mrb[0].mxu0
  %v3942 = vadd.f32 0.0, %v3941
  %v3943 = vpop.f32.mrb[0].mxu0
  %3944 = vmatprep.mubr.f32.mxu0 0.0
  %3945 = vmatmul.mubr.f32.gmra.mrb[0].mxu0 %v3629
  %v3946 = vpop.f32.mrb[0].mxu0
  %v3947 = vadd.f32 0.0, %v3946
  %v3948 = vpop.f32.mrb[0].mxu0
  %3949 = vmatprep.mubr.f32.mxu0 0.0
  %3950 = vmatmul.mubr.f32.gmra.mrb[0].mxu0 %v3632
  %v3951 = vpop.f32.mrb[0].mxu0
  %v3952 = vadd.f32 0.0, %v3951
  %v3953 = vpop.f32.mrb[0].mxu0
  %3954 = vmatprep.mubr.f32.mxu0 0.0
  %3955 = vmatmul.mubr.f32.gmra.mrb[0].mxu0 %v3635
  %v3956 = vpop.f32.mrb[0].mxu0
  %v3957 = vadd.f32 0.0, %v3956
  %v3958 = vpop.f32.mrb[0].mxu0
  %3959 = vmatprep.mubr.f32.mxu0 0.0
  %3960 = vmatmul.mubr.f32.gmra.mrb[0].mxu0 %v3638
  %v3961 = vpop.f32.mrb[0].mxu0
  %v3962 = vadd.f32 0.0, %v3961
  %v3963 = vpop.f32.mrb[0].mxu0
  %3964 = vmatprep.mubr.f32.mxu0 0.0
  %3965 = vmatmul.mubr.f32.gmra.mrb[0].mxu0 %v3641
  %v3966 = vpop.f32.mrb[0].mxu0
  %v3967 = vadd.f32 0.0, %v3966
  %v3968 = vpop.f32.mrb[0].mxu0
  %3969 = vmatprep.mubr.f32.mxu0 0.0
  %3970 = vmatmul.mubr.f32.gmra.mrb[0].mxu0 %v3644
  %v3971 = vpop.f32.mrb[0].mxu0
  %v3972 = vadd.f32 0.0, %v3971
  %v3973 = vpop.f32.mrb[0].mxu0
  %3974 = vmatprep.mubr.f32.mxu0 0.0
  %3975 = vmatmul.mubr.f32.gmra.mrb[0].mxu0 %v3647
  %v3976 = vpop.f32.mrb[0].mxu0
  %v3977 = vadd.f32 0.0, %v3976
  %v3978 = vpop.f32.mrb[0].mxu0
  %3979 = vmatprep.mubr.f32.mxu0 0.0
  %3980 = vmatmul.mubr.f32.gmra.mrb[0].mxu0 %v3650
  %v3981 = vpop.f32.mrb[0].mxu0
  %v3982 = vadd.f32 0.0, %v3981
  %v3983 = vpop.f32.mrb[0].mxu0
  %3984 = vmatprep.mubr.f32.mxu0 0.0
  %3985 = vmatmul.mubr.f32.gmra.mrb[0].mxu0 %v3653
  %v3986 = vpop.f32.mrb[0].mxu0
  %v3987 = vadd.f32 0.0, %v3986
  %v3988 = vpop.f32.mrb[0].mxu0
  %3989 = vmatprep.mubr.f32.mxu0 0.0
  %3990 = vmatmul.mubr.f32.gmra.mrb[0].mxu0 %v3656
  %v3991 = vpop.f32.mrb[0].mxu0
  %v3992 = vadd.f32 0.0, %v3991
  %v3993 = vpop.f32.mrb[0].mxu0
  %3994 = vmatprep.mubr.f32.mxu0 0.0
  %3995 = vmatmul.mubr.f32.gmra.mrb[0].mxu0 %v3659
  %v3996 = vpop.f32.mrb[0].mxu0
  %v3997 = vadd.f32 0.0, %v3996
  %v3998 = vpop.f32.mrb[0].mxu0
  %3999 = vmatprep.mubr.f32.mxu0 0.0
  %4000 = vmatmul.mubr.f32.gmra.mrb[0].mxu0 %v3662
  %v4001 = vpop.f32.mrb[0].mxu0
  %v4002 = vadd.f32 0.0, %v4001
  %v4003 = vpop.f32.mrb[0].mxu0
  %4004 = vmatprep.mubr.f32.mxu0 0.0
  %4005 = vmatmul.mubr.f32.gmra.mrb[0].mxu0 %v3665
  %v4006 = vpop.f32.mrb[0].mxu0
  %v4007 = vadd.f32 0.0, %v4006
  %v4008 = vpop.f32.mrb[0].mxu0
  %4009 = vmatprep.mubr.f32.mxu0 0.0
  %4010 = vmatmul.mubr.f32.gmra.mrb[0].mxu0 %v3668
  %v4011 = vpop.f32.mrb[0].mxu0
  %v4012 = vadd.f32 0.0, %v4011
  %v4013 = vpop.f32.mrb[0].mxu0
  %4014 = vmatprep.mubr.f32.mxu0 0.0
  %4015 = vmatmul.mubr.f32.gmra.mrb[0].mxu0 %v3671
  %v4016 = vpop.f32.mrb[0].mxu0
  %v4017 = vadd.f32 0.0, %v4016
  %v4018 = vpop.f32.mrb[0].mxu0
  %4019 = vmatprep.mubr.f32.mxu0 0.0
  %4020 = vmatmul.mubr.f32.gmra.mrb[0].mxu0 %v3674
  %v4021 = vpop.f32.mrb[0].mxu0
  %v4022 = vadd.f32 0.0, %v4021
  %v4023 = vpop.f32.mrb[0].mxu0
  %4024 = vmatprep.mubr.f32.mxu0 0.0
  %4025 = vmatmul.mubr.f32.gmra.mrb[0].mxu0 %v3677
  %v4026 = vpop.f32.mrb[0].mxu0
  %v4027 = vadd.f32 0.0, %v4026
  %v4028 = vpop.f32.mrb[0].mxu0
  %4029 = vmatprep.mubr.f32.mxu0 0.0
  %4030 = vmatmul.mubr.f32.gmra.mrb[0].mxu0 %v3680
  %v4031 = vpop.f32.mrb[0].mxu0
  %v4032 = vadd.f32 0.0, %v4031
  %v4033 = vpop.f32.mrb[0].mxu0
  %4034 = vmatprep.mubr.f32.mxu0 0.0
  %4035 = vmatmul.mubr.f32.gmra.mrb[0].mxu0 %v3683
  %v4036 = vpop.f32.mrb[0].mxu0
  %v4037 = vadd.f32 0.0, %v4036
  %v4038 = vpop.f32.mrb[0].mxu0
  %4039 = vmatprep.mubr.f32.mxu0 0.0
  %4040 = vmatmul.mubr.f32.gmra.mrb[0].mxu0 %v3686
  %v4041 = vpop.f32.mrb[0].mxu0
  %v4042 = vadd.f32 0.0, %v4041
  %v4043 = vpop.f32.mrb[0].mxu0
  %4044 = vmatprep.mubr.f32.mxu0 0.0
  %4045 = vmatmul.mubr.f32.gmra.mrb[0].mxu0 %v3689
  %v4046 = vpop.f32.mrb[0].mxu0
  %v4047 = vadd.f32 0.0, %v4046
  %v4048 = vpop.f32.mrb[0].mxu0
  %4049 = vmatprep.mubr.f32.mxu0 0.0
  %4050 = vmatmul.mubr.f32.gmra.mrb[0].mxu0 %v3692
  %v4051 = vpop.f32.mrb[0].mxu0
  %v4052 = vadd.f32 0.0, %v4051
  %v4053 = vpop.f32.mrb[0].mxu0
  %4054 = vmatprep.mubr.f32.mxu0 0.0
  %4055 = vmatmul.mubr.f32.gmra.mrb[0].mxu0 %v3695
  %v4056 = vpop.f32.mrb[0].mxu0
  %v4057 = vadd.f32 0.0, %v4056
  %v4058 = vpop.f32.mrb[0].mxu0
  %4059 = vmatprep.mubr.f32.mxu0 0.0
  %4060 = vmatmul.mubr.f32.gmra.mrb[0].mxu0 %v3698
  %v4061 = vpop.f32.mrb[0].mxu0
  %v4062 = vadd.f32 0.0, %v4061
  %v4063 = vpop.f32.mrb[0].mxu0
  %4064 = vmatprep.mubr.f32.mxu0 0.0
  %4065 = vmatmul.mubr.f32.gmra.mrb[0].mxu0 %v3701
  %v4066 = vpop.f32.mrb[0].mxu0
  %v4067 = vadd.f32 0.0, %v4066
  %v4068 = vpop.f32.mrb[0].mxu0
  %4069 = vmatprep.mubr.f32.mxu0 0.0
  %4070 = vmatmul.mubr.f32.gmra.mrb[0].mxu0 %v3704
  %v4071 = vpop.f32.mrb[0].mxu0
  %v4072 = vadd.f32 0.0, %v4071
  %v4073 = vpop.f32.mrb[0].mxu0
  %4074 = vmatprep.mubr.f32.mxu0 0.0
  %4075 = vmatmul.mubr.f32.gmra.mrb[0].mxu0 %v3707
  %v4076 = vpop.f32.mrb[0].mxu0
  %v4077 = vadd.f32 0.0, %v4076
  %v4078 = vpop.f32.mrb[0].mxu0
  %4079 = vmatprep.mubr.f32.mxu0 0.0
  %4080 = vmatmul.mubr.f32.gmra.mrb[0].mxu0 %v3710
  %v4081 = vpop.f32.mrb[0].mxu0
  %v4082 = vadd.f32 0.0, %v4081
  %v4083 = vpop.f32.mrb[0].mxu0
  %4084 = vmatprep.mubr.f32.mxu0 0.0
  %4085 = vmatmul.mubr.f32.gmra.mrb[0].mxu0 %v3713
  %v4086 = vpop.f32.mrb[0].mxu0
  %v4087 = vadd.f32 0.0, %v4086
  %v4088 = vpop.f32.mrb[0].mxu0
  %4089 = vmatprep.mubr.f32.mxu0 0.0
  %4090 = vmatmul.mubr.f32.gmra.mrb[0].mxu0 %v3716
  %v4091 = vpop.f32.mrb[0].mxu0
  %v4092 = vadd.f32 0.0, %v4091
  %v4093 = vpop.f32.mrb[0].mxu0
  %4094 = vmatprep.mubr.f32.mxu0 0.0
  %4095 = vmatmul.mubr.f32.gmra.mrb[0].mxu0 %v3719
  %v4096 = vpop.f32.mrb[0].mxu0
  %v4097 = vadd.f32 0.0, %v4096
  %v4098 = vpop.f32.mrb[0].mxu0
  %4099 = vmatprep.mubr.f32.mxu0 0.0
  %4100 = vmatmul.mubr.f32.gmra.mrb[0].mxu0 %v3722
  %v4101 = vpop.f32.mrb[0].mxu0
  %v4102 = vadd.f32 0.0, %v4101
  %v4103 = vpop.f32.mrb[0].mxu0
  %4104 = vmatprep.mubr.f32.mxu0 0.0
  %4105 = vmatmul.mubr.f32.gmra.mrb[0].mxu0 %v3725
  %v4106 = vpop.f32.mrb[0].mxu0
  %v4107 = vadd.f32 0.0, %v4106
  %v4108 = vpop.f32.mrb[0].mxu0
  %4109 = vmatprep.mubr.f32.mxu0 0.0
  %4110 = vmatmul.mubr.f32.gmra.mrb[0].mxu0 %v3728
  %v4111 = vpop.f32.mrb[0].mxu0
  %v4112 = vadd.f32 0.0, %v4111
  %v4113 = vpop.f32.mrb[0].mxu0
  %4114 = vmatprep.mubr.f32.mxu0 0.0
  %4115 = vmatmul.mubr.f32.gmra.mrb[0].mxu0 %v3731
  %v4116 = vpop.f32.mrb[0].mxu0
  %v4117 = vadd.f32 0.0, %v4116
  %v4118 = vpop.f32.mrb[0].mxu0
  %4119 = vmatprep.mubr.f32.mxu0 0.0
  %4120 = vmatmul.mubr.f32.gmra.mrb[0].mxu0 %v3734
  %v4121 = vpop.f32.mrb[0].mxu0
  %v4122 = vadd.f32 0.0, %v4121
  %v4123 = vpop.f32.mrb[0].mxu0
  %4124 = vdwg.mxu0
  %v4125 = vld [vmem:[%s2] sm:$0x1]
  %v4127 = vlaneseq
  %v4128 = vshrl.u32 %v4127, 7
  %v4129 = vsub.s32 0, %v4128
  %v4130 = vrot.slane %v4125, %v4129
  %v4132 = vmul.f32 %v3807, %v4130
  %v4133 = vmul.f32 %v3812, %v4130
  %v4134 = vmul.f32 %v3817, %v4130
  %v4135 = vmul.f32 %v3822, %v4130
  %v4136 = vmul.f32 %v3827, %v4130
  %v4137 = vmul.f32 %v3832, %v4130
  %v4138 = vmul.f32 %v3837, %v4130
  %v4139 = vmul.f32 %v3842, %v4130
  %v4140 = vmul.f32 %v3847, %v4130
  %v4141 = vmul.f32 %v3852, %v4130
  %v4142 = vmul.f32 %v3857, %v4130
  %v4143 = vmul.f32 %v3862, %v4130
  %v4144 = vmul.f32 %v3867, %v4130
  %v4145 = vmul.f32 %v3872, %v4130
  %v4146 = vmul.f32 %v3877, %v4130
  %v4147 = vmul.f32 %v3882, %v4130
  %v4148 = vmul.f32 %v3887, %v4130
  %v4149 = vmul.f32 %v3892, %v4130
  %v4150 = vmul.f32 %v3897, %v4130
  %v4151 = vmul.f32 %v3902, %v4130
  %v4152 = vmul.f32 %v3907, %v4130
  %v4153 = vmul.f32 %v3912, %v4130
  %v4154 = vmul.f32 %v3917, %v4130
  %v4155 = vmul.f32 %v3922, %v4130
  %v4156 = vmul.f32 %v3927, %v4130
  %v4157 = vmul.f32 %v3932, %v4130
  %v4158 = vmul.f32 %v3937, %v4130
  %v4159 = vmul.f32 %v3942, %v4130
  %v4160 = vmul.f32 %v3947, %v4130
  %v4161 = vmul.f32 %v3952, %v4130
  %v4162 = vmul.f32 %v3957, %v4130
  %v4163 = vmul.f32 %v3962, %v4130
  %v4164 = vmul.f32 %v3967, %v4130
  %v4165 = vmul.f32 %v3972, %v4130
  %v4166 = vmul.f32 %v3977, %v4130
  %v4167 = vmul.f32 %v3982, %v4130
  %v4168 = vmul.f32 %v3987, %v4130
  %v4169 = vmul.f32 %v3992, %v4130
  %v4170 = vmul.f32 %v3997, %v4130
  %v4171 = vmul.f32 %v4002, %v4130
  %v4172 = vmul.f32 %v4007, %v4130
  %v4173 = vmul.f32 %v4012, %v4130
  %v4174 = vmul.f32 %v4017, %v4130
  %v4175 = vmul.f32 %v4022, %v4130
  %v4176 = vmul.f32 %v4027, %v4130
  %v4177 = vmul.f32 %v4032, %v4130
  %v4178 = vmul.f32 %v4037, %v4130
  %v4179 = vmul.f32 %v4042, %v4130
  %v4180 = vmul.f32 %v4047, %v4130
  %v4181 = vmul.f32 %v4052, %v4130
  %v4182 = vmul.f32 %v4057, %v4130
  %v4183 = vmul.f32 %v4062, %v4130
  %v4184 = vmul.f32 %v4067, %v4130
  %v4185 = vmul.f32 %v4072, %v4130
  %v4186 = vmul.f32 %v4077, %v4130
  %v4187 = vmul.f32 %v4082, %v4130
  %v4188 = vmul.f32 %v4087, %v4130
  %v4189 = vmul.f32 %v4092, %v4130
  %v4190 = vmul.f32 %v4097, %v4130
  %v4191 = vmul.f32 %v4102, %v4130
  %v4192 = vmul.f32 %v4107, %v4130
  %v4193 = vmul.f32 %v4112, %v4130
  %v4194 = vmul.f32 %v4117, %v4130
  %v4195 = vmul.f32 %v4122, %v4130
  %v4196 = vld [vmem:[%s3] sm:$0x1]
  %v4198 = vlaneseq
  %v4199 = vshrl.u32 %v4198, 7
  %v4200 = vsub.s32 0, %v4199
  %v4201 = vrot.slane %v4196, %v4200
  %v4203 = vadd.f32 %v4132, %v4201
  %v4204 = vadd.f32 %v4133, %v4201
  %v4205 = vadd.f32 %v4134, %v4201
  %v4206 = vadd.f32 %v4135, %v4201
  %v4207 = vadd.f32 %v4136, %v4201
  %v4208 = vadd.f32 %v4137, %v4201
  %v4209 = vadd.f32 %v4138, %v4201
  %v4210 = vadd.f32 %v4139, %v4201
  %v4211 = vadd.f32 %v4140, %v4201
  %v4212 = vadd.f32 %v4141, %v4201
  %v4213 = vadd.f32 %v4142, %v4201
  %v4214 = vadd.f32 %v4143, %v4201
  %v4215 = vadd.f32 %v4144, %v4201
  %v4216 = vadd.f32 %v4145, %v4201
  %v4217 = vadd.f32 %v4146, %v4201
  %v4218 = vadd.f32 %v4147, %v4201
  %v4219 = vadd.f32 %v4148, %v4201
  %v4220 = vadd.f32 %v4149, %v4201
  %v4221 = vadd.f32 %v4150, %v4201
  %v4222 = vadd.f32 %v4151, %v4201
  %v4223 = vadd.f32 %v4152, %v4201
  %v4224 = vadd.f32 %v4153, %v4201
  %v4225 = vadd.f32 %v4154, %v4201
  %v4226 = vadd.f32 %v4155, %v4201
  %v4227 = vadd.f32 %v4156, %v4201
  %v4228 = vadd.f32 %v4157, %v4201
  %v4229 = vadd.f32 %v4158, %v4201
  %v4230 = vadd.f32 %v4159, %v4201
  %v4231 = vadd.f32 %v4160, %v4201
  %v4232 = vadd.f32 %v4161, %v4201
  %v4233 = vadd.f32 %v4162, %v4201
  %v4234 = vadd.f32 %v4163, %v4201
  %v4235 = vadd.f32 %v4164, %v4201
  %v4236 = vadd.f32 %v4165, %v4201
  %v4237 = vadd.f32 %v4166, %v4201
  %v4238 = vadd.f32 %v4167, %v4201
  %v4239 = vadd.f32 %v4168, %v4201
  %v4240 = vadd.f32 %v4169, %v4201
  %v4241 = vadd.f32 %v4170, %v4201
  %v4242 = vadd.f32 %v4171, %v4201
  %v4243 = vadd.f32 %v4172, %v4201
  %v4244 = vadd.f32 %v4173, %v4201
  %v4245 = vadd.f32 %v4174, %v4201
  %v4246 = vadd.f32 %v4175, %v4201
  %v4247 = vadd.f32 %v4176, %v4201
  %v4248 = vadd.f32 %v4177, %v4201
  %v4249 = vadd.f32 %v4178, %v4201
  %v4250 = vadd.f32 %v4179, %v4201
  %v4251 = vadd.f32 %v4180, %v4201
  %v4252 = vadd.f32 %v4181, %v4201
  %v4253 = vadd.f32 %v4182, %v4201
  %v4254 = vadd.f32 %v4183, %v4201
  %v4255 = vadd.f32 %v4184, %v4201
  %v4256 = vadd.f32 %v4185, %v4201
  %v4257 = vadd.f32 %v4186, %v4201
  %v4258 = vadd.f32 %v4187, %v4201
  %v4259 = vadd.f32 %v4188, %v4201
  %v4260 = vadd.f32 %v4189, %v4201
  %v4261 = vadd.f32 %v4190, %v4201
  %v4262 = vadd.f32 %v4191, %v4201
  %v4263 = vadd.f32 %v4192, %v4201
  %v4264 = vadd.f32 %v4193, %v4201
  %v4265 = vadd.f32 %v4194, %v4201
  %v4266 = vadd.f32 %v4195, %v4201
  %v4267 = vmax.f32 %v4203, 0.0
  %v4268 = vmax.f32 %v4204, 0.0
  %v4269 = vmax.f32 %v4205, 0.0
  %v4270 = vmax.f32 %v4206, 0.0
  %v4271 = vmax.f32 %v4207, 0.0
  %v4272 = vmax.f32 %v4208, 0.0
  %v4273 = vmax.f32 %v4209, 0.0
  %v4274 = vmax.f32 %v4210, 0.0
  %v4275 = vmax.f32 %v4211, 0.0
  %v4276 = vmax.f32 %v4212, 0.0
  %v4277 = vmax.f32 %v4213, 0.0
  %v4278 = vmax.f32 %v4214, 0.0
  %v4279 = vmax.f32 %v4215, 0.0
  %v4280 = vmax.f32 %v4216, 0.0
  %v4281 = vmax.f32 %v4217, 0.0
  %v4282 = vmax.f32 %v4218, 0.0
  %v4283 = vmax.f32 %v4219, 0.0
  %v4284 = vmax.f32 %v4220, 0.0
  %v4285 = vmax.f32 %v4221, 0.0
  %v4286 = vmax.f32 %v4222, 0.0
  %v4287 = vmax.f32 %v4223, 0.0
  %v4288 = vmax.f32 %v4224, 0.0
  %v4289 = vmax.f32 %v4225, 0.0
  %v4290 = vmax.f32 %v4226, 0.0
  %v4291 = vmax.f32 %v4227, 0.0
  %v4292 = vmax.f32 %v4228, 0.0
  %v4293 = vmax.f32 %v4229, 0.0
  %v4294 = vmax.f32 %v4230, 0.0
  %v4295 = vmax.f32 %v4231, 0.0
  %v4296 = vmax.f32 %v4232, 0.0
  %v4297 = vmax.f32 %v4233, 0.0
  %v4298 = vmax.f32 %v4234, 0.0
  %v4299 = vmax.f32 %v4235, 0.0
  %v4300 = vmax.f32 %v4236, 0.0
  %v4301 = vmax.f32 %v4237, 0.0
  %v4302 = vmax.f32 %v4238, 0.0
  %v4303 = vmax.f32 %v4239, 0.0
  %v4304 = vmax.f32 %v4240, 0.0
  %v4305 = vmax.f32 %v4241, 0.0
  %v4306 = vmax.f32 %v4242, 0.0
  %v4307 = vmax.f32 %v4243, 0.0
  %v4308 = vmax.f32 %v4244, 0.0
  %v4309 = vmax.f32 %v4245, 0.0
  %v4310 = vmax.f32 %v4246, 0.0
  %v4311 = vmax.f32 %v4247, 0.0
  %v4312 = vmax.f32 %v4248, 0.0
  %v4313 = vmax.f32 %v4249, 0.0
  %v4314 = vmax.f32 %v4250, 0.0
  %v4315 = vmax.f32 %v4251, 0.0
  %v4316 = vmax.f32 %v4252, 0.0
  %v4317 = vmax.f32 %v4253, 0.0
  %v4318 = vmax.f32 %v4254, 0.0
  %v4319 = vmax.f32 %v4255, 0.0
  %v4320 = vmax.f32 %v4256, 0.0
  %v4321 = vmax.f32 %v4257, 0.0
  %v4322 = vmax.f32 %v4258, 0.0
  %v4323 = vmax.f32 %v4259, 0.0
  %v4324 = vmax.f32 %v4260, 0.0
  %v4325 = vmax.f32 %v4261, 0.0
  %v4326 = vmax.f32 %v4262, 0.0
  %v4327 = vmax.f32 %v4263, 0.0
  %v4328 = vmax.f32 %v4264, 0.0
  %v4329 = vmax.f32 %v4265, 0.0
  %v4330 = vmax.f32 %v4266, 0.0
  %v4331 = vld [vmem:[%s4] sm:$0x3]
  %vm4332 = vcmask 15360
  %v4334 = vsel %vm4332, %v4267, 0
  %v4337 = vsel %vm4332, %v4268, 0
  %v4340 = vsel %vm4332, %v4269, 0
  %v4343 = vsel %vm4332, %v4270, 0
  %v4346 = vsel %vm4332, %v4271, 0
  %v4349 = vsel %vm4332, %v4272, 0
  %v4352 = vsel %vm4332, %v4273, 0
  %v4355 = vsel %vm4332, %v4274, 0
  %v4358 = vsel %vm4332, %v4275, 0
  %v4361 = vsel %vm4332, %v4276, 0
  %v4364 = vsel %vm4332, %v4277, 0
  %v4367 = vsel %vm4332, %v4278, 0
  %v4370 = vsel %vm4332, %v4279, 0
  %v4373 = vsel %vm4332, %v4280, 0
  %v4376 = vsel %vm4332, %v4281, 0
  %v4379 = vsel %vm4332, %v4282, 0
  %v4382 = vsel %vm4332, %v4283, 0
  %v4385 = vsel %vm4332, %v4284, 0
  %v4388 = vsel %vm4332, %v4285, 0
  %v4391 = vsel %vm4332, %v4286, 0
  %v4394 = vsel %vm4332, %v4287, 0
  %v4397 = vsel %vm4332, %v4288, 0
  %v4400 = vsel %vm4332, %v4289, 0
  %v4403 = vsel %vm4332, %v4290, 0
  %v4406 = vsel %vm4332, %v4291, 0
  %v4409 = vsel %vm4332, %v4292, 0
  %v4412 = vsel %vm4332, %v4293, 0
  %v4415 = vsel %vm4332, %v4294, 0
  %v4418 = vsel %vm4332, %v4295, 0
  %v4421 = vsel %vm4332, %v4296, 0
  %v4424 = vsel %vm4332, %v4297, 0
  %v4427 = vsel %vm4332, %v4298, 0
  %v4430 = vsel %vm4332, %v4299, 0
  %v4433 = vsel %vm4332, %v4300, 0
  %v4436 = vsel %vm4332, %v4301, 0
  %v4439 = vsel %vm4332, %v4302, 0
  %v4442 = vsel %vm4332, %v4303, 0
  %v4445 = vsel %vm4332, %v4304, 0
  %v4448 = vsel %vm4332, %v4305, 0
  %v4451 = vsel %vm4332, %v4306, 0
  %v4454 = vsel %vm4332, %v4307, 0
  %v4457 = vsel %vm4332, %v4308, 0
  %v4460 = vsel %vm4332, %v4309, 0
  %v4463 = vsel %vm4332, %v4310, 0
  %v4466 = vsel %vm4332, %v4311, 0
  %v4469 = vsel %vm4332, %v4312, 0
  %v4472 = vsel %vm4332, %v4313, 0
  %v4475 = vsel %vm4332, %v4314, 0
  %v4478 = vsel %vm4332, %v4315, 0
  %v4481 = vsel %vm4332, %v4316, 0
  %v4484 = vsel %vm4332, %v4317, 0
  %v4487 = vsel %vm4332, %v4318, 0
  %v4490 = vsel %vm4332, %v4319, 0
  %v4493 = vsel %vm4332, %v4320, 0
  %v4496 = vsel %vm4332, %v4321, 0
  %v4499 = vsel %vm4332, %v4322, 0
  %v4502 = vsel %vm4332, %v4323, 0
  %v4505 = vsel %vm4332, %v4324, 0
  %v4508 = vsel %vm4332, %v4325, 0
  %v4511 = vsel %vm4332, %v4326, 0
  %v4514 = vsel %vm4332, %v4327, 0
  %v4517 = vsel %vm4332, %v4328, 0
  %v4520 = vsel %vm4332, %v4329, 0
  %v4523 = vsel %vm4332, %v4330, 0
  %vm4525 = vcmask 1041408
  %v4527 = vsel %vm4525, %v4331, 0
  %4529 = vmatprep.subr.mxu0 0.0
  %4530 = vmatpush1.msra.mxu0 %v4527
  %4531 = vmatprep.subr.mxu0 0.0
  %4532 = vmatpush1.msra.mxu0 0.0
  %4533 = vmatprep.subr.mxu0 0.0
  %4534 = vmatpush1.msra.mxu0 0.0
  %4535 = vmatprep.subr.mxu0 0.0
  %4536 = vmatpush1.msra.mxu0 0.0
  %4537 = vmatprep.subr.mxu0 0.0
  %4538 = vmatpush1.msra.mxu0 0.0
  %4539 = vmatprep.subr.mxu0 0.0
  %4540 = vmatpush1.msra.mxu0 0.0
  %4541 = vmatprep.subr.mxu0 0.0
  %4542 = vmatpush1.msra.mxu0 0.0
  %4543 = vmatprep.subr.mxu0 0.0
  %4544 = vmatpush1.msra.mxu0 0.0
  %4545 = vmatprep.subr.mxu0 0.0
  %4546 = vmatpush1.msra.mxu0 0.0
  %4547 = vmatprep.subr.mxu0 0.0
  %4548 = vmatpush1.msra.mxu0 0.0
  %4549 = vmatprep.subr.mxu0 0.0
  %4550 = vmatpush1.msra.mxu0 0.0
  %4551 = vmatprep.subr.mxu0 0.0
  %4552 = vmatpush1.msra.mxu0 0.0
  %4553 = vmatprep.subr.mxu0 0.0
  %4554 = vmatpush1.msra.mxu0 0.0
  %4555 = vmatprep.subr.mxu0 0.0
  %4556 = vmatpush1.msra.mxu0 0.0
  %4557 = vmatprep.subr.mxu0 0.0
  %4558 = vmatpush1.msra.mxu0 0.0
  %4559 = vmatprep.subr.mxu0 0.0
  %4560 = vmatpush1.msra.mxu0 0.0
  %4561 = vmatprep.subr.mxu0 0.0
  %4562 = vmatpush1.msra.mxu0 0.0
  %4563 = vmatprep.subr.mxu0 0.0
  %4564 = vmatpush1.msra.mxu0 0.0
  %4565 = vmatprep.subr.mxu0 0.0
  %4566 = vmatpush1.msra.mxu0 0.0
  %4567 = vmatprep.subr.mxu0 0.0
  %4568 = vmatpush1.msra.mxu0 0.0
  %4569 = vmatprep.subr.mxu0 0.0
  %4570 = vmatpush1.msra.mxu0 0.0
  %4571 = vmatprep.subr.mxu0 0.0
  %4572 = vmatpush1.msra.mxu0 0.0
  %4573 = vmatprep.subr.mxu0 0.0
  %4574 = vmatpush1.msra.mxu0 0.0
  %4575 = vmatprep.subr.mxu0 0.0
  %4576 = vmatpush1.msra.mxu0 0.0
  %4577 = vmatprep.subr.mxu0 0.0
  %4578 = vmatpush1.msra.mxu0 0.0
  %4579 = vmatprep.subr.mxu0 0.0
  %4580 = vmatpush1.msra.mxu0 0.0
  %4581 = vmatprep.subr.mxu0 0.0
  %4582 = vmatpush1.msra.mxu0 0.0
  %4583 = vmatprep.subr.mxu0 0.0
  %4584 = vmatpush1.msra.mxu0 0.0
  %4585 = vmatprep.subr.mxu0 0.0
  %4586 = vmatpush1.msra.mxu0 0.0
  %4587 = vmatprep.subr.mxu0 0.0
  %4588 = vmatpush1.msra.mxu0 0.0
  %4589 = vmatprep.subr.mxu0 0.0
  %4590 = vmatpush1.msra.mxu0 0.0
  %4591 = vmatprep.subr.mxu0 0.0
  %4592 = vmatpush1.msra.mxu0 0.0
  %4593 = vmatprep.mubr.f32.mxu0 0.0
  %4594 = vmatmul.mubr.f32.gmra.mrb[0].mxu0 %v4334
  %v4595 = vpop.f32.mrb[0].mxu0
  %v4596 = vadd.f32 0.0, %v4595
  %v4597 = vpop.f32.mrb[0].mxu0
  %4598 = vmatprep.mubr.f32.mxu0 0.0
  %4599 = vmatmul.mubr.f32.gmra.mrb[0].mxu0 %v4337
  %v4600 = vpop.f32.mrb[0].mxu0
  %v4601 = vadd.f32 0.0, %v4600
  %v4602 = vpop.f32.mrb[0].mxu0
  %4603 = vmatprep.mubr.f32.mxu0 0.0
  %4604 = vmatmul.mubr.f32.gmra.mrb[0].mxu0 %v4340
  %v4605 = vpop.f32.mrb[0].mxu0
  %v4606 = vadd.f32 0.0, %v4605
  %v4607 = vpop.f32.mrb[0].mxu0
  %4608 = vmatprep.mubr.f32.mxu0 0.0
  %4609 = vmatmul.mubr.f32.gmra.mrb[0].mxu0 %v4343
  %v4610 = vpop.f32.mrb[0].mxu0
  %v4611 = vadd.f32 0.0, %v4610
  %v4612 = vpop.f32.mrb[0].mxu0
  %4613 = vmatprep.mubr.f32.mxu0 0.0
  %4614 = vmatmul.mubr.f32.gmra.mrb[0].mxu0 %v4346
  %v4615 = vpop.f32.mrb[0].mxu0
  %v4616 = vadd.f32 0.0, %v4615
  %v4617 = vpop.f32.mrb[0].mxu0
  %4618 = vmatprep.mubr.f32.mxu0 0.0
  %4619 = vmatmul.mubr.f32.gmra.mrb[0].mxu0 %v4349
  %v4620 = vpop.f32.mrb[0].mxu0
  %v4621 = vadd.f32 0.0, %v4620
  %v4622 = vpop.f32.mrb[0].mxu0
  %4623 = vmatprep.mubr.f32.mxu0 0.0
  %4624 = vmatmul.mubr.f32.gmra.mrb[0].mxu0 %v4352
  %v4625 = vpop.f32.mrb[0].mxu0
  %v4626 = vadd.f32 0.0, %v4625
  %v4627 = vpop.f32.mrb[0].mxu0
  %4628 = vmatprep.mubr.f32.mxu0 0.0
  %4629 = vmatmul.mubr.f32.gmra.mrb[0].mxu0 %v4355
  %v4630 = vpop.f32.mrb[0].mxu0
  %v4631 = vadd.f32 0.0, %v4630
  %v4632 = vpop.f32.mrb[0].mxu0
  %4633 = vmatprep.mubr.f32.mxu0 0.0
  %4634 = vmatmul.mubr.f32.gmra.mrb[0].mxu0 %v4358
  %v4635 = vpop.f32.mrb[0].mxu0
  %v4636 = vadd.f32 0.0, %v4635
  %v4637 = vpop.f32.mrb[0].mxu0
  %4638 = vmatprep.mubr.f32.mxu0 0.0
  %4639 = vmatmul.mubr.f32.gmra.mrb[0].mxu0 %v4361
  %v4640 = vpop.f32.mrb[0].mxu0
  %v4641 = vadd.f32 0.0, %v4640
  %v4642 = vpop.f32.mrb[0].mxu0
  %4643 = vmatprep.mubr.f32.mxu0 0.0
  %4644 = vmatmul.mubr.f32.gmra.mrb[0].mxu0 %v4364
  %v4645 = vpop.f32.mrb[0].mxu0
  %v4646 = vadd.f32 0.0, %v4645
  %v4647 = vpop.f32.mrb[0].mxu0
  %4648 = vmatprep.mubr.f32.mxu0 0.0
  %4649 = vmatmul.mubr.f32.gmra.mrb[0].mxu0 %v4367
  %v4650 = vpop.f32.mrb[0].mxu0
  %v4651 = vadd.f32 0.0, %v4650
  %v4652 = vpop.f32.mrb[0].mxu0
  %4653 = vmatprep.mubr.f32.mxu0 0.0
  %4654 = vmatmul.mubr.f32.gmra.mrb[0].mxu0 %v4370
  %v4655 = vpop.f32.mrb[0].mxu0
  %v4656 = vadd.f32 0.0, %v4655
  %v4657 = vpop.f32.mrb[0].mxu0
  %4658 = vmatprep.mubr.f32.mxu0 0.0
  %4659 = vmatmul.mubr.f32.gmra.mrb[0].mxu0 %v4373
  %v4660 = vpop.f32.mrb[0].mxu0
  %v4661 = vadd.f32 0.0, %v4660
  %v4662 = vpop.f32.mrb[0].mxu0
  %4663 = vmatprep.mubr.f32.mxu0 0.0
  %4664 = vmatmul.mubr.f32.gmra.mrb[0].mxu0 %v4376
  %v4665 = vpop.f32.mrb[0].mxu0
  %v4666 = vadd.f32 0.0, %v4665
  %v4667 = vpop.f32.mrb[0].mxu0
  %4668 = vmatprep.mubr.f32.mxu0 0.0
  %4669 = vmatmul.mubr.f32.gmra.mrb[0].mxu0 %v4379
  %v4670 = vpop.f32.mrb[0].mxu0
  %v4671 = vadd.f32 0.0, %v4670
  %v4672 = vpop.f32.mrb[0].mxu0
  %4673 = vmatprep.mubr.f32.mxu0 0.0
  %4674 = vmatmul.mubr.f32.gmra.mrb[0].mxu0 %v4382
  %v4675 = vpop.f32.mrb[0].mxu0
  %v4676 = vadd.f32 0.0, %v4675
  %v4677 = vpop.f32.mrb[0].mxu0
  %4678 = vmatprep.mubr.f32.mxu0 0.0
  %4679 = vmatmul.mubr.f32.gmra.mrb[0].mxu0 %v4385
  %v4680 = vpop.f32.mrb[0].mxu0
  %v4681 = vadd.f32 0.0, %v4680
  %v4682 = vpop.f32.mrb[0].mxu0
  %4683 = vmatprep.mubr.f32.mxu0 0.0
  %4684 = vmatmul.mubr.f32.gmra.mrb[0].mxu0 %v4388
  %v4685 = vpop.f32.mrb[0].mxu0
  %v4686 = vadd.f32 0.0, %v4685
  %v4687 = vpop.f32.mrb[0].mxu0
  %4688 = vmatprep.mubr.f32.mxu0 0.0
  %4689 = vmatmul.mubr.f32.gmra.mrb[0].mxu0 %v4391
  %v4690 = vpop.f32.mrb[0].mxu0
  %v4691 = vadd.f32 0.0, %v4690
  %v4692 = vpop.f32.mrb[0].mxu0
  %4693 = vmatprep.mubr.f32.mxu0 0.0
  %4694 = vmatmul.mubr.f32.gmra.mrb[0].mxu0 %v4394
  %v4695 = vpop.f32.mrb[0].mxu0
  %v4696 = vadd.f32 0.0, %v4695
  %v4697 = vpop.f32.mrb[0].mxu0
  %4698 = vmatprep.mubr.f32.mxu0 0.0
  %4699 = vmatmul.mubr.f32.gmra.mrb[0].mxu0 %v4397
  %v4700 = vpop.f32.mrb[0].mxu0
  %v4701 = vadd.f32 0.0, %v4700
  %v4702 = vpop.f32.mrb[0].mxu0
  %4703 = vmatprep.mubr.f32.mxu0 0.0
  %4704 = vmatmul.mubr.f32.gmra.mrb[0].mxu0 %v4400
  %v4705 = vpop.f32.mrb[0].mxu0
  %v4706 = vadd.f32 0.0, %v4705
  %v4707 = vpop.f32.mrb[0].mxu0
  %4708 = vmatprep.mubr.f32.mxu0 0.0
  %4709 = vmatmul.mubr.f32.gmra.mrb[0].mxu0 %v4403
  %v4710 = vpop.f32.mrb[0].mxu0
  %v4711 = vadd.f32 0.0, %v4710
  %v4712 = vpop.f32.mrb[0].mxu0
  %4713 = vmatprep.mubr.f32.mxu0 0.0
  %4714 = vmatmul.mubr.f32.gmra.mrb[0].mxu0 %v4406
  %v4715 = vpop.f32.mrb[0].mxu0
  %v4716 = vadd.f32 0.0, %v4715
  %v4717 = vpop.f32.mrb[0].mxu0
  %4718 = vmatprep.mubr.f32.mxu0 0.0
  %4719 = vmatmul.mubr.f32.gmra.mrb[0].mxu0 %v4409
  %v4720 = vpop.f32.mrb[0].mxu0
  %v4721 = vadd.f32 0.0, %v4720
  %v4722 = vpop.f32.mrb[0].mxu0
  %4723 = vmatprep.mubr.f32.mxu0 0.0
  %4724 = vmatmul.mubr.f32.gmra.mrb[0].mxu0 %v4412
  %v4725 = vpop.f32.mrb[0].mxu0
  %v4726 = vadd.f32 0.0, %v4725
  %v4727 = vpop.f32.mrb[0].mxu0
  %4728 = vmatprep.mubr.f32.mxu0 0.0
  %4729 = vmatmul.mubr.f32.gmra.mrb[0].mxu0 %v4415
  %v4730 = vpop.f32.mrb[0].mxu0
  %v4731 = vadd.f32 0.0, %v4730
  %v4732 = vpop.f32.mrb[0].mxu0
  %4733 = vmatprep.mubr.f32.mxu0 0.0
  %4734 = vmatmul.mubr.f32.gmra.mrb[0].mxu0 %v4418
  %v4735 = vpop.f32.mrb[0].mxu0
  %v4736 = vadd.f32 0.0, %v4735
  %v4737 = vpop.f32.mrb[0].mxu0
  %4738 = vmatprep.mubr.f32.mxu0 0.0
  %4739 = vmatmul.mubr.f32.gmra.mrb[0].mxu0 %v4421
  %v4740 = vpop.f32.mrb[0].mxu0
  %v4741 = vadd.f32 0.0, %v4740
  %v4742 = vpop.f32.mrb[0].mxu0
  %4743 = vmatprep.mubr.f32.mxu0 0.0
  %4744 = vmatmul.mubr.f32.gmra.mrb[0].mxu0 %v4424
  %v4745 = vpop.f32.mrb[0].mxu0
  %v4746 = vadd.f32 0.0, %v4745
  %v4747 = vpop.f32.mrb[0].mxu0
  %4748 = vmatprep.mubr.f32.mxu0 0.0
  %4749 = vmatmul.mubr.f32.gmra.mrb[0].mxu0 %v4427
  %v4750 = vpop.f32.mrb[0].mxu0
  %v4751 = vadd.f32 0.0, %v4750
  %v4752 = vpop.f32.mrb[0].mxu0
  %4753 = vmatprep.mubr.f32.mxu0 0.0
  %4754 = vmatmul.mubr.f32.gmra.mrb[0].mxu0 %v4430
  %v4755 = vpop.f32.mrb[0].mxu0
  %v4756 = vadd.f32 0.0, %v4755
  %v4757 = vpop.f32.mrb[0].mxu0
  %4758 = vmatprep.mubr.f32.mxu0 0.0
  %4759 = vmatmul.mubr.f32.gmra.mrb[0].mxu0 %v4433
  %v4760 = vpop.f32.mrb[0].mxu0
  %v4761 = vadd.f32 0.0, %v4760
  %v4762 = vpop.f32.mrb[0].mxu0
  %4763 = vmatprep.mubr.f32.mxu0 0.0
  %4764 = vmatmul.mubr.f32.gmra.mrb[0].mxu0 %v4436
  %v4765 = vpop.f32.mrb[0].mxu0
  %v4766 = vadd.f32 0.0, %v4765
  %v4767 = vpop.f32.mrb[0].mxu0
  %4768 = vmatprep.mubr.f32.mxu0 0.0
  %4769 = vmatmul.mubr.f32.gmra.mrb[0].mxu0 %v4439
  %v4770 = vpop.f32.mrb[0].mxu0
  %v4771 = vadd.f32 0.0, %v4770
  %v4772 = vpop.f32.mrb[0].mxu0
  %4773 = vmatprep.mubr.f32.mxu0 0.0
  %4774 = vmatmul.mubr.f32.gmra.mrb[0].mxu0 %v4442
  %v4775 = vpop.f32.mrb[0].mxu0
  %v4776 = vadd.f32 0.0, %v4775
  %v4777 = vpop.f32.mrb[0].mxu0
  %4778 = vmatprep.mubr.f32.mxu0 0.0
  %4779 = vmatmul.mubr.f32.gmra.mrb[0].mxu0 %v4445
  %v4780 = vpop.f32.mrb[0].mxu0
  %v4781 = vadd.f32 0.0, %v4780
  %v4782 = vpop.f32.mrb[0].mxu0
  %4783 = vmatprep.mubr.f32.mxu0 0.0
  %4784 = vmatmul.mubr.f32.gmra.mrb[0].mxu0 %v4448
  %v4785 = vpop.f32.mrb[0].mxu0
  %v4786 = vadd.f32 0.0, %v4785
  %v4787 = vpop.f32.mrb[0].mxu0
  %4788 = vmatprep.mubr.f32.mxu0 0.0
  %4789 = vmatmul.mubr.f32.gmra.mrb[0].mxu0 %v4451
  %v4790 = vpop.f32.mrb[0].mxu0
  %v4791 = vadd.f32 0.0, %v4790
  %v4792 = vpop.f32.mrb[0].mxu0
  %4793 = vmatprep.mubr.f32.mxu0 0.0
  %4794 = vmatmul.mubr.f32.gmra.mrb[0].mxu0 %v4454
  %v4795 = vpop.f32.mrb[0].mxu0
  %v4796 = vadd.f32 0.0, %v4795
  %v4797 = vpop.f32.mrb[0].mxu0
  %4798 = vmatprep.mubr.f32.mxu0 0.0
  %4799 = vmatmul.mubr.f32.gmra.mrb[0].mxu0 %v4457
  %v4800 = vpop.f32.mrb[0].mxu0
  %v4801 = vadd.f32 0.0, %v4800
  %v4802 = vpop.f32.mrb[0].mxu0
  %4803 = vmatprep.mubr.f32.mxu0 0.0
  %4804 = vmatmul.mubr.f32.gmra.mrb[0].mxu0 %v4460
  %v4805 = vpop.f32.mrb[0].mxu0
  %v4806 = vadd.f32 0.0, %v4805
  %v4807 = vpop.f32.mrb[0].mxu0
  %4808 = vmatprep.mubr.f32.mxu0 0.0
  %4809 = vmatmul.mubr.f32.gmra.mrb[0].mxu0 %v4463
  %v4810 = vpop.f32.mrb[0].mxu0
  %v4811 = vadd.f32 0.0, %v4810
  %v4812 = vpop.f32.mrb[0].mxu0
  %4813 = vmatprep.mubr.f32.mxu0 0.0
  %4814 = vmatmul.mubr.f32.gmra.mrb[0].mxu0 %v4466
  %v4815 = vpop.f32.mrb[0].mxu0
  %v4816 = vadd.f32 0.0, %v4815
  %v4817 = vpop.f32.mrb[0].mxu0
  %4818 = vmatprep.mubr.f32.mxu0 0.0
  %4819 = vmatmul.mubr.f32.gmra.mrb[0].mxu0 %v4469
  %v4820 = vpop.f32.mrb[0].mxu0
  %v4821 = vadd.f32 0.0, %v4820
  %v4822 = vpop.f32.mrb[0].mxu0
  %4823 = vmatprep.mubr.f32.mxu0 0.0
  %4824 = vmatmul.mubr.f32.gmra.mrb[0].mxu0 %v4472
  %v4825 = vpop.f32.mrb[0].mxu0
  %v4826 = vadd.f32 0.0, %v4825
  %v4827 = vpop.f32.mrb[0].mxu0
  %4828 = vmatprep.mubr.f32.mxu0 0.0
  %4829 = vmatmul.mubr.f32.gmra.mrb[0].mxu0 %v4475
  %v4830 = vpop.f32.mrb[0].mxu0
  %v4831 = vadd.f32 0.0, %v4830
  %v4832 = vpop.f32.mrb[0].mxu0
  %4833 = vmatprep.mubr.f32.mxu0 0.0
  %4834 = vmatmul.mubr.f32.gmra.mrb[0].mxu0 %v4478
  %v4835 = vpop.f32.mrb[0].mxu0
  %v4836 = vadd.f32 0.0, %v4835
  %v4837 = vpop.f32.mrb[0].mxu0
  %4838 = vmatprep.mubr.f32.mxu0 0.0
  %4839 = vmatmul.mubr.f32.gmra.mrb[0].mxu0 %v4481
  %v4840 = vpop.f32.mrb[0].mxu0
  %v4841 = vadd.f32 0.0, %v4840
  %v4842 = vpop.f32.mrb[0].mxu0
  %4843 = vmatprep.mubr.f32.mxu0 0.0
  %4844 = vmatmul.mubr.f32.gmra.mrb[0].mxu0 %v4484
  %v4845 = vpop.f32.mrb[0].mxu0
  %v4846 = vadd.f32 0.0, %v4845
  %v4847 = vpop.f32.mrb[0].mxu0
  %4848 = vmatprep.mubr.f32.mxu0 0.0
  %4849 = vmatmul.mubr.f32.gmra.mrb[0].mxu0 %v4487
  %v4850 = vpop.f32.mrb[0].mxu0
  %v4851 = vadd.f32 0.0, %v4850
  %v4852 = vpop.f32.mrb[0].mxu0
  %4853 = vmatprep.mubr.f32.mxu0 0.0
  %4854 = vmatmul.mubr.f32.gmra.mrb[0].mxu0 %v4490
  %v4855 = vpop.f32.mrb[0].mxu0
  %v4856 = vadd.f32 0.0, %v4855
  %v4857 = vpop.f32.mrb[0].mxu0
  %4858 = vmatprep.mubr.f32.mxu0 0.0
  %4859 = vmatmul.mubr.f32.gmra.mrb[0].mxu0 %v4493
  %v4860 = vpop.f32.mrb[0].mxu0
  %v4861 = vadd.f32 0.0, %v4860
  %v4862 = vpop.f32.mrb[0].mxu0
  %4863 = vmatprep.mubr.f32.mxu0 0.0
  %4864 = vmatmul.mubr.f32.gmra.mrb[0].mxu0 %v4496
  %v4865 = vpop.f32.mrb[0].mxu0
  %v4866 = vadd.f32 0.0, %v4865
  %v4867 = vpop.f32.mrb[0].mxu0
  %4868 = vmatprep.mubr.f32.mxu0 0.0
  %4869 = vmatmul.mubr.f32.gmra.mrb[0].mxu0 %v4499
  %v4870 = vpop.f32.mrb[0].mxu0
  %v4871 = vadd.f32 0.0, %v4870
  %v4872 = vpop.f32.mrb[0].mxu0
  %4873 = vmatprep.mubr.f32.mxu0 0.0
  %4874 = vmatmul.mubr.f32.gmra.mrb[0].mxu0 %v4502
  %v4875 = vpop.f32.mrb[0].mxu0
  %v4876 = vadd.f32 0.0, %v4875
  %v4877 = vpop.f32.mrb[0].mxu0
  %4878 = vmatprep.mubr.f32.mxu0 0.0
  %4879 = vmatmul.mubr.f32.gmra.mrb[0].mxu0 %v4505
  %v4880 = vpop.f32.mrb[0].mxu0
  %v4881 = vadd.f32 0.0, %v4880
  %v4882 = vpop.f32.mrb[0].mxu0
  %4883 = vmatprep.mubr.f32.mxu0 0.0
  %4884 = vmatmul.mubr.f32.gmra.mrb[0].mxu0 %v4508
  %v4885 = vpop.f32.mrb[0].mxu0
  %v4886 = vadd.f32 0.0, %v4885
  %v4887 = vpop.f32.mrb[0].mxu0
  %4888 = vmatprep.mubr.f32.mxu0 0.0
  %4889 = vmatmul.mubr.f32.gmra.mrb[0].mxu0 %v4511
  %v4890 = vpop.f32.mrb[0].mxu0
  %v4891 = vadd.f32 0.0, %v4890
  %v4892 = vpop.f32.mrb[0].mxu0
  %4893 = vmatprep.mubr.f32.mxu0 0.0
  %4894 = vmatmul.mubr.f32.gmra.mrb[0].mxu0 %v4514
  %v4895 = vpop.f32.mrb[0].mxu0
  %v4896 = vadd.f32 0.0, %v4895
  %v4897 = vpop.f32.mrb[0].mxu0
  %4898 = vmatprep.mubr.f32.mxu0 0.0
  %4899 = vmatmul.mubr.f32.gmra.mrb[0].mxu0 %v4517
  %v4900 = vpop.f32.mrb[0].mxu0
  %v4901 = vadd.f32 0.0, %v4900
  %v4902 = vpop.f32.mrb[0].mxu0
  %4903 = vmatprep.mubr.f32.mxu0 0.0
  %4904 = vmatmul.mubr.f32.gmra.mrb[0].mxu0 %v4520
  %v4905 = vpop.f32.mrb[0].mxu0
  %v4906 = vadd.f32 0.0, %v4905
  %v4907 = vpop.f32.mrb[0].mxu0
  %4908 = vmatprep.mubr.f32.mxu0 0.0
  %4909 = vmatmul.mubr.f32.gmra.mrb[0].mxu0 %v4523
  %v4910 = vpop.f32.mrb[0].mxu0
  %v4911 = vadd.f32 0.0, %v4910
  %v4912 = vpop.f32.mrb[0].mxu0
  %4913 = vdwg.mxu0
  %v4914 = vld [vmem:[%s5] sm:$0x1]
  %v4916 = vlaneseq
  %v4917 = vshrl.u32 %v4916, 7
  %v4918 = vsub.s32 0, %v4917
  %v4919 = vrot.slane %v4914, %v4918
  %v4921 = vmul.f32 %v4596, %v4919
  %v4922 = vmul.f32 %v4601, %v4919
  %v4923 = vmul.f32 %v4606, %v4919
  %v4924 = vmul.f32 %v4611, %v4919
  %v4925 = vmul.f32 %v4616, %v4919
  %v4926 = vmul.f32 %v4621, %v4919
  %v4927 = vmul.f32 %v4626, %v4919
  %v4928 = vmul.f32 %v4631, %v4919
  %v4929 = vmul.f32 %v4636, %v4919
  %v4930 = vmul.f32 %v4641, %v4919
  %v4931 = vmul.f32 %v4646, %v4919
  %v4932 = vmul.f32 %v4651, %v4919
  %v4933 = vmul.f32 %v4656, %v4919
  %v4934 = vmul.f32 %v4661, %v4919
  %v4935 = vmul.f32 %v4666, %v4919
  %v4936 = vmul.f32 %v4671, %v4919
  %v4937 = vmul.f32 %v4676, %v4919
  %v4938 = vmul.f32 %v4681, %v4919
  %v4939 = vmul.f32 %v4686, %v4919
  %v4940 = vmul.f32 %v4691, %v4919
  %v4941 = vmul.f32 %v4696, %v4919
  %v4942 = vmul.f32 %v4701, %v4919
  %v4943 = vmul.f32 %v4706, %v4919
  %v4944 = vmul.f32 %v4711, %v4919
  %v4945 = vmul.f32 %v4716, %v4919
  %v4946 = vmul.f32 %v4721, %v4919
  %v4947 = vmul.f32 %v4726, %v4919
  %v4948 = vmul.f32 %v4731, %v4919
  %v4949 = vmul.f32 %v4736, %v4919
  %v4950 = vmul.f32 %v4741, %v4919
  %v4951 = vmul.f32 %v4746, %v4919
  %v4952 = vmul.f32 %v4751, %v4919
  %v4953 = vmul.f32 %v4756, %v4919
  %v4954 = vmul.f32 %v4761, %v4919
  %v4955 = vmul.f32 %v4766, %v4919
  %v4956 = vmul.f32 %v4771, %v4919
  %v4957 = vmul.f32 %v4776, %v4919
  %v4958 = vmul.f32 %v4781, %v4919
  %v4959 = vmul.f32 %v4786, %v4919
  %v4960 = vmul.f32 %v4791, %v4919
  %v4961 = vmul.f32 %v4796, %v4919
  %v4962 = vmul.f32 %v4801, %v4919
  %v4963 = vmul.f32 %v4806, %v4919
  %v4964 = vmul.f32 %v4811, %v4919
  %v4965 = vmul.f32 %v4816, %v4919
  %v4966 = vmul.f32 %v4821, %v4919
  %v4967 = vmul.f32 %v4826, %v4919
  %v4968 = vmul.f32 %v4831, %v4919
  %v4969 = vmul.f32 %v4836, %v4919
  %v4970 = vmul.f32 %v4841, %v4919
  %v4971 = vmul.f32 %v4846, %v4919
  %v4972 = vmul.f32 %v4851, %v4919
  %v4973 = vmul.f32 %v4856, %v4919
  %v4974 = vmul.f32 %v4861, %v4919
  %v4975 = vmul.f32 %v4866, %v4919
  %v4976 = vmul.f32 %v4871, %v4919
  %v4977 = vmul.f32 %v4876, %v4919
  %v4978 = vmul.f32 %v4881, %v4919
  %v4979 = vmul.f32 %v4886, %v4919
  %v4980 = vmul.f32 %v4891, %v4919
  %v4981 = vmul.f32 %v4896, %v4919
  %v4982 = vmul.f32 %v4901, %v4919
  %v4983 = vmul.f32 %v4906, %v4919
  %v4984 = vmul.f32 %v4911, %v4919
  %v4985 = vld [vmem:[%s6] sm:$0x1]
  %v4987 = vlaneseq
  %v4988 = vshrl.u32 %v4987, 7
  %v4989 = vsub.s32 0, %v4988
  %v4990 = vrot.slane %v4985, %v4989
  %v4992 = vadd.f32 %v4921, %v4990
  %v4993 = vadd.f32 %v4922, %v4990
  %v4994 = vadd.f32 %v4923, %v4990
  %v4995 = vadd.f32 %v4924, %v4990
  %v4996 = vadd.f32 %v4925, %v4990
  %v4997 = vadd.f32 %v4926, %v4990
  %v4998 = vadd.f32 %v4927, %v4990
  %v4999 = vadd.f32 %v4928, %v4990
  %v5000 = vadd.f32 %v4929, %v4990
  %v5001 = vadd.f32 %v4930, %v4990
  %v5002 = vadd.f32 %v4931, %v4990
  %v5003 = vadd.f32 %v4932, %v4990
  %v5004 = vadd.f32 %v4933, %v4990
  %v5005 = vadd.f32 %v4934, %v4990
  %v5006 = vadd.f32 %v4935, %v4990
  %v5007 = vadd.f32 %v4936, %v4990
  %v5008 = vadd.f32 %v4937, %v4990
  %v5009 = vadd.f32 %v4938, %v4990
  %v5010 = vadd.f32 %v4939, %v4990
  %v5011 = vadd.f32 %v4940, %v4990
  %v5012 = vadd.f32 %v4941, %v4990
  %v5013 = vadd.f32 %v4942, %v4990
  %v5014 = vadd.f32 %v4943, %v4990
  %v5015 = vadd.f32 %v4944, %v4990
  %v5016 = vadd.f32 %v4945, %v4990
  %v5017 = vadd.f32 %v4946, %v4990
  %v5018 = vadd.f32 %v4947, %v4990
  %v5019 = vadd.f32 %v4948, %v4990
  %v5020 = vadd.f32 %v4949, %v4990
  %v5021 = vadd.f32 %v4950, %v4990
  %v5022 = vadd.f32 %v4951, %v4990
  %v5023 = vadd.f32 %v4952, %v4990
  %v5024 = vadd.f32 %v4953, %v4990
  %v5025 = vadd.f32 %v4954, %v4990
  %v5026 = vadd.f32 %v4955, %v4990
  %v5027 = vadd.f32 %v4956, %v4990
  %v5028 = vadd.f32 %v4957, %v4990
  %v5029 = vadd.f32 %v4958, %v4990
  %v5030 = vadd.f32 %v4959, %v4990
  %v5031 = vadd.f32 %v4960, %v4990
  %v5032 = vadd.f32 %v4961, %v4990
  %v5033 = vadd.f32 %v4962, %v4990
  %v5034 = vadd.f32 %v4963, %v4990
  %v5035 = vadd.f32 %v4964, %v4990
  %v5036 = vadd.f32 %v4965, %v4990
  %v5037 = vadd.f32 %v4966, %v4990
  %v5038 = vadd.f32 %v4967, %v4990
  %v5039 = vadd.f32 %v4968, %v4990
  %v5040 = vadd.f32 %v4969, %v4990
  %v5041 = vadd.f32 %v4970, %v4990
  %v5042 = vadd.f32 %v4971, %v4990
  %v5043 = vadd.f32 %v4972, %v4990
  %v5044 = vadd.f32 %v4973, %v4990
  %v5045 = vadd.f32 %v4974, %v4990
  %v5046 = vadd.f32 %v4975, %v4990
  %v5047 = vadd.f32 %v4976, %v4990
  %v5048 = vadd.f32 %v4977, %v4990
  %v5049 = vadd.f32 %v4978, %v4990
  %v5050 = vadd.f32 %v4979, %v4990
  %v5051 = vadd.f32 %v4980, %v4990
  %v5052 = vadd.f32 %v4981, %v4990
  %v5053 = vadd.f32 %v4982, %v4990
  %v5054 = vadd.f32 %v4983, %v4990
  %v5055 = vadd.f32 %v4984, %v4990
  %v5056 = vmax.f32 %v4992, 0.0
  %v5057 = vmax.f32 %v4993, 0.0
  %v5058 = vmax.f32 %v4994, 0.0
  %v5059 = vmax.f32 %v4995, 0.0
  %v5060 = vmax.f32 %v4996, 0.0
  %v5061 = vmax.f32 %v4997, 0.0
  %v5062 = vmax.f32 %v4998, 0.0
  %v5063 = vmax.f32 %v4999, 0.0
  %v5064 = vmax.f32 %v5000, 0.0
  %v5065 = vmax.f32 %v5001, 0.0
  %v5066 = vmax.f32 %v5002, 0.0
  %v5067 = vmax.f32 %v5003, 0.0
  %v5068 = vmax.f32 %v5004, 0.0
  %v5069 = vmax.f32 %v5005, 0.0
  %v5070 = vmax.f32 %v5006, 0.0
  %v5071 = vmax.f32 %v5007, 0.0
  %v5072 = vmax.f32 %v5008, 0.0
  %v5073 = vmax.f32 %v5009, 0.0
  %v5074 = vmax.f32 %v5010, 0.0
  %v5075 = vmax.f32 %v5011, 0.0
  %v5076 = vmax.f32 %v5012, 0.0
  %v5077 = vmax.f32 %v5013, 0.0
  %v5078 = vmax.f32 %v5014, 0.0
  %v5079 = vmax.f32 %v5015, 0.0
  %v5080 = vmax.f32 %v5016, 0.0
  %v5081 = vmax.f32 %v5017, 0.0
  %v5082 = vmax.f32 %v5018, 0.0
  %v5083 = vmax.f32 %v5019, 0.0
  %v5084 = vmax.f32 %v5020, 0.0
  %v5085 = vmax.f32 %v5021, 0.0
  %v5086 = vmax.f32 %v5022, 0.0
  %v5087 = vmax.f32 %v5023, 0.0
  %v5088 = vmax.f32 %v5024, 0.0
  %v5089 = vmax.f32 %v5025, 0.0
  %v5090 = vmax.f32 %v5026, 0.0
  %v5091 = vmax.f32 %v5027, 0.0
  %v5092 = vmax.f32 %v5028, 0.0
  %v5093 = vmax.f32 %v5029, 0.0
  %v5094 = vmax.f32 %v5030, 0.0
  %v5095 = vmax.f32 %v5031, 0.0
  %v5096 = vmax.f32 %v5032, 0.0
  %v5097 = vmax.f32 %v5033, 0.0
  %v5098 = vmax.f32 %v5034, 0.0
  %v5099 = vmax.f32 %v5035, 0.0
  %v5100 = vmax.f32 %v5036, 0.0
  %v5101 = vmax.f32 %v5037, 0.0
  %v5102 = vmax.f32 %v5038, 0.0
  %v5103 = vmax.f32 %v5039, 0.0
  %v5104 = vmax.f32 %v5040, 0.0
  %v5105 = vmax.f32 %v5041, 0.0
  %v5106 = vmax.f32 %v5042, 0.0
  %v5107 = vmax.f32 %v5043, 0.0
  %v5108 = vmax.f32 %v5044, 0.0
  %v5109 = vmax.f32 %v5045, 0.0
  %v5110 = vmax.f32 %v5046, 0.0
  %v5111 = vmax.f32 %v5047, 0.0
  %v5112 = vmax.f32 %v5048, 0.0
  %v5113 = vmax.f32 %v5049, 0.0
  %v5114 = vmax.f32 %v5050, 0.0
  %v5115 = vmax.f32 %v5051, 0.0
  %v5116 = vmax.f32 %v5052, 0.0
  %v5117 = vmax.f32 %v5053, 0.0
  %v5118 = vmax.f32 %v5054, 0.0
  %v5119 = vmax.f32 %v5055, 0.0
  %5120 = vst.msk [vmem:[%s7] sm:$0xff] %vm4332, %v4267
  %5121 = vst.msk [vmem:[%s7 + $0x8] sm:$0xff] %vm4332, %v4268
  %5122 = vst.msk [vmem:[%s7 + $0x10] sm:$0xff] %vm4332, %v4269
  %5123 = vst.msk [vmem:[%s7 + $0x18] sm:$0xff] %vm4332, %v4270
  %5124 = vst.msk [vmem:[%s7 + $0x20] sm:$0xff] %vm4332, %v4271
  %5125 = vst.msk [vmem:[%s7 + $0x28] sm:$0xff] %vm4332, %v4272
  %5126 = vst.msk [vmem:[%s7 + $0x30] sm:$0xff] %vm4332, %v4273
  %5127 = vst.msk [vmem:[%s7 + $0x38] sm:$0xff] %vm4332, %v4274
  %5128 = vst.msk [vmem:[%s7 + $0x40] sm:$0xff] %vm4332, %v4275
  %5129 = vst.msk [vmem:[%s7 + $0x48] sm:$0xff] %vm4332, %v4276
  %5130 = vst.msk [vmem:[%s7 + $0x50] sm:$0xff] %vm4332, %v4277
  %5131 = vst.msk [vmem:[%s7 + $0x58] sm:$0xff] %vm4332, %v4278
  %5132 = vst.msk [vmem:[%s7 + $0x60] sm:$0xff] %vm4332, %v4279
  %5133 = vst.msk [vmem:[%s7 + $0x68] sm:$0xff] %vm4332, %v4280
  %5134 = vst.msk [vmem:[%s7 + $0x70] sm:$0xff] %vm4332, %v4281
  %5135 = vst.msk [vmem:[%s7 + $0x78] sm:$0xff] %vm4332, %v4282
  %5136 = vst.msk [vmem:[%s7 + $0x80] sm:$0xff] %vm4332, %v4283
  %5137 = vst.msk [vmem:[%s7 + $0x88] sm:$0xff] %vm4332, %v4284
  %5138 = vst.msk [vmem:[%s7 + $0x90] sm:$0xff] %vm4332, %v4285
  %5139 = vst.msk [vmem:[%s7 + $0x98] sm:$0xff] %vm4332, %v4286
  %5140 = vst.msk [vmem:[%s7 + $0xa0] sm:$0xff] %vm4332, %v4287
  %5141 = vst.msk [vmem:[%s7 + $0xa8] sm:$0xff] %vm4332, %v4288
  %5142 = vst.msk [vmem:[%s7 + $0xb0] sm:$0xff] %vm4332, %v4289
  %5143 = vst.msk [vmem:[%s7 + $0xb8] sm:$0xff] %vm4332, %v4290
  %5144 = vst.msk [vmem:[%s7 + $0xc0] sm:$0xff] %vm4332, %v4291
  %5145 = vst.msk [vmem:[%s7 + $0xc8] sm:$0xff] %vm4332, %v4292
  %5146 = vst.msk [vmem:[%s7 + $0xd0] sm:$0xff] %vm4332, %v4293
  %5147 = vst.msk [vmem:[%s7 + $0xd8] sm:$0xff] %vm4332, %v4294
  %5148 = vst.msk [vmem:[%s7 + $0xe0] sm:$0xff] %vm4332, %v4295
  %5149 = vst.msk [vmem:[%s7 + $0xe8] sm:$0xff] %vm4332, %v4296
  %5150 = vst.msk [vmem:[%s7 + $0xf0] sm:$0xff] %vm4332, %v4297
  %5151 = vst.msk [vmem:[%s7 + $0xf8] sm:$0xff] %vm4332, %v4298
  %5152 = vst.msk [vmem:[%s7 + $0x100] sm:$0xff] %vm4332, %v4299
  %5153 = vst.msk [vmem:[%s7 + $0x108] sm:$0xff] %vm4332, %v4300
  %5154 = vst.msk [vmem:[%s7 + $0x110] sm:$0xff] %vm4332, %v4301
  %5155 = vst.msk [vmem:[%s7 + $0x118] sm:$0xff] %vm4332, %v4302
  %5156 = vst.msk [vmem:[%s7 + $0x120] sm:$0xff] %vm4332, %v4303
  %5157 = vst.msk [vmem:[%s7 + $0x128] sm:$0xff] %vm4332, %v4304
  %5158 = vst.msk [vmem:[%s7 + $0x130] sm:$0xff] %vm4332, %v4305
  %5159 = vst.msk [vmem:[%s7 + $0x138] sm:$0xff] %vm4332, %v4306
  %5160 = vst.msk [vmem:[%s7 + $0x140] sm:$0xff] %vm4332, %v4307
  %5161 = vst.msk [vmem:[%s7 + $0x148] sm:$0xff] %vm4332, %v4308
  %5162 = vst.msk [vmem:[%s7 + $0x150] sm:$0xff] %vm4332, %v4309
  %5163 = vst.msk [vmem:[%s7 + $0x158] sm:$0xff] %vm4332, %v4310
  %5164 = vst.msk [vmem:[%s7 + $0x160] sm:$0xff] %vm4332, %v4311
  %5165 = vst.msk [vmem:[%s7 + $0x168] sm:$0xff] %vm4332, %v4312
  %5166 = vst.msk [vmem:[%s7 + $0x170] sm:$0xff] %vm4332, %v4313
  %5167 = vst.msk [vmem:[%s7 + $0x178] sm:$0xff] %vm4332, %v4314
  %5168 = vst.msk [vmem:[%s7 + $0x180] sm:$0xff] %vm4332, %v4315
  %5169 = vst.msk [vmem:[%s7 + $0x188] sm:$0xff] %vm4332, %v4316
  %5170 = vst.msk [vmem:[%s7 + $0x190] sm:$0xff] %vm4332, %v4317
  %5171 = vst.msk [vmem:[%s7 + $0x198] sm:$0xff] %vm4332, %v4318
  %5172 = vst.msk [vmem:[%s7 + $0x1a0] sm:$0xff] %vm4332, %v4319
  %5173 = vst.msk [vmem:[%s7 + $0x1a8] sm:$0xff] %vm4332, %v4320
  %5174 = vst.msk [vmem:[%s7 + $0x1b0] sm:$0xff] %vm4332, %v4321
  %5175 = vst.msk [vmem:[%s7 + $0x1b8] sm:$0xff] %vm4332, %v4322
  %5176 = vst.msk [vmem:[%s7 + $0x1c0] sm:$0xff] %vm4332, %v4323
  %5177 = vst.msk [vmem:[%s7 + $0x1c8] sm:$0xff] %vm4332, %v4324
  %5178 = vst.msk [vmem:[%s7 + $0x1d0] sm:$0xff] %vm4332, %v4325
  %5179 = vst.msk [vmem:[%s7 + $0x1d8] sm:$0xff] %vm4332, %v4326
  %5180 = vst.msk [vmem:[%s7 + $0x1e0] sm:$0xff] %vm4332, %v4327
  %5181 = vst.msk [vmem:[%s7 + $0x1e8] sm:$0xff] %vm4332, %v4328
  %5182 = vst.msk [vmem:[%s7 + $0x1f0] sm:$0xff] %vm4332, %v4329
  %5183 = vst.msk [vmem:[%s7 + $0x1f8] sm:$0xff] %vm4332, %v4330
  %5248 = vrot.lane.b32.xlu0 %v5056, 2
  %v5249 = vpop.permute.xlu0 %5248
  %5250 = vrot.lane.b32.xlu0 %v5057, 2
  %v5251 = vpop.permute.xlu0 %5250
  %5252 = vrot.lane.b32.xlu0 %v5058, 2
  %v5253 = vpop.permute.xlu0 %5252
  %5254 = vrot.lane.b32.xlu0 %v5059, 2
  %v5255 = vpop.permute.xlu0 %5254
  %5256 = vrot.lane.b32.xlu0 %v5060, 2
  %v5257 = vpop.permute.xlu0 %5256
  %5258 = vrot.lane.b32.xlu0 %v5061, 2
  %v5259 = vpop.permute.xlu0 %5258
  %5260 = vrot.lane.b32.xlu0 %v5062, 2
  %v5261 = vpop.permute.xlu0 %5260
  %5262 = vrot.lane.b32.xlu0 %v5063, 2
  %v5263 = vpop.permute.xlu0 %5262
  %5264 = vrot.lane.b32.xlu0 %v5064, 2
  %v5265 = vpop.permute.xlu0 %5264
  %5266 = vrot.lane.b32.xlu0 %v5065, 2
  %v5267 = vpop.permute.xlu0 %5266
  %5268 = vrot.lane.b32.xlu0 %v5066, 2
  %v5269 = vpop.permute.xlu0 %5268
  %5270 = vrot.lane.b32.xlu0 %v5067, 2
  %v5271 = vpop.permute.xlu0 %5270
  %5272 = vrot.lane.b32.xlu0 %v5068, 2
  %v5273 = vpop.permute.xlu0 %5272
  %5274 = vrot.lane.b32.xlu0 %v5069, 2
  %v5275 = vpop.permute.xlu0 %5274
  %5276 = vrot.lane.b32.xlu0 %v5070, 2
  %v5277 = vpop.permute.xlu0 %5276
  %5278 = vrot.lane.b32.xlu0 %v5071, 2
  %v5279 = vpop.permute.xlu0 %5278
  %5280 = vrot.lane.b32.xlu0 %v5072, 2
  %v5281 = vpop.permute.xlu0 %5280
  %5282 = vrot.lane.b32.xlu0 %v5073, 2
  %v5283 = vpop.permute.xlu0 %5282
  %5284 = vrot.lane.b32.xlu0 %v5074, 2
  %v5285 = vpop.permute.xlu0 %5284
  %5286 = vrot.lane.b32.xlu0 %v5075, 2
  %v5287 = vpop.permute.xlu0 %5286
  %5288 = vrot.lane.b32.xlu0 %v5076, 2
  %v5289 = vpop.permute.xlu0 %5288
  %5290 = vrot.lane.b32.xlu0 %v5077, 2
  %v5291 = vpop.permute.xlu0 %5290
  %5292 = vrot.lane.b32.xlu0 %v5078, 2
  %v5293 = vpop.permute.xlu0 %5292
  %5294 = vrot.lane.b32.xlu0 %v5079, 2
  %v5295 = vpop.permute.xlu0 %5294
  %5296 = vrot.lane.b32.xlu0 %v5080, 2
  %v5297 = vpop.permute.xlu0 %5296
  %5298 = vrot.lane.b32.xlu0 %v5081, 2
  %v5299 = vpop.permute.xlu0 %5298
  %5300 = vrot.lane.b32.xlu0 %v5082, 2
  %v5301 = vpop.permute.xlu0 %5300
  %5302 = vrot.lane.b32.xlu0 %v5083, 2
  %v5303 = vpop.permute.xlu0 %5302
  %5304 = vrot.lane.b32.xlu0 %v5084, 2
  %v5305 = vpop.permute.xlu0 %5304
  %5306 = vrot.lane.b32.xlu0 %v5085, 2
  %v5307 = vpop.permute.xlu0 %5306
  %5308 = vrot.lane.b32.xlu0 %v5086, 2
  %v5309 = vpop.permute.xlu0 %5308
  %5310 = vrot.lane.b32.xlu0 %v5087, 2
  %v5311 = vpop.permute.xlu0 %5310
  %5312 = vrot.lane.b32.xlu0 %v5088, 2
  %v5313 = vpop.permute.xlu0 %5312
  %5314 = vrot.lane.b32.xlu0 %v5089, 2
  %v5315 = vpop.permute.xlu0 %5314
  %5316 = vrot.lane.b32.xlu0 %v5090, 2
  %v5317 = vpop.permute.xlu0 %5316
  %5318 = vrot.lane.b32.xlu0 %v5091, 2
  %v5319 = vpop.permute.xlu0 %5318
  %5320 = vrot.lane.b32.xlu0 %v5092, 2
  %v5321 = vpop.permute.xlu0 %5320
  %5322 = vrot.lane.b32.xlu0 %v5093, 2
  %v5323 = vpop.permute.xlu0 %5322
  %5324 = vrot.lane.b32.xlu0 %v5094, 2
  %v5325 = vpop.permute.xlu0 %5324
  %5326 = vrot.lane.b32.xlu0 %v5095, 2
  %v5327 = vpop.permute.xlu0 %5326
  %5328 = vrot.lane.b32.xlu0 %v5096, 2
  %v5329 = vpop.permute.xlu0 %5328
  %5330 = vrot.lane.b32.xlu0 %v5097, 2
  %v5331 = vpop.permute.xlu0 %5330
  %5332 = vrot.lane.b32.xlu0 %v5098, 2
  %v5333 = vpop.permute.xlu0 %5332
  %5334 = vrot.lane.b32.xlu0 %v5099, 2
  %v5335 = vpop.permute.xlu0 %5334
  %5336 = vrot.lane.b32.xlu0 %v5100, 2
  %v5337 = vpop.permute.xlu0 %5336
  %5338 = vrot.lane.b32.xlu0 %v5101, 2
  %v5339 = vpop.permute.xlu0 %5338
  %5340 = vrot.lane.b32.xlu0 %v5102, 2
  %v5341 = vpop.permute.xlu0 %5340
  %5342 = vrot.lane.b32.xlu0 %v5103, 2
  %v5343 = vpop.permute.xlu0 %5342
  %5344 = vrot.lane.b32.xlu0 %v5104, 2
  %v5345 = vpop.permute.xlu0 %5344
  %5346 = vrot.lane.b32.xlu0 %v5105, 2
  %v5347 = vpop.permute.xlu0 %5346
  %5348 = vrot.lane.b32.xlu0 %v5106, 2
  %v5349 = vpop.permute.xlu0 %5348
  %5350 = vrot.lane.b32.xlu0 %v5107, 2
  %v5351 = vpop.permute.xlu0 %5350
  %5352 = vrot.lane.b32.xlu0 %v5108, 2
  %v5353 = vpop.permute.xlu0 %5352
  %5354 = vrot.lane.b32.xlu0 %v5109, 2
  %v5355 = vpop.permute.xlu0 %5354
  %5356 = vrot.lane.b32.xlu0 %v5110, 2
  %v5357 = vpop.permute.xlu0 %5356
  %5358 = vrot.lane.b32.xlu0 %v5111, 2
  %v5359 = vpop.permute.xlu0 %5358
  %5360 = vrot.lane.b32.xlu0 %v5112, 2
  %v5361 = vpop.permute.xlu0 %5360
  %5362 = vrot.lane.b32.xlu0 %v5113, 2
  %v5363 = vpop.permute.xlu0 %5362
  %5364 = vrot.lane.b32.xlu0 %v5114, 2
  %v5365 = vpop.permute.xlu0 %5364
  %5366 = vrot.lane.b32.xlu0 %v5115, 2
  %v5367 = vpop.permute.xlu0 %5366
  %5368 = vrot.lane.b32.xlu0 %v5116, 2
  %v5369 = vpop.permute.xlu0 %5368
  %5370 = vrot.lane.b32.xlu0 %v5117, 2
  %v5371 = vpop.permute.xlu0 %5370
  %5372 = vrot.lane.b32.xlu0 %v5118, 2
  %v5373 = vpop.permute.xlu0 %5372
  %5374 = vrot.lane.b32.xlu0 %v5119, 2
  %v5375 = vpop.permute.xlu0 %5374
  %vm5440 = vcmask 64528
  %5441 = vst.msk [vmem:[%s7] sm:$0xff] %vm5440, %v5249
  %5442 = vst.msk [vmem:[%s7 + $0x8] sm:$0xff] %vm5440, %v5251
  %5443 = vst.msk [vmem:[%s7 + $0x10] sm:$0xff] %vm5440, %v5253
  %5444 = vst.msk [vmem:[%s7 + $0x18] sm:$0xff] %vm5440, %v5255
  %5445 = vst.msk [vmem:[%s7 + $0x20] sm:$0xff] %vm5440, %v5257
  %5446 = vst.msk [vmem:[%s7 + $0x28] sm:$0xff] %vm5440, %v5259
  %5447 = vst.msk [vmem:[%s7 + $0x30] sm:$0xff] %vm5440, %v5261
  %5448 = vst.msk [vmem:[%s7 + $0x38] sm:$0xff] %vm5440, %v5263
  %5449 = vst.msk [vmem:[%s7 + $0x40] sm:$0xff] %vm5440, %v5265
  %5450 = vst.msk [vmem:[%s7 + $0x48] sm:$0xff] %vm5440, %v5267
  %5451 = vst.msk [vmem:[%s7 + $0x50] sm:$0xff] %vm5440, %v5269
  %5452 = vst.msk [vmem:[%s7 + $0x58] sm:$0xff] %vm5440, %v5271
  %5453 = vst.msk [vmem:[%s7 + $0x60] sm:$0xff] %vm5440, %v5273
  %5454 = vst.msk [vmem:[%s7 + $0x68] sm:$0xff] %vm5440, %v5275
  %5455 = vst.msk [vmem:[%s7 + $0x70] sm:$0xff] %vm5440, %v5277
  %5456 = vst.msk [vmem:[%s7 + $0x78] sm:$0xff] %vm5440, %v5279
  %5457 = vst.msk [vmem:[%s7 + $0x80] sm:$0xff] %vm5440, %v5281
  %5458 = vst.msk [vmem:[%s7 + $0x88] sm:$0xff] %vm5440, %v5283
  %5459 = vst.msk [vmem:[%s7 + $0x90] sm:$0xff] %vm5440, %v5285
  %5460 = vst.msk [vmem:[%s7 + $0x98] sm:$0xff] %vm5440, %v5287
  %5461 = vst.msk [vmem:[%s7 + $0xa0] sm:$0xff] %vm5440, %v5289
  %5462 = vst.msk [vmem:[%s7 + $0xa8] sm:$0xff] %vm5440, %v5291
  %5463 = vst.msk [vmem:[%s7 + $0xb0] sm:$0xff] %vm5440, %v5293
  %5464 = vst.msk [vmem:[%s7 + $0xb8] sm:$0xff] %vm5440, %v5295
  %5465 = vst.msk [vmem:[%s7 + $0xc0] sm:$0xff] %vm5440, %v5297
  %5466 = vst.msk [vmem:[%s7 + $0xc8] sm:$0xff] %vm5440, %v5299
  %5467 = vst.msk [vmem:[%s7 + $0xd0] sm:$0xff] %vm5440, %v5301
  %5468 = vst.msk [vmem:[%s7 + $0xd8] sm:$0xff] %vm5440, %v5303
  %5469 = vst.msk [vmem:[%s7 + $0xe0] sm:$0xff] %vm5440, %v5305
  %5470 = vst.msk [vmem:[%s7 + $0xe8] sm:$0xff] %vm5440, %v5307
  %5471 = vst.msk [vmem:[%s7 + $0xf0] sm:$0xff] %vm5440, %v5309
  %5472 = vst.msk [vmem:[%s7 + $0xf8] sm:$0xff] %vm5440, %v5311
  %5473 = vst.msk [vmem:[%s7 + $0x100] sm:$0xff] %vm5440, %v5313
  %5474 = vst.msk [vmem:[%s7 + $0x108] sm:$0xff] %vm5440, %v5315
  %5475 = vst.msk [vmem:[%s7 + $0x110] sm:$0xff] %vm5440, %v5317
  %5476 = vst.msk [vmem:[%s7 + $0x118] sm:$0xff] %vm5440, %v5319
  %5477 = vst.msk [vmem:[%s7 + $0x120] sm:$0xff] %vm5440, %v5321
  %5478 = vst.msk [vmem:[%s7 + $0x128] sm:$0xff] %vm5440, %v5323
  %5479 = vst.msk [vmem:[%s7 + $0x130] sm:$0xff] %vm5440, %v5325
  %5480 = vst.msk [vmem:[%s7 + $0x138] sm:$0xff] %vm5440, %v5327
  %5481 = vst.msk [vmem:[%s7 + $0x140] sm:$0xff] %vm5440, %v5329
  %5482 = vst.msk [vmem:[%s7 + $0x148] sm:$0xff] %vm5440, %v5331
  %5483 = vst.msk [vmem:[%s7 + $0x150] sm:$0xff] %vm5440, %v5333
  %5484 = vst.msk [vmem:[%s7 + $0x158] sm:$0xff] %vm5440, %v5335
  %5485 = vst.msk [vmem:[%s7 + $0x160] sm:$0xff] %vm5440, %v5337
  %5486 = vst.msk [vmem:[%s7 + $0x168] sm:$0xff] %vm5440, %v5339
  %5487 = vst.msk [vmem:[%s7 + $0x170] sm:$0xff] %vm5440, %v5341
  %5488 = vst.msk [vmem:[%s7 + $0x178] sm:$0xff] %vm5440, %v5343
  %5489 = vst.msk [vmem:[%s7 + $0x180] sm:$0xff] %vm5440, %v5345
  %5490 = vst.msk [vmem:[%s7 + $0x188] sm:$0xff] %vm5440, %v5347
  %5491 = vst.msk [vmem:[%s7 + $0x190] sm:$0xff] %vm5440, %v5349
  %5492 = vst.msk [vmem:[%s7 + $0x198] sm:$0xff] %vm5440, %v5351
  %5493 = vst.msk [vmem:[%s7 + $0x1a0] sm:$0xff] %vm5440, %v5353
  %5494 = vst.msk [vmem:[%s7 + $0x1a8] sm:$0xff] %vm5440, %v5355
  %5495 = vst.msk [vmem:[%s7 + $0x1b0] sm:$0xff] %vm5440, %v5357
  %5496 = vst.msk [vmem:[%s7 + $0x1b8] sm:$0xff] %vm5440, %v5359
  %5497 = vst.msk [vmem:[%s7 + $0x1c0] sm:$0xff] %vm5440, %v5361
  %5498 = vst.msk [vmem:[%s7 + $0x1c8] sm:$0xff] %vm5440, %v5363
  %5499 = vst.msk [vmem:[%s7 + $0x1d0] sm:$0xff] %vm5440, %v5365
  %5500 = vst.msk [vmem:[%s7 + $0x1d8] sm:$0xff] %vm5440, %v5367
  %5501 = vst.msk [vmem:[%s7 + $0x1e0] sm:$0xff] %vm5440, %v5369
  %5502 = vst.msk [vmem:[%s7 + $0x1e8] sm:$0xff] %vm5440, %v5371
  %5503 = vst.msk [vmem:[%s7 + $0x1f0] sm:$0xff] %vm5440, %v5373
  %5504 = vst.msk [vmem:[%s7 + $0x1f8] sm:$0xff] %vm5440, %v5375
  // Predicated region
  $region30: #{tpu_custom_call.1} parent=0 // pred_check
    _
  $region31: #{tpu_custom_call.1} parent=0 // pred_check_branch
    %5506 = sbr.rel (0) target = $region33
  $region32: #{tpu_custom_call.1} parent=0 // pred_region
    _
  $region33: #{tpu_custom_call.1} parent=0 // pred_fallthru
    _
  // Predicated region
  $region34: #{tpu_custom_call.1} parent=0 // pred_check
    _
  $region35: #{tpu_custom_call.1} parent=0 // pred_check_branch
    %5508 = sbr.rel (0) target = $region37
  $region36: #{tpu_custom_call.1} parent=0 // pred_region
    _
  $region37: #{tpu_custom_call.1} parent=0 // pred_fallthru
    _

</llo_original>
